<compile_context>
chip_gen: v7x
topology: tpu7x:2x2x1
jax: 0.10.0
libtpu: 0.0.40
codegen_flags: <defaults>
</compile_context>

<pallas_src>
import functools
import math

import numpy as np

import jax
import jax.numpy as jnp
from jax.experimental import pallas as pl
from jax.experimental.pallas import tpu as pltpu


# ----------------------------- Pallas kernel --------------------------------

def _encoder_layer_kernel(
    x_ref,
    wq_ref, bq_ref, wk_ref, bk_ref, wv_ref, bv_ref, wo_ref, bo_ref,
    n1w_ref, n1b_ref, n2w_ref, n2b_ref, n3w_ref, n3b_ref,
    w1_ref, b1_ref, w2_ref, b2_ref,
    out_ref,
    *, num_heads: int, batch_tile: int, seq_len: int,
    fused_heads: bool, exact_recip: bool,
):
    H, Bt, S = num_heads, batch_tile, seq_len
    N, D = x_ref.shape                       # N == Bt * S rows folded for MXU occupancy
    hd = D // H
    cdt = wq_ref.dtype                       # MXU compute dtype (bf16 or f32)

    x = x_ref[...].astype(jnp.float32)       # LN / softmax / residual math in f32

    def layernorm(v, w_r, b_r, eps=1e-5):
        # One pass: two independent cross-lane reduces (sum, sum-of-squares)
        # instead of mean followed by mean((v - mu)^2).
        mu = jnp.mean(v, axis=-1, keepdims=True)
        ms = jnp.mean(v * v, axis=-1, keepdims=True)
        var = ms - mu * mu
        return (v - mu) * jax.lax.rsqrt(var + eps) * w_r[...] + b_r[...]

    def softmax_last(s):
        m = jnp.max(s, axis=-1, keepdims=True)
        e = jnp.exp(s - m)
        den = jnp.sum(e, axis=-1, keepdims=True)
        if exact_recip:
            return e / den                               # exact divide (f32 config)
        return e * pl.reciprocal(den, approx=True)       # EUP slot (bf16 config)

    # ---- pre-norm + QKV projections on the full (N, D) row slab ----
    # 1/sqrt(head_dim) is already folded into wq / bq host-side.
    h1 = layernorm(x, n1w_ref, n1b_ref).astype(cdt)
    q = jnp.dot(h1, wq_ref[...], preferred_element_type=jnp.float32) + bq_ref[...]
    k = jnp.dot(h1, wk_ref[...], preferred_element_type=jnp.float32) + bk_ref[...]
    v = jnp.dot(h1, wv_ref[...], preferred_element_type=jnp.float32) + bv_ref[...]

    # TODO(synk): for long S, block the KV axis with an online (flash) softmax
    # instead of materializing the full (Bt, H, S, S) score tensor.
    if fused_heads:
        # No explicit transposes: head structure is carried by einsum batch dims;
        # the head merge is fused into the output projection (wo_ref is
        # pre-reshaped host-side to (H, hd, D)).
        q4 = q.reshape(Bt, S, H, hd).astype(cdt)
        k4 = k.reshape(Bt, S, H, hd).astype(cdt)
        v4 = v.reshape(Bt, S, H, hd).astype(cdt)
        s = jnp.einsum("bqhd,bkhd->bhqk", q4, k4, preferred_element_type=jnp.float32)
        p = softmax_last(s)
        o = jnp.einsum("bhqk,bkhd->bhqd", p.astype(cdt), v4,
                       preferred_element_type=jnp.float32)
        attn = jnp.einsum("bhqd,hdf->bqf", o.astype(cdt), wo_ref[...],
                          preferred_element_type=jnp.float32)
        attn = attn.reshape(N, D) + bo_ref[...]
    else:
        # Fallback (previously validated): fold (row-block, head) into a single
        # leading einsum batch dim via one transpose per tensor.
        def split_heads(t):                  # (N, D) -> (Bt*H, S, hd)
            return (t.reshape(Bt, S, H, hd)
                     .transpose(0, 2, 1, 3)
                     .reshape(Bt * H, S, hd)
                     .astype(cdt))
        qh, kh, vh = split_heads(q), split_heads(k), split_heads(v)
        s = jnp.einsum("bqd,bkd->bqk", qh, kh, preferred_element_type=jnp.float32)
        p = softmax_last(s)
        o = jnp.einsum("bqk,bkd->bqd", p.astype(cdt), vh,
                       preferred_element_type=jnp.float32)
        attn = o.reshape(Bt, H, S, hd).transpose(0, 2, 1, 3).reshape(N, D)
        attn = jnp.dot(attn.astype(cdt), wo_ref[...],
                       preferred_element_type=jnp.float32) + bo_ref[...]

    # ---- residual 1 with post-LN on the attention branch (Normformer) ----
    x1 = x + layernorm(attn, n2w_ref, n2b_ref)

    # ---- feed-forward branch ----
    # TODO(synk): at realistic hidden (=4D) on v7x, stream w1/w2 K-blocks with
    # pltpu.emit_pipeline instead of keeping them whole-array resident.
    h3 = layernorm(x1, n3w_ref, n3b_ref).astype(cdt)
    ff = jnp.dot(h3, w1_ref[...], preferred_element_type=jnp.float32) + b1_ref[...]
    # Activation made explicit: tanh-approximate GELU (same in the reference).
    ff = jax.nn.gelu(ff, approximate=True).astype(cdt)
    ff = jnp.dot(ff, w2_ref[...], preferred_element_type=jnp.float32) + b2_ref[...]

    out_ref[...] = (x1 + ff).astype(out_ref.dtype)


# ------------------------------ host wrapper ---------------------------------

def _tpu_generation_info():
    """(vmem_capacity_bytes, mxu_native_dim) with conservative fallbacks."""
    vmem = 64 * 1024 * 1024                          # conservative (v7x) default
    try:
        vmem = int(pltpu.get_tpu_info().vmem_capacity_bytes)
    except Exception:
        pass
    kind = ""
    try:
        kind = jax.devices()[0].device_kind.lower()
    except Exception:
        pass
    mxu = 256 if ("v6" in kind or "v7" in kind) else 128
    return vmem, mxu


def _pick_batch_tile(B, S, D, H, hidden, act_budget, target_rows, min_grid_steps):
    """Largest divisor of B whose per-step working set fits `act_budget`,
    targeting >= target_rows matmul rows per grid step while keeping at least
    `min_grid_steps` grid steps (megacore / both v7x TensorCores)."""
    max_bt = B // min_grid_steps if B >= min_grid_steps else B
    max_bt = max(max_bt, 1)
    best = 1
    for bt in range(1, max_bt + 1):
        if B % bt:
            continue
        rows = bt * S
        slab_bytes = 2 * 2 * rows * D * 4            # x/out slabs, double-buffered f32
        score_bytes = 2 * bt * H * S * S * 4         # scores + exp(scores), f32
        act_bytes = 8 * rows * max(D, hidden) * 4    # ~8 live f32 row-slab temporaries
        if bt > 1 and slab_bytes + score_bytes + act_bytes > act_budget:
            break
        best = bt
        if rows >= target_rows:
            break
    return best


def transformer_encoder_layer(x, params, num_heads, *, compute_dtype=jnp.bfloat16):
    """x: (B, S, D) float32.  params: dict of weights, all in (in, out) layout."""
    B, S, D = x.shape
    H = num_heads
    hd = D // H
    hidden = params["w1"].shape[1]
    scale = 1.0 / math.sqrt(hd)

    vmem_cap, mxu_dim = _tpu_generation_info()
    # ~48 MiB on v7x (64 MiB physical), ~96 MiB on v5e / v6e (128 MiB physical).
    vmem_limit = min(vmem_cap * 3 // 4, 100 * 1024 * 1024)

    exact_recip = np.dtype(compute_dtype) == np.dtype(np.float32)

    mat = lambda a: a.astype(compute_dtype)          # MXU operands (bf16 by default)
    vec = lambda a: a.astype(jnp.float32)            # biases / LN params stay f32

    def weight_list(fused):
        # Fold 1/sqrt(head_dim) into the q projection host-side (exact).
        wq = params["wq"] * scale
        bq = params["bq"] * scale
        # Fused path: wo pre-reshaped to (H, hd, D) so the head merge is fused
        # into the output-projection contraction inside the kernel.
        wo = params["wo"].reshape(H, hd, D) if fused else params["wo"]
        return [
            mat(wq), vec(bq), mat(params["wk"]), vec(params["bk"]),
            mat(params["wv"]), vec(params["bv"]), mat(wo), vec(params["bo"]),
            vec(params["n1w"]), vec(params["n1b"]),
            vec(params["n2w"]), vec(params["n2b"]),
            vec(params["n3w"]), vec(params["n3b"]),
            mat(params["w1"]), vec(params["b1"]),
            mat(params["w2"]), vec(params["b2"]),
        ]

    weights_base = weight_list(fused=False)
    weight_bytes = sum(int(a.size) * a.dtype.itemsize for a in weights_base)
    act_budget = max(vmem_limit - weight_bytes - (2 << 20), 4 << 20)

    Bt = _pick_batch_tile(B, S, D, H, hidden, act_budget,
                          target_rows=mxu_dim, min_grid_steps=2)
    nb = B // Bt
    rows = Bt * S

    # Fold batch rows into the matmul M dimension: present x / out as (B*S, D)
    # so each grid step sees a lane-dense (Bt*S, D) slab.
    # TODO(synk): when D < 128 (as in this demo) the lane axis is still
    # sub-width; a padded-D variant (with masked LN statistics) would restore
    # fully lane-dense stores.
    # TODO(synk): on v5e, feeding x / out as bf16 across the HBM boundary would
    # halve the exposed DMA; kept f32 here for the tight numerical check.
    x2 = x.reshape(B * S, D)

    def build(fused, single_buffer_weights):
        weights = weight_list(fused)

        def const_spec(a):
            # Whole array resident in VMEM, same block every grid step.  The
            # index_map is constant, so double-buffering is pure VMEM waste ->
            # request a single buffer when supported.
            if single_buffer_weights:
                return pl.BlockSpec(a.shape, lambda i, n=a.ndim: (0,) * n,
                                    pipeline_mode=pl.Buffered(1))
            return pl.BlockSpec(a.shape, lambda i, n=a.ndim: (0,) * n)

        kernel = functools.partial(
            _encoder_layer_kernel,
            num_heads=H, batch_tile=Bt, seq_len=S,
            fused_heads=fused, exact_recip=exact_recip)

        call = pl.pallas_call(
            kernel,
            out_shape=jax.ShapeDtypeStruct((B * S, D), jnp.float32),
            grid_spec=pltpu.PrefetchScalarGridSpec(
                num_scalar_prefetch=0,
                grid=(nb,),
                in_specs=[pl.BlockSpec((rows, D), lambda i: (i, 0))]
                         + [const_spec(a) for a in weights],
                out_specs=pl.BlockSpec((rows, D), lambda i: (i, 0)),
            ),
            compiler_params=pltpu.CompilerParams(
                dimension_semantics=("parallel",),
                vmem_limit_bytes=int(vmem_limit),
            ),
        )
        return call, weights

    # Preference order: fused head handling (no XLU transposes) with
    # single-buffered weights; degrade gracefully if a configuration fails to
    # lower on this generation so the kernel always runs.
    configs = ((True, True), (True, False), (False, True), (False, False))
    last_err = None
    for fused, single_buf in configs:
        try:
            call, weights = build(fused, single_buf)
            out2 = jax.block_until_ready(call(x2, *weights))
            return out2.reshape(B, S, D)
        except Exception as e:       # lowering / compile failure -> next config
            last_err = e
    raise last_err


# --------------------------- pure-JAX reference -------------------------------

def reference(x, p, num_heads):
    def ln(v, w, b, eps=1e-5):
        mu = v.mean(-1, keepdims=True)
        var = ((v - mu) ** 2).mean(-1, keepdims=True)
        return (v - mu) / jnp.sqrt(var + eps) * w + b

    B, S, D = x.shape
    hd = D // num_heads
    h = ln(x, p["n1w"], p["n1b"])
    q = h @ p["wq"] + p["bq"]
    k = h @ p["wk"] + p["bk"]
    v = h @ p["wv"] + p["bv"]
    q = q.reshape(B, S, num_heads, hd).transpose(0, 2, 1, 3)
    k = k.reshape(B, S, num_heads, hd).transpose(0, 2, 1, 3)
    v = v.reshape(B, S, num_heads, hd).transpose(0, 2, 1, 3)
    s = jnp.einsum("bhqd,bhkd->bhqk", q, k) / math.sqrt(hd)
    a = jax.nn.softmax(s, axis=-1)
    o = jnp.einsum("bhqk,bhkd->bhqd", a, v).transpose(0, 2, 1, 3).reshape(B, S, D)
    o = o @ p["wo"] + p["bo"]
    x1 = x + ln(o, p["n2w"], p["n2b"])
    h3 = ln(x1, p["n3w"], p["n3b"])
    ff = jax.nn.gelu(h3 @ p["w1"] + p["b1"], approximate=True) @ p["w2"] + p["b2"]
    return x1 + ff


# ----------------------------------- main -------------------------------------

if __name__ == "__main__":
    B, S, D, H = 2, 8, 32, 4
    HIDDEN = 2 * D

    key = jax.random.PRNGKey(0)
    keys = jax.random.split(key, 16)

    def linear_init(kw, kb, fan_in, fan_out):
        bound = 1.0 / math.sqrt(fan_in)
        w = jax.random.uniform(kw, (fan_in, fan_out), jnp.float32, -bound, bound)
        b = jax.random.uniform(kb, (1, fan_out), jnp.float32, -bound, bound)
        return w, b

    params = {}
    params["wq"], params["bq"] = linear_init(keys[0], keys[1], D, D)
    params["wk"], params["bk"] = linear_init(keys[2], keys[3], D, D)
    params["wv"], params["bv"] = linear_init(keys[4], keys[5], D, D)
    params["wo"], params["bo"] = linear_init(keys[6], keys[7], D, D)
    params["w1"], params["b1"] = linear_init(keys[8], keys[9], D, HIDDEN)
    params["w2"], params["b2"] = linear_init(keys[10], keys[11], HIDDEN, D)
    # LayerNorm params (PyTorch default init is ones / zeros)
    for name in ("n1", "n2", "n3"):
        params[name + "w"] = jnp.ones((1, D), jnp.float32)
        params[name + "b"] = jnp.zeros((1, D), jnp.float32)

    x = jax.random.normal(keys[12], (B, S, D), jnp.float32)

    ref = reference(x, params, num_heads=H)

    # Performance configuration: bf16 MXU operands, f32 accumulation / stats.
    out_bf16 = jax.block_until_ready(
        transformer_encoder_layer(x, params, num_heads=H, compute_dtype=jnp.bfloat16))
    assert out_bf16.shape == (B, S, D)
    assert jnp.allclose(out_bf16, ref, atol=5e-2, rtol=5e-2), \
        f"bf16 max err {jnp.max(jnp.abs(out_bf16 - ref))}"

    # f32 configuration: exact softmax divide is used here, so this is a tight
    # numerical check.
    out_f32 = jax.block_until_ready(
        transformer_encoder_layer(x, params, num_heads=H, compute_dtype=jnp.float32))
    assert jnp.allclose(out_f32, ref, atol=1e-2, rtol=1e-2), \
        f"f32 max err {jnp.max(jnp.abs(out_f32 - ref))}"

    print("KERNEL_OK")
</pallas_src>

<mosaic_0001>
module attributes {stable_mosaic.version = 11 : i64} {
  func.func @_encoder_layer_kernel(%arg0: i32, %arg1: memref<8x32xf32, #tpu.memory_space<vmem>>, %arg2: memref<32x32xbf16, #tpu.memory_space<vmem>>, %arg3: memref<1x32xf32, #tpu.memory_space<vmem>>, %arg4: memref<32x32xbf16, #tpu.memory_space<vmem>>, %arg5: memref<1x32xf32, #tpu.memory_space<vmem>>, %arg6: memref<32x32xbf16, #tpu.memory_space<vmem>>, %arg7: memref<1x32xf32, #tpu.memory_space<vmem>>, %arg8: memref<32x32xbf16, #tpu.memory_space<vmem>>, %arg9: memref<1x32xf32, #tpu.memory_space<vmem>>, %arg10: memref<1x32xf32, #tpu.memory_space<vmem>>, %arg11: memref<1x32xf32, #tpu.memory_space<vmem>>, %arg12: memref<1x32xf32, #tpu.memory_space<vmem>>, %arg13: memref<1x32xf32, #tpu.memory_space<vmem>>, %arg14: memref<1x32xf32, #tpu.memory_space<vmem>>, %arg15: memref<1x32xf32, #tpu.memory_space<vmem>>, %arg16: memref<32x64xbf16, #tpu.memory_space<vmem>>, %arg17: memref<1x64xf32, #tpu.memory_space<vmem>>, %arg18: memref<64x32xbf16, #tpu.memory_space<vmem>>, %arg19: memref<1x32xf32, #tpu.memory_space<vmem>>, %arg20: memref<8x32xf32, #tpu.memory_space<vmem>>) attributes {dimension_semantics = [#tpu.dimension_semantics<parallel>], iteration_bounds = array<i64: 2>, scalar_prefetch = 0 : i64, scratch_operands = 0 : i64, tpu.core_type = #tpu.core_type<tc>, window_params = [{transform_indices = @transform_0, window_bounds = array<i64: 8, 32>}, {pipeline_mode = #tpu.pipeline_mode<synchronous>, transform_indices = @transform_1, window_bounds = array<i64: 32, 32>}, {pipeline_mode = #tpu.pipeline_mode<synchronous>, transform_indices = @transform_2, window_bounds = array<i64: 1, 32>}, {pipeline_mode = #tpu.pipeline_mode<synchronous>, transform_indices = @transform_3, window_bounds = array<i64: 32, 32>}, {pipeline_mode = #tpu.pipeline_mode<synchronous>, transform_indices = @transform_4, window_bounds = array<i64: 1, 32>}, {pipeline_mode = #tpu.pipeline_mode<synchronous>, transform_indices = @transform_5, window_bounds = array<i64: 32, 32>}, {pipeline_mode = #tpu.pipeline_mode<synchronous>, transform_indices = @transform_6, window_bounds = array<i64: 1, 32>}, {pipeline_mode = #tpu.pipeline_mode<synchronous>, transform_indices = @transform_7, window_bounds = array<i64: 32, 32>}, {pipeline_mode = #tpu.pipeline_mode<synchronous>, transform_indices = @transform_8, window_bounds = array<i64: 1, 32>}, {pipeline_mode = #tpu.pipeline_mode<synchronous>, transform_indices = @transform_9, window_bounds = array<i64: 1, 32>}, {pipeline_mode = #tpu.pipeline_mode<synchronous>, transform_indices = @transform_10, window_bounds = array<i64: 1, 32>}, {pipeline_mode = #tpu.pipeline_mode<synchronous>, transform_indices = @transform_11, window_bounds = array<i64: 1, 32>}, {pipeline_mode = #tpu.pipeline_mode<synchronous>, transform_indices = @transform_12, window_bounds = array<i64: 1, 32>}, {pipeline_mode = #tpu.pipeline_mode<synchronous>, transform_indices = @transform_13, window_bounds = array<i64: 1, 32>}, {pipeline_mode = #tpu.pipeline_mode<synchronous>, transform_indices = @transform_14, window_bounds = array<i64: 1, 32>}, {pipeline_mode = #tpu.pipeline_mode<synchronous>, transform_indices = @transform_15, window_bounds = array<i64: 32, 64>}, {pipeline_mode = #tpu.pipeline_mode<synchronous>, transform_indices = @transform_16, window_bounds = array<i64: 1, 64>}, {pipeline_mode = #tpu.pipeline_mode<synchronous>, transform_indices = @transform_17, window_bounds = array<i64: 64, 32>}, {pipeline_mode = #tpu.pipeline_mode<synchronous>, transform_indices = @transform_18, window_bounds = array<i64: 1, 32>}, {transform_indices = @transform_19, window_bounds = array<i64: 8, 32>}]} {
    %c0 = arith.constant 0 : index
    %c0_0 = arith.constant 0 : index
    %0 = vector.load %arg1[%c0, %c0_0] : memref<8x32xf32, #tpu.memory_space<vmem>>, vector<8x32xf32>
    %cst = arith.constant dense<0.000000e+00> : vector<8xf32>
    %1 = vector.multi_reduction <add>, %0, %cst [1] : vector<8x32xf32> to vector<8xf32>
    %2 = vector.shape_cast %1 : vector<8xf32> to vector<8x1xf32>
    %cst_1 = arith.constant 3.200000e+01 : f32
    %3 = vector.broadcast %cst_1 : f32 to vector<8x1xf32>
    %4 = arith.divf %2, %3 : vector<8x1xf32>
    %5 = arith.mulf %0, %0 : vector<8x32xf32>
    %cst_2 = arith.constant dense<0.000000e+00> : vector<8xf32>
    %6 = vector.multi_reduction <add>, %5, %cst_2 [1] : vector<8x32xf32> to vector<8xf32>
    %7 = vector.shape_cast %6 : vector<8xf32> to vector<8x1xf32>
    %cst_3 = arith.constant 3.200000e+01 : f32
    %8 = vector.broadcast %cst_3 : f32 to vector<8x1xf32>
    %9 = arith.divf %7, %8 : vector<8x1xf32>
    %10 = arith.mulf %4, %4 : vector<8x1xf32>
    %11 = arith.subf %9, %10 : vector<8x1xf32>
    %12 = vector.broadcast %4 : vector<8x1xf32> to vector<8x32xf32>
    %13 = arith.subf %0, %12 : vector<8x32xf32>
    %cst_4 = arith.constant 9.99999974E-6 : f32
    %14 = vector.broadcast %cst_4 : f32 to vector<8x1xf32>
    %15 = arith.addf %11, %14 : vector<8x1xf32>
    %16 = math.rsqrt %15 : vector<8x1xf32>
    %17 = vector.broadcast %16 : vector<8x1xf32> to vector<8x32xf32>
    %18 = arith.mulf %13, %17 : vector<8x32xf32>
    %c0_5 = arith.constant 0 : index
    %c0_6 = arith.constant 0 : index
    %19 = vector.load %arg10[%c0_5, %c0_6] : memref<1x32xf32, #tpu.memory_space<vmem>>, vector<1x32xf32>
    %20 = vector.broadcast %19 : vector<1x32xf32> to vector<8x32xf32>
    %21 = arith.mulf %18, %20 : vector<8x32xf32>
    %c0_7 = arith.constant 0 : index
    %c0_8 = arith.constant 0 : index
    %22 = vector.load %arg11[%c0_7, %c0_8] : memref<1x32xf32, #tpu.memory_space<vmem>>, vector<1x32xf32>
    %23 = vector.broadcast %22 : vector<1x32xf32> to vector<8x32xf32>
    %24 = arith.addf %21, %23 : vector<8x32xf32>
    %25 = arith.truncf %24 : vector<8x32xf32> to vector<8x32xbf16>
    %c0_9 = arith.constant 0 : index
    %c0_10 = arith.constant 0 : index
    %26 = vector.load %arg2[%c0_9, %c0_10] : memref<32x32xbf16, #tpu.memory_space<vmem>>, vector<32x32xbf16>
    %cst_11 = arith.constant dense<0.000000e+00> : vector<8x32xf32>
    %27 = tpu.matmul %25, %26, %cst_11 {dimension_numbers = #tpu.dot_dimension_numbers<[1], [0], [0], [1], [0, 0, 1, 1], [], []>} : vector<8x32xbf16>, vector<32x32xbf16>, vector<8x32xf32> -> vector<8x32xf32>
    %c0_12 = arith.constant 0 : index
    %c0_13 = arith.constant 0 : index
    %28 = vector.load %arg3[%c0_12, %c0_13] : memref<1x32xf32, #tpu.memory_space<vmem>>, vector<1x32xf32>
    %29 = vector.broadcast %28 : vector<1x32xf32> to vector<8x32xf32>
    %30 = arith.addf %27, %29 : vector<8x32xf32>
    %c0_14 = arith.constant 0 : index
    %c0_15 = arith.constant 0 : index
    %31 = vector.load %arg4[%c0_14, %c0_15] : memref<32x32xbf16, #tpu.memory_space<vmem>>, vector<32x32xbf16>
    %cst_16 = arith.constant dense<0.000000e+00> : vector<8x32xf32>
    %32 = tpu.matmul %25, %31, %cst_16 {dimension_numbers = #tpu.dot_dimension_numbers<[1], [0], [0], [1], [0, 0, 1, 1], [], []>} : vector<8x32xbf16>, vector<32x32xbf16>, vector<8x32xf32> -> vector<8x32xf32>
    %c0_17 = arith.constant 0 : index
    %c0_18 = arith.constant 0 : index
    %33 = vector.load %arg5[%c0_17, %c0_18] : memref<1x32xf32, #tpu.memory_space<vmem>>, vector<1x32xf32>
    %34 = vector.broadcast %33 : vector<1x32xf32> to vector<8x32xf32>
    %35 = arith.addf %32, %34 : vector<8x32xf32>
    %c0_19 = arith.constant 0 : index
    %c0_20 = arith.constant 0 : index
    %36 = vector.load %arg6[%c0_19, %c0_20] : memref<32x32xbf16, #tpu.memory_space<vmem>>, vector<32x32xbf16>
    %cst_21 = arith.constant dense<0.000000e+00> : vector<8x32xf32>
    %37 = tpu.matmul %25, %36, %cst_21 {dimension_numbers = #tpu.dot_dimension_numbers<[1], [0], [0], [1], [0, 0, 1, 1], [], []>} : vector<8x32xbf16>, vector<32x32xbf16>, vector<8x32xf32> -> vector<8x32xf32>
    %c0_22 = arith.constant 0 : index
    %c0_23 = arith.constant 0 : index
    %38 = vector.load %arg7[%c0_22, %c0_23] : memref<1x32xf32, #tpu.memory_space<vmem>>, vector<1x32xf32>
    %39 = vector.broadcast %38 : vector<1x32xf32> to vector<8x32xf32>
    %40 = arith.addf %37, %39 : vector<8x32xf32>
    %41 = vector.shape_cast %30 : vector<8x32xf32> to vector<1x8x4x8xf32>
    %42 = tpu.transpose %41, [0, 2, 1, 3] : vector<1x8x4x8xf32> -> vector<1x4x8x8xf32>
    %43 = vector.shape_cast %42 : vector<1x4x8x8xf32> to vector<4x8x8xf32>
    %44 = arith.truncf %43 : vector<4x8x8xf32> to vector<4x8x8xbf16>
    %45 = vector.shape_cast %35 : vector<8x32xf32> to vector<1x8x4x8xf32>
    %46 = tpu.transpose %45, [0, 2, 1, 3] : vector<1x8x4x8xf32> -> vector<1x4x8x8xf32>
    %47 = vector.shape_cast %46 : vector<1x4x8x8xf32> to vector<4x8x8xf32>
    %48 = arith.truncf %47 : vector<4x8x8xf32> to vector<4x8x8xbf16>
    %49 = vector.shape_cast %40 : vector<8x32xf32> to vector<1x8x4x8xf32>
    %50 = tpu.transpose %49, [0, 2, 1, 3] : vector<1x8x4x8xf32> -> vector<1x4x8x8xf32>
    %51 = vector.shape_cast %50 : vector<1x4x8x8xf32> to vector<4x8x8xf32>
    %52 = arith.truncf %51 : vector<4x8x8xf32> to vector<4x8x8xbf16>
    "tpu.trace_start"() <{level = 10 : i32, message = "bqd,bkd->bqk"}> : () -> ()
    %cst_24 = arith.constant dense<0.000000e+00> : vector<4x8x8xf32>
    %53 = tpu.matmul %44, %48, %cst_24 {dimension_numbers = #tpu.dot_dimension_numbers<[2], [2], [1], [1], [0, 0, 0, 1, 1, 1], [0], [0]>} : vector<4x8x8xbf16>, vector<4x8x8xbf16>, vector<4x8x8xf32> -> vector<4x8x8xf32>
    "tpu.trace_stop"() : () -> ()
    %cst_25 = arith.constant dense<0xFF800000> : vector<4x8xf32>
    %54 = vector.multi_reduction <maximumf>, %53, %cst_25 [2] : vector<4x8x8xf32> to vector<4x8xf32>
    %55 = vector.shape_cast %54 : vector<4x8xf32> to vector<4x8x1xf32>
    %56 = vector.broadcast %55 : vector<4x8x1xf32> to vector<4x8x8xf32>
    %57 = arith.subf %53, %56 : vector<4x8x8xf32>
    %58 = math.exp %57 : vector<4x8x8xf32>
    %cst_26 = arith.constant dense<0.000000e+00> : vector<4x8xf32>
    %59 = vector.multi_reduction <add>, %58, %cst_26 [2] : vector<4x8x8xf32> to vector<4x8xf32>
    %60 = vector.shape_cast %59 : vector<4x8xf32> to vector<4x8x1xf32>
    %61 = tpu.reciprocal %60 {approx = true} : vector<4x8x1xf32> -> vector<4x8x1xf32>
    %62 = vector.broadcast %61 : vector<4x8x1xf32> to vector<4x8x8xf32>
    %63 = arith.mulf %58, %62 : vector<4x8x8xf32>
    %64 = arith.truncf %63 : vector<4x8x8xf32> to vector<4x8x8xbf16>
    "tpu.trace_start"() <{level = 10 : i32, message = "bqk,bkd->bqd"}> : () -> ()
    %cst_27 = arith.constant dense<0.000000e+00> : vector<4x8x8xf32>
    %65 = tpu.matmul %64, %52, %cst_27 {dimension_numbers = #tpu.dot_dimension_numbers<[2], [1], [1], [2], [0, 0, 0, 1, 1, 2], [0], [0]>} : vector<4x8x8xbf16>, vector<4x8x8xbf16>, vector<4x8x8xf32> -> vector<4x8x8xf32>
    "tpu.trace_stop"() : () -> ()
    %66 = vector.shape_cast %65 : vector<4x8x8xf32> to vector<1x4x8x8xf32>
    %67 = tpu.transpose %66, [0, 2, 1, 3] : vector<1x4x8x8xf32> -> vector<1x8x4x8xf32>
    %68 = vector.shape_cast %67 : vector<1x8x4x8xf32> to vector<8x32xf32>
    %69 = arith.truncf %68 : vector<8x32xf32> to vector<8x32xbf16>
    %c0_28 = arith.constant 0 : index
    %c0_29 = arith.constant 0 : index
    %70 = vector.load %arg8[%c0_28, %c0_29] : memref<32x32xbf16, #tpu.memory_space<vmem>>, vector<32x32xbf16>
    %cst_30 = arith.constant dense<0.000000e+00> : vector<8x32xf32>
    %71 = tpu.matmul %69, %70, %cst_30 {dimension_numbers = #tpu.dot_dimension_numbers<[1], [0], [0], [1], [0, 0, 1, 1], [], []>} : vector<8x32xbf16>, vector<32x32xbf16>, vector<8x32xf32> -> vector<8x32xf32>
    %c0_31 = arith.constant 0 : index
    %c0_32 = arith.constant 0 : index
    %72 = vector.load %arg9[%c0_31, %c0_32] : memref<1x32xf32, #tpu.memory_space<vmem>>, vector<1x32xf32>
    %73 = vector.broadcast %72 : vector<1x32xf32> to vector<8x32xf32>
    %74 = arith.addf %71, %73 : vector<8x32xf32>
    %cst_33 = arith.constant dense<0.000000e+00> : vector<8xf32>
    %75 = vector.multi_reduction <add>, %74, %cst_33 [1] : vector<8x32xf32> to vector<8xf32>
    %76 = vector.shape_cast %75 : vector<8xf32> to vector<8x1xf32>
    %cst_34 = arith.constant 3.200000e+01 : f32
    %77 = vector.broadcast %cst_34 : f32 to vector<8x1xf32>
    %78 = arith.divf %76, %77 : vector<8x1xf32>
    %79 = arith.mulf %74, %74 : vector<8x32xf32>
    %cst_35 = arith.constant dense<0.000000e+00> : vector<8xf32>
    %80 = vector.multi_reduction <add>, %79, %cst_35 [1] : vector<8x32xf32> to vector<8xf32>
    %81 = vector.shape_cast %80 : vector<8xf32> to vector<8x1xf32>
    %cst_36 = arith.constant 3.200000e+01 : f32
    %82 = vector.broadcast %cst_36 : f32 to vector<8x1xf32>
    %83 = arith.divf %81, %82 : vector<8x1xf32>
    %84 = arith.mulf %78, %78 : vector<8x1xf32>
    %85 = arith.subf %83, %84 : vector<8x1xf32>
    %86 = vector.broadcast %78 : vector<8x1xf32> to vector<8x32xf32>
    %87 = arith.subf %74, %86 : vector<8x32xf32>
    %cst_37 = arith.constant 9.99999974E-6 : f32
    %88 = vector.broadcast %cst_37 : f32 to vector<8x1xf32>
    %89 = arith.addf %85, %88 : vector<8x1xf32>
    %90 = math.rsqrt %89 : vector<8x1xf32>
    %91 = vector.broadcast %90 : vector<8x1xf32> to vector<8x32xf32>
    %92 = arith.mulf %87, %91 : vector<8x32xf32>
    %c0_38 = arith.constant 0 : index
    %c0_39 = arith.constant 0 : index
    %93 = vector.load %arg12[%c0_38, %c0_39] : memref<1x32xf32, #tpu.memory_space<vmem>>, vector<1x32xf32>
    %94 = vector.broadcast %93 : vector<1x32xf32> to vector<8x32xf32>
    %95 = arith.mulf %92, %94 : vector<8x32xf32>
    %c0_40 = arith.constant 0 : index
    %c0_41 = arith.constant 0 : index
    %96 = vector.load %arg13[%c0_40, %c0_41] : memref<1x32xf32, #tpu.memory_space<vmem>>, vector<1x32xf32>
    %97 = vector.broadcast %96 : vector<1x32xf32> to vector<8x32xf32>
    %98 = arith.addf %95, %97 : vector<8x32xf32>
    %99 = arith.addf %0, %98 : vector<8x32xf32>
    %cst_42 = arith.constant dense<0.000000e+00> : vector<8xf32>
    %100 = vector.multi_reduction <add>, %99, %cst_42 [1] : vector<8x32xf32> to vector<8xf32>
    %101 = vector.shape_cast %100 : vector<8xf32> to vector<8x1xf32>
    %cst_43 = arith.constant 3.200000e+01 : f32
    %102 = vector.broadcast %cst_43 : f32 to vector<8x1xf32>
    %103 = arith.divf %101, %102 : vector<8x1xf32>
    %104 = arith.mulf %99, %99 : vector<8x32xf32>
    %cst_44 = arith.constant dense<0.000000e+00> : vector<8xf32>
    %105 = vector.multi_reduction <add>, %104, %cst_44 [1] : vector<8x32xf32> to vector<8xf32>
    %106 = vector.shape_cast %105 : vector<8xf32> to vector<8x1xf32>
    %cst_45 = arith.constant 3.200000e+01 : f32
    %107 = vector.broadcast %cst_45 : f32 to vector<8x1xf32>
    %108 = arith.divf %106, %107 : vector<8x1xf32>
    %109 = arith.mulf %103, %103 : vector<8x1xf32>
    %110 = arith.subf %108, %109 : vector<8x1xf32>
    %111 = vector.broadcast %103 : vector<8x1xf32> to vector<8x32xf32>
    %112 = arith.subf %99, %111 : vector<8x32xf32>
    %cst_46 = arith.constant 9.99999974E-6 : f32
    %113 = vector.broadcast %cst_46 : f32 to vector<8x1xf32>
    %114 = arith.addf %110, %113 : vector<8x1xf32>
    %115 = math.rsqrt %114 : vector<8x1xf32>
    %116 = vector.broadcast %115 : vector<8x1xf32> to vector<8x32xf32>
    %117 = arith.mulf %112, %116 : vector<8x32xf32>
    %c0_47 = arith.constant 0 : index
    %c0_48 = arith.constant 0 : index
    %118 = vector.load %arg14[%c0_47, %c0_48] : memref<1x32xf32, #tpu.memory_space<vmem>>, vector<1x32xf32>
    %119 = vector.broadcast %118 : vector<1x32xf32> to vector<8x32xf32>
    %120 = arith.mulf %117, %119 : vector<8x32xf32>
    %c0_49 = arith.constant 0 : index
    %c0_50 = arith.constant 0 : index
    %121 = vector.load %arg15[%c0_49, %c0_50] : memref<1x32xf32, #tpu.memory_space<vmem>>, vector<1x32xf32>
    %122 = vector.broadcast %121 : vector<1x32xf32> to vector<8x32xf32>
    %123 = arith.addf %120, %122 : vector<8x32xf32>
    %124 = arith.truncf %123 : vector<8x32xf32> to vector<8x32xbf16>
    %c0_51 = arith.constant 0 : index
    %c0_52 = arith.constant 0 : index
    %125 = vector.load %arg16[%c0_51, %c0_52] : memref<32x64xbf16, #tpu.memory_space<vmem>>, vector<32x64xbf16>
    %cst_53 = arith.constant dense<0.000000e+00> : vector<8x64xf32>
    %126 = tpu.matmul %124, %125, %cst_53 {dimension_numbers = #tpu.dot_dimension_numbers<[1], [0], [0], [1], [0, 0, 1, 1], [], []>} : vector<8x32xbf16>, vector<32x64xbf16>, vector<8x64xf32> -> vector<8x64xf32>
    %c0_54 = arith.constant 0 : index
    %c0_55 = arith.constant 0 : index
    %127 = vector.load %arg17[%c0_54, %c0_55] : memref<1x64xf32, #tpu.memory_space<vmem>>, vector<1x64xf32>
    %128 = vector.broadcast %127 : vector<1x64xf32> to vector<8x64xf32>
    %129 = arith.addf %126, %128 : vector<8x64xf32>
    %130 = arith.mulf %129, %129 : vector<8x64xf32>
    %131 = arith.mulf %129, %130 : vector<8x64xf32>
    %cst_56 = arith.constant 4.471500e-02 : f32
    %132 = vector.broadcast %cst_56 : f32 to vector<8x64xf32>
    %133 = arith.mulf %132, %131 : vector<8x64xf32>
    %134 = arith.addf %129, %133 : vector<8x64xf32>
    %cst_57 = arith.constant 0.797884583 : f32
    %135 = vector.broadcast %cst_57 : f32 to vector<8x64xf32>
    %136 = arith.mulf %135, %134 : vector<8x64xf32>
    %137 = math.tanh %136 : vector<8x64xf32>
    %cst_58 = arith.constant 1.000000e+00 : f32
    %138 = vector.broadcast %cst_58 : f32 to vector<8x64xf32>
    %139 = arith.addf %138, %137 : vector<8x64xf32>
    %cst_59 = arith.constant 5.000000e-01 : f32
    %140 = vector.broadcast %cst_59 : f32 to vector<8x64xf32>
    %141 = arith.mulf %140, %139 : vector<8x64xf32>
    %142 = arith.mulf %129, %141 : vector<8x64xf32>
    %143 = arith.truncf %142 : vector<8x64xf32> to vector<8x64xbf16>
    %c0_60 = arith.constant 0 : index
    %c0_61 = arith.constant 0 : index
    %144 = vector.load %arg18[%c0_60, %c0_61] : memref<64x32xbf16, #tpu.memory_space<vmem>>, vector<64x32xbf16>
    %cst_62 = arith.constant dense<0.000000e+00> : vector<8x32xf32>
    %145 = tpu.matmul %143, %144, %cst_62 {dimension_numbers = #tpu.dot_dimension_numbers<[1], [0], [0], [1], [0, 0, 1, 1], [], []>} : vector<8x64xbf16>, vector<64x32xbf16>, vector<8x32xf32> -> vector<8x32xf32>
    %c0_63 = arith.constant 0 : index
    %c0_64 = arith.constant 0 : index
    %146 = vector.load %arg19[%c0_63, %c0_64] : memref<1x32xf32, #tpu.memory_space<vmem>>, vector<1x32xf32>
    %147 = vector.broadcast %146 : vector<1x32xf32> to vector<8x32xf32>
    %148 = arith.addf %145, %147 : vector<8x32xf32>
    %149 = arith.addf %99, %148 : vector<8x32xf32>
    %c0_65 = arith.constant 0 : index
    %c0_66 = arith.constant 0 : index
    %150 = vector.load %arg20[%c0_65, %c0_66] : memref<8x32xf32, #tpu.memory_space<vmem>>, vector<8x32xf32>
    tpu.vector_store %arg20[%c0_65, %c0_66], %149 {strides = array<i32>} : memref<8x32xf32, #tpu.memory_space<vmem>>, vector<8x32xf32>,
    return
  }
  func.func @transform_0(%arg0: i32) -> (i32, i32) {
    %c0_i32 = arith.constant 0 : i32
    %c0_i32_0 = arith.constant 0 : i32
    return %arg0, %c0_i32 : i32, i32
  }
  func.func @transform_1(%arg0: i32) -> (i32, i32) {
    %c0_i32 = arith.constant 0 : i32
    %c0_i32_0 = arith.constant 0 : i32
    %c0_i32_1 = arith.constant 0 : i32
    return %c0_i32, %c0_i32_0 : i32, i32
  }
  func.func @transform_2(%arg0: i32) -> (i32, i32) {
    %c0_i32 = arith.constant 0 : i32
    %c0_i32_0 = arith.constant 0 : i32
    %c0_i32_1 = arith.constant 0 : i32
    return %c0_i32, %c0_i32_0 : i32, i32
  }
  func.func @transform_3(%arg0: i32) -> (i32, i32) {
    %c0_i32 = arith.constant 0 : i32
    %c0_i32_0 = arith.constant 0 : i32
    %c0_i32_1 = arith.constant 0 : i32
    return %c0_i32, %c0_i32_0 : i32, i32
  }
  func.func @transform_4(%arg0: i32) -> (i32, i32) {
    %c0_i32 = arith.constant 0 : i32
    %c0_i32_0 = arith.constant 0 : i32
    %c0_i32_1 = arith.constant 0 : i32
    return %c0_i32, %c0_i32_0 : i32, i32
  }
  func.func @transform_5(%arg0: i32) -> (i32, i32) {
    %c0_i32 = arith.constant 0 : i32
    %c0_i32_0 = arith.constant 0 : i32
    %c0_i32_1 = arith.constant 0 : i32
    return %c0_i32, %c0_i32_0 : i32, i32
  }
  func.func @transform_6(%arg0: i32) -> (i32, i32) {
    %c0_i32 = arith.constant 0 : i32
    %c0_i32_0 = arith.constant 0 : i32
    %c0_i32_1 = arith.constant 0 : i32
    return %c0_i32, %c0_i32_0 : i32, i32
  }
  func.func @transform_7(%arg0: i32) -> (i32, i32) {
    %c0_i32 = arith.constant 0 : i32
    %c0_i32_0 = arith.constant 0 : i32
    %c0_i32_1 = arith.constant 0 : i32
    return %c0_i32, %c0_i32_0 : i32, i32
  }
  func.func @transform_8(%arg0: i32) -> (i32, i32) {
    %c0_i32 = arith.constant 0 : i32
    %c0_i32_0 = arith.constant 0 : i32
    %c0_i32_1 = arith.constant 0 : i32
    return %c0_i32, %c0_i32_0 : i32, i32
  }
  func.func @transform_9(%arg0: i32) -> (i32, i32) {
    %c0_i32 = arith.constant 0 : i32
    %c0_i32_0 = arith.constant 0 : i32
    %c0_i32_1 = arith.constant 0 : i32
    return %c0_i32, %c0_i32_0 : i32, i32
  }
  func.func @transform_10(%arg0: i32) -> (i32, i32) {
    %c0_i32 = arith.constant 0 : i32
    %c0_i32_0 = arith.constant 0 : i32
    %c0_i32_1 = arith.constant 0 : i32
    return %c0_i32, %c0_i32_0 : i32, i32
  }
  func.func @transform_11(%arg0: i32) -> (i32, i32) {
    %c0_i32 = arith.constant 0 : i32
    %c0_i32_0 = arith.constant 0 : i32
    %c0_i32_1 = arith.constant 0 : i32
    return %c0_i32, %c0_i32_0 : i32, i32
  }
  func.func @transform_12(%arg0: i32) -> (i32, i32) {
    %c0_i32 = arith.constant 0 : i32
    %c0_i32_0 = arith.constant 0 : i32
    %c0_i32_1 = arith.constant 0 : i32
    return %c0_i32, %c0_i32_0 : i32, i32
  }
  func.func @transform_13(%arg0: i32) -> (i32, i32) {
    %c0_i32 = arith.constant 0 : i32
    %c0_i32_0 = arith.constant 0 : i32
    %c0_i32_1 = arith.constant 0 : i32
    return %c0_i32, %c0_i32_0 : i32, i32
  }
  func.func @transform_14(%arg0: i32) -> (i32, i32) {
    %c0_i32 = arith.constant 0 : i32
    %c0_i32_0 = arith.constant 0 : i32
    %c0_i32_1 = arith.constant 0 : i32
    return %c0_i32, %c0_i32_0 : i32, i32
  }
  func.func @transform_15(%arg0: i32) -> (i32, i32) {
    %c0_i32 = arith.constant 0 : i32
    %c0_i32_0 = arith.constant 0 : i32
    %c0_i32_1 = arith.constant 0 : i32
    return %c0_i32, %c0_i32_0 : i32, i32
  }
  func.func @transform_16(%arg0: i32) -> (i32, i32) {
    %c0_i32 = arith.constant 0 : i32
    %c0_i32_0 = arith.constant 0 : i32
    %c0_i32_1 = arith.constant 0 : i32
    return %c0_i32, %c0_i32_0 : i32, i32
  }
  func.func @transform_17(%arg0: i32) -> (i32, i32) {
    %c0_i32 = arith.constant 0 : i32
    %c0_i32_0 = arith.constant 0 : i32
    %c0_i32_1 = arith.constant 0 : i32
    return %c0_i32, %c0_i32_0 : i32, i32
  }
  func.func @transform_18(%arg0: i32) -> (i32, i32) {
    %c0_i32 = arith.constant 0 : i32
    %c0_i32_0 = arith.constant 0 : i32
    %c0_i32_1 = arith.constant 0 : i32
    return %c0_i32, %c0_i32_0 : i32, i32
  }
  func.func @transform_19(%arg0: i32) -> (i32, i32) {
    %c0_i32 = arith.constant 0 : i32
    %c0_i32_0 = arith.constant 0 : i32
    return %arg0, %c0_i32 : i32, i32
  }
}

module attributes {stable_mosaic.version = 11 : i64} {
  func.func @_encoder_layer_kernel(%arg0: i32, %arg1: memref<8x32xf32, #tpu.memory_space<vmem>>, %arg2: memref<32x32xbf16, #tpu.memory_space<vmem>>, %arg3: memref<1x32xf32, #tpu.memory_space<vmem>>, %arg4: memref<32x32xbf16, #tpu.memory_space<vmem>>, %arg5: memref<1x32xf32, #tpu.memory_space<vmem>>, %arg6: memref<32x32xbf16, #tpu.memory_space<vmem>>, %arg7: memref<1x32xf32, #tpu.memory_space<vmem>>, %arg8: memref<32x32xbf16, #tpu.memory_space<vmem>>, %arg9: memref<1x32xf32, #tpu.memory_space<vmem>>, %arg10: memref<1x32xf32, #tpu.memory_space<vmem>>, %arg11: memref<1x32xf32, #tpu.memory_space<vmem>>, %arg12: memref<1x32xf32, #tpu.memory_space<vmem>>, %arg13: memref<1x32xf32, #tpu.memory_space<vmem>>, %arg14: memref<1x32xf32, #tpu.memory_space<vmem>>, %arg15: memref<1x32xf32, #tpu.memory_space<vmem>>, %arg16: memref<32x64xbf16, #tpu.memory_space<vmem>>, %arg17: memref<1x64xf32, #tpu.memory_space<vmem>>, %arg18: memref<64x32xbf16, #tpu.memory_space<vmem>>, %arg19: memref<1x32xf32, #tpu.memory_space<vmem>>, %arg20: memref<8x32xf32, #tpu.memory_space<vmem>>) attributes {dimension_semantics = [#tpu.dimension_semantics<parallel>], iteration_bounds = array<i64: 2>, scalar_prefetch = 0 : i64, scratch_operands = 0 : i64, tpu.core_type = #tpu.core_type<tc>, window_params = [{transform_indices = @transform_0, window_bounds = array<i64: 8, 32>}, {pipeline_mode = #tpu.pipeline_mode<synchronous>, transform_indices = @transform_1, window_bounds = array<i64: 32, 32>}, {pipeline_mode = #tpu.pipeline_mode<synchronous>, transform_indices = @transform_2, window_bounds = array<i64: 1, 32>}, {pipeline_mode = #tpu.pipeline_mode<synchronous>, transform_indices = @transform_3, window_bounds = array<i64: 32, 32>}, {pipeline_mode = #tpu.pipeline_mode<synchronous>, transform_indices = @transform_4, window_bounds = array<i64: 1, 32>}, {pipeline_mode = #tpu.pipeline_mode<synchronous>, transform_indices = @transform_5, window_bounds = array<i64: 32, 32>}, {pipeline_mode = #tpu.pipeline_mode<synchronous>, transform_indices = @transform_6, window_bounds = array<i64: 1, 32>}, {pipeline_mode = #tpu.pipeline_mode<synchronous>, transform_indices = @transform_7, window_bounds = array<i64: 32, 32>}, {pipeline_mode = #tpu.pipeline_mode<synchronous>, transform_indices = @transform_8, window_bounds = array<i64: 1, 32>}, {pipeline_mode = #tpu.pipeline_mode<synchronous>, transform_indices = @transform_9, window_bounds = array<i64: 1, 32>}, {pipeline_mode = #tpu.pipeline_mode<synchronous>, transform_indices = @transform_10, window_bounds = array<i64: 1, 32>}, {pipeline_mode = #tpu.pipeline_mode<synchronous>, transform_indices = @transform_11, window_bounds = array<i64: 1, 32>}, {pipeline_mode = #tpu.pipeline_mode<synchronous>, transform_indices = @transform_12, window_bounds = array<i64: 1, 32>}, {pipeline_mode = #tpu.pipeline_mode<synchronous>, transform_indices = @transform_13, window_bounds = array<i64: 1, 32>}, {pipeline_mode = #tpu.pipeline_mode<synchronous>, transform_indices = @transform_14, window_bounds = array<i64: 1, 32>}, {pipeline_mode = #tpu.pipeline_mode<synchronous>, transform_indices = @transform_15, window_bounds = array<i64: 32, 64>}, {pipeline_mode = #tpu.pipeline_mode<synchronous>, transform_indices = @transform_16, window_bounds = array<i64: 1, 64>}, {pipeline_mode = #tpu.pipeline_mode<synchronous>, transform_indices = @transform_17, window_bounds = array<i64: 64, 32>}, {pipeline_mode = #tpu.pipeline_mode<synchronous>, transform_indices = @transform_18, window_bounds = array<i64: 1, 32>}, {transform_indices = @transform_19, window_bounds = array<i64: 8, 32>}]} {
    %c0 = arith.constant 0 : index
    %c0_0 = arith.constant 0 : index
    %0 = vector.load %arg1[%c0, %c0_0] : memref<8x32xf32, #tpu.memory_space<vmem>>, vector<8x32xf32>
    %cst = arith.constant dense<0.000000e+00> : vector<8xf32>
    %1 = vector.multi_reduction <add>, %0, %cst [1] : vector<8x32xf32> to vector<8xf32>
    %2 = vector.shape_cast %1 : vector<8xf32> to vector<8x1xf32>
    %cst_1 = arith.constant 3.200000e+01 : f32
    %3 = vector.broadcast %cst_1 : f32 to vector<8x1xf32>
    %4 = arith.divf %2, %3 : vector<8x1xf32>
    %5 = arith.mulf %0, %0 : vector<8x32xf32>
    %cst_2 = arith.constant dense<0.000000e+00> : vector<8xf32>
    %6 = vector.multi_reduction <add>, %5, %cst_2 [1] : vector<8x32xf32> to vector<8xf32>
    %7 = vector.shape_cast %6 : vector<8xf32> to vector<8x1xf32>
    %cst_3 = arith.constant 3.200000e+01 : f32
    %8 = vector.broadcast %cst_3 : f32 to vector<8x1xf32>
    %9 = arith.divf %7, %8 : vector<8x1xf32>
    %10 = arith.mulf %4, %4 : vector<8x1xf32>
    %11 = arith.subf %9, %10 : vector<8x1xf32>
    %12 = vector.broadcast %4 : vector<8x1xf32> to vector<8x32xf32>
    %13 = arith.subf %0, %12 : vector<8x32xf32>
    %cst_4 = arith.constant 9.99999974E-6 : f32
    %14 = vector.broadcast %cst_4 : f32 to vector<8x1xf32>
    %15 = arith.addf %11, %14 : vector<8x1xf32>
    %16 = math.rsqrt %15 : vector<8x1xf32>
    %17 = vector.broadcast %16 : vector<8x1xf32> to vector<8x32xf32>
    %18 = arith.mulf %13, %17 : vector<8x32xf32>
    %c0_5 = arith.constant 0 : index
    %c0_6 = arith.constant 0 : index
    %19 = vector.load %arg10[%c0_5, %c0_6] : memref<1x32xf32, #tpu.memory_space<vmem>>, vector<1x32xf32>
    %20 = vector.broadcast %19 : vector<1x32xf32> to vector<8x32xf32>
    %21 = arith.mulf %18, %20 : vector<8x32xf32>
    %c0_7 = arith.constant 0 : index
    %c0_8 = arith.constant 0 : index
    %22 = vector.load %arg11[%c0_7, %c0_8] : memref<1x32xf32, #tpu.memory_space<vmem>>, vector<1x32xf32>
    %23 = vector.broadcast %22 : vector<1x32xf32> to vector<8x32xf32>
    %24 = arith.addf %21, %23 : vector<8x32xf32>
    %25 = arith.truncf %24 : vector<8x32xf32> to vector<8x32xbf16>
    %c0_9 = arith.constant 0 : index
    %c0_10 = arith.constant 0 : index
    %26 = vector.load %arg2[%c0_9, %c0_10] : memref<32x32xbf16, #tpu.memory_space<vmem>>, vector<32x32xbf16>
    %cst_11 = arith.constant dense<0.000000e+00> : vector<8x32xf32>
    %27 = tpu.matmul %25, %26, %cst_11 {dimension_numbers = #tpu.dot_dimension_numbers<[1], [0], [0], [1], [0, 0, 1, 1], [], []>} : vector<8x32xbf16>, vector<32x32xbf16>, vector<8x32xf32> -> vector<8x32xf32>
    %c0_12 = arith.constant 0 : index
    %c0_13 = arith.constant 0 : index
    %28 = vector.load %arg3[%c0_12, %c0_13] : memref<1x32xf32, #tpu.memory_space<vmem>>, vector<1x32xf32>
    %29 = vector.broadcast %28 : vector<1x32xf32> to vector<8x32xf32>
    %30 = arith.addf %27, %29 : vector<8x32xf32>
    %c0_14 = arith.constant 0 : index
    %c0_15 = arith.constant 0 : index
    %31 = vector.load %arg4[%c0_14, %c0_15] : memref<32x32xbf16, #tpu.memory_space<vmem>>, vector<32x32xbf16>
    %cst_16 = arith.constant dense<0.000000e+00> : vector<8x32xf32>
    %32 = tpu.matmul %25, %31, %cst_16 {dimension_numbers = #tpu.dot_dimension_numbers<[1], [0], [0], [1], [0, 0, 1, 1], [], []>} : vector<8x32xbf16>, vector<32x32xbf16>, vector<8x32xf32> -> vector<8x32xf32>
    %c0_17 = arith.constant 0 : index
    %c0_18 = arith.constant 0 : index
    %33 = vector.load %arg5[%c0_17, %c0_18] : memref<1x32xf32, #tpu.memory_space<vmem>>, vector<1x32xf32>
    %34 = vector.broadcast %33 : vector<1x32xf32> to vector<8x32xf32>
    %35 = arith.addf %32, %34 : vector<8x32xf32>
    %c0_19 = arith.constant 0 : index
    %c0_20 = arith.constant 0 : index
    %36 = vector.load %arg6[%c0_19, %c0_20] : memref<32x32xbf16, #tpu.memory_space<vmem>>, vector<32x32xbf16>
    %cst_21 = arith.constant dense<0.000000e+00> : vector<8x32xf32>
    %37 = tpu.matmul %25, %36, %cst_21 {dimension_numbers = #tpu.dot_dimension_numbers<[1], [0], [0], [1], [0, 0, 1, 1], [], []>} : vector<8x32xbf16>, vector<32x32xbf16>, vector<8x32xf32> -> vector<8x32xf32>
    %c0_22 = arith.constant 0 : index
    %c0_23 = arith.constant 0 : index
    %38 = vector.load %arg7[%c0_22, %c0_23] : memref<1x32xf32, #tpu.memory_space<vmem>>, vector<1x32xf32>
    %39 = vector.broadcast %38 : vector<1x32xf32> to vector<8x32xf32>
    %40 = arith.addf %37, %39 : vector<8x32xf32>
    %41 = vector.shape_cast %30 : vector<8x32xf32> to vector<1x8x4x8xf32>
    %42 = tpu.transpose %41, [0, 2, 1, 3] : vector<1x8x4x8xf32> -> vector<1x4x8x8xf32>
    %43 = vector.shape_cast %42 : vector<1x4x8x8xf32> to vector<4x8x8xf32>
    %44 = arith.truncf %43 : vector<4x8x8xf32> to vector<4x8x8xbf16>
    %45 = vector.shape_cast %35 : vector<8x32xf32> to vector<1x8x4x8xf32>
    %46 = tpu.transpose %45, [0, 2, 1, 3] : vector<1x8x4x8xf32> -> vector<1x4x8x8xf32>
    %47 = vector.shape_cast %46 : vector<1x4x8x8xf32> to vector<4x8x8xf32>
    %48 = arith.truncf %47 : vector<4x8x8xf32> to vector<4x8x8xbf16>
    %49 = vector.shape_cast %40 : vector<8x32xf32> to vector<1x8x4x8xf32>
    %50 = tpu.transpose %49, [0, 2, 1, 3] : vector<1x8x4x8xf32> -> vector<1x4x8x8xf32>
    %51 = vector.shape_cast %50 : vector<1x4x8x8xf32> to vector<4x8x8xf32>
    %52 = arith.truncf %51 : vector<4x8x8xf32> to vector<4x8x8xbf16>
    "tpu.trace_start"() <{level = 10 : i32, message = "bqd,bkd->bqk"}> : () -> ()
    %cst_24 = arith.constant dense<0.000000e+00> : vector<4x8x8xf32>
    %53 = tpu.matmul %44, %48, %cst_24 {dimension_numbers = #tpu.dot_dimension_numbers<[2], [2], [1], [1], [0, 0, 0, 1, 1, 1], [0], [0]>} : vector<4x8x8xbf16>, vector<4x8x8xbf16>, vector<4x8x8xf32> -> vector<4x8x8xf32>
    "tpu.trace_stop"() : () -> ()
    %cst_25 = arith.constant dense<0xFF800000> : vector<4x8xf32>
    %54 = vector.multi_reduction <maximumf>, %53, %cst_25 [2] : vector<4x8x8xf32> to vector<4x8xf32>
    %55 = vector.shape_cast %54 : vector<4x8xf32> to vector<4x8x1xf32>
    %56 = vector.broadcast %55 : vector<4x8x1xf32> to vector<4x8x8xf32>
    %57 = arith.subf %53, %56 : vector<4x8x8xf32>
    %58 = math.exp %57 : vector<4x8x8xf32>
    %cst_26 = arith.constant dense<0.000000e+00> : vector<4x8xf32>
    %59 = vector.multi_reduction <add>, %58, %cst_26 [2] : vector<4x8x8xf32> to vector<4x8xf32>
    %60 = vector.shape_cast %59 : vector<4x8xf32> to vector<4x8x1xf32>
    %61 = tpu.reciprocal %60 {approx = true} : vector<4x8x1xf32> -> vector<4x8x1xf32>
    %62 = vector.broadcast %61 : vector<4x8x1xf32> to vector<4x8x8xf32>
    %63 = arith.mulf %58, %62 : vector<4x8x8xf32>
    %64 = arith.truncf %63 : vector<4x8x8xf32> to vector<4x8x8xbf16>
    "tpu.trace_start"() <{level = 10 : i32, message = "bqk,bkd->bqd"}> : () -> ()
    %cst_27 = arith.constant dense<0.000000e+00> : vector<4x8x8xf32>
    %65 = tpu.matmul %64, %52, %cst_27 {dimension_numbers = #tpu.dot_dimension_numbers<[2], [1], [1], [2], [0, 0, 0, 1, 1, 2], [0], [0]>} : vector<4x8x8xbf16>, vector<4x8x8xbf16>, vector<4x8x8xf32> -> vector<4x8x8xf32>
    "tpu.trace_stop"() : () -> ()
    %66 = vector.shape_cast %65 : vector<4x8x8xf32> to vector<1x4x8x8xf32>
    %67 = tpu.transpose %66, [0, 2, 1, 3] : vector<1x4x8x8xf32> -> vector<1x8x4x8xf32>
    %68 = vector.shape_cast %67 : vector<1x8x4x8xf32> to vector<8x32xf32>
    %69 = arith.truncf %68 : vector<8x32xf32> to vector<8x32xbf16>
    %c0_28 = arith.constant 0 : index
    %c0_29 = arith.constant 0 : index
    %70 = vector.load %arg8[%c0_28, %c0_29] : memref<32x32xbf16, #tpu.memory_space<vmem>>, vector<32x32xbf16>
    %cst_30 = arith.constant dense<0.000000e+00> : vector<8x32xf32>
    %71 = tpu.matmul %69, %70, %cst_30 {dimension_numbers = #tpu.dot_dimension_numbers<[1], [0], [0], [1], [0, 0, 1, 1], [], []>} : vector<8x32xbf16>, vector<32x32xbf16>, vector<8x32xf32> -> vector<8x32xf32>
    %c0_31 = arith.constant 0 : index
    %c0_32 = arith.constant 0 : index
    %72 = vector.load %arg9[%c0_31, %c0_32] : memref<1x32xf32, #tpu.memory_space<vmem>>, vector<1x32xf32>
    %73 = vector.broadcast %72 : vector<1x32xf32> to vector<8x32xf32>
    %74 = arith.addf %71, %73 : vector<8x32xf32>
    %cst_33 = arith.constant dense<0.000000e+00> : vector<8xf32>
    %75 = vector.multi_reduction <add>, %74, %cst_33 [1] : vector<8x32xf32> to vector<8xf32>
    %76 = vector.shape_cast %75 : vector<8xf32> to vector<8x1xf32>
    %cst_34 = arith.constant 3.200000e+01 : f32
    %77 = vector.broadcast %cst_34 : f32 to vector<8x1xf32>
    %78 = arith.divf %76, %77 : vector<8x1xf32>
    %79 = arith.mulf %74, %74 : vector<8x32xf32>
    %cst_35 = arith.constant dense<0.000000e+00> : vector<8xf32>
    %80 = vector.multi_reduction <add>, %79, %cst_35 [1] : vector<8x32xf32> to vector<8xf32>
    %81 = vector.shape_cast %80 : vector<8xf32> to vector<8x1xf32>
    %cst_36 = arith.constant 3.200000e+01 : f32
    %82 = vector.broadcast %cst_36 : f32 to vector<8x1xf32>
    %83 = arith.divf %81, %82 : vector<8x1xf32>
    %84 = arith.mulf %78, %78 : vector<8x1xf32>
    %85 = arith.subf %83, %84 : vector<8x1xf32>
    %86 = vector.broadcast %78 : vector<8x1xf32> to vector<8x32xf32>
    %87 = arith.subf %74, %86 : vector<8x32xf32>
    %cst_37 = arith.constant 9.99999974E-6 : f32
    %88 = vector.broadcast %cst_37 : f32 to vector<8x1xf32>
    %89 = arith.addf %85, %88 : vector<8x1xf32>
    %90 = math.rsqrt %89 : vector<8x1xf32>
    %91 = vector.broadcast %90 : vector<8x1xf32> to vector<8x32xf32>
    %92 = arith.mulf %87, %91 : vector<8x32xf32>
    %c0_38 = arith.constant 0 : index
    %c0_39 = arith.constant 0 : index
    %93 = vector.load %arg12[%c0_38, %c0_39] : memref<1x32xf32, #tpu.memory_space<vmem>>, vector<1x32xf32>
    %94 = vector.broadcast %93 : vector<1x32xf32> to vector<8x32xf32>
    %95 = arith.mulf %92, %94 : vector<8x32xf32>
    %c0_40 = arith.constant 0 : index
    %c0_41 = arith.constant 0 : index
    %96 = vector.load %arg13[%c0_40, %c0_41] : memref<1x32xf32, #tpu.memory_space<vmem>>, vector<1x32xf32>
    %97 = vector.broadcast %96 : vector<1x32xf32> to vector<8x32xf32>
    %98 = arith.addf %95, %97 : vector<8x32xf32>
    %99 = arith.addf %0, %98 : vector<8x32xf32>
    %cst_42 = arith.constant dense<0.000000e+00> : vector<8xf32>
    %100 = vector.multi_reduction <add>, %99, %cst_42 [1] : vector<8x32xf32> to vector<8xf32>
    %101 = vector.shape_cast %100 : vector<8xf32> to vector<8x1xf32>
    %cst_43 = arith.constant 3.200000e+01 : f32
    %102 = vector.broadcast %cst_43 : f32 to vector<8x1xf32>
    %103 = arith.divf %101, %102 : vector<8x1xf32>
    %104 = arith.mulf %99, %99 : vector<8x32xf32>
    %cst_44 = arith.constant dense<0.000000e+00> : vector<8xf32>
    %105 = vector.multi_reduction <add>, %104, %cst_44 [1] : vector<8x32xf32> to vector<8xf32>
    %106 = vector.shape_cast %105 : vector<8xf32> to vector<8x1xf32>
    %cst_45 = arith.constant 3.200000e+01 : f32
    %107 = vector.broadcast %cst_45 : f32 to vector<8x1xf32>
    %108 = arith.divf %106, %107 : vector<8x1xf32>
    %109 = arith.mulf %103, %103 : vector<8x1xf32>
    %110 = arith.subf %108, %109 : vector<8x1xf32>
    %111 = vector.broadcast %103 : vector<8x1xf32> to vector<8x32xf32>
    %112 = arith.subf %99, %111 : vector<8x32xf32>
    %cst_46 = arith.constant 9.99999974E-6 : f32
    %113 = vector.broadcast %cst_46 : f32 to vector<8x1xf32>
    %114 = arith.addf %110, %113 : vector<8x1xf32>
    %115 = math.rsqrt %114 : vector<8x1xf32>
    %116 = vector.broadcast %115 : vector<8x1xf32> to vector<8x32xf32>
    %117 = arith.mulf %112, %116 : vector<8x32xf32>
    %c0_47 = arith.constant 0 : index
    %c0_48 = arith.constant 0 : index
    %118 = vector.load %arg14[%c0_47, %c0_48] : memref<1x32xf32, #tpu.memory_space<vmem>>, vector<1x32xf32>
    %119 = vector.broadcast %118 : vector<1x32xf32> to vector<8x32xf32>
    %120 = arith.mulf %117, %119 : vector<8x32xf32>
    %c0_49 = arith.constant 0 : index
    %c0_50 = arith.constant 0 : index
    %121 = vector.load %arg15[%c0_49, %c0_50] : memref<1x32xf32, #tpu.memory_space<vmem>>, vector<1x32xf32>
    %122 = vector.broadcast %121 : vector<1x32xf32> to vector<8x32xf32>
    %123 = arith.addf %120, %122 : vector<8x32xf32>
    %124 = arith.truncf %123 : vector<8x32xf32> to vector<8x32xbf16>
    %c0_51 = arith.constant 0 : index
    %c0_52 = arith.constant 0 : index
    %125 = vector.load %arg16[%c0_51, %c0_52] : memref<32x64xbf16, #tpu.memory_space<vmem>>, vector<32x64xbf16>
    %cst_53 = arith.constant dense<0.000000e+00> : vector<8x64xf32>
    %126 = tpu.matmul %124, %125, %cst_53 {dimension_numbers = #tpu.dot_dimension_numbers<[1], [0], [0], [1], [0, 0, 1, 1], [], []>} : vector<8x32xbf16>, vector<32x64xbf16>, vector<8x64xf32> -> vector<8x64xf32>
    %c0_54 = arith.constant 0 : index
    %c0_55 = arith.constant 0 : index
    %127 = vector.load %arg17[%c0_54, %c0_55] : memref<1x64xf32, #tpu.memory_space<vmem>>, vector<1x64xf32>
    %128 = vector.broadcast %127 : vector<1x64xf32> to vector<8x64xf32>
    %129 = arith.addf %126, %128 : vector<8x64xf32>
    %130 = arith.mulf %129, %129 : vector<8x64xf32>
    %131 = arith.mulf %129, %130 : vector<8x64xf32>
    %cst_56 = arith.constant 4.471500e-02 : f32
    %132 = vector.broadcast %cst_56 : f32 to vector<8x64xf32>
    %133 = arith.mulf %132, %131 : vector<8x64xf32>
    %134 = arith.addf %129, %133 : vector<8x64xf32>
    %cst_57 = arith.constant 0.797884583 : f32
    %135 = vector.broadcast %cst_57 : f32 to vector<8x64xf32>
    %136 = arith.mulf %135, %134 : vector<8x64xf32>
    %137 = math.tanh %136 : vector<8x64xf32>
    %cst_58 = arith.constant 1.000000e+00 : f32
    %138 = vector.broadcast %cst_58 : f32 to vector<8x64xf32>
    %139 = arith.addf %138, %137 : vector<8x64xf32>
    %cst_59 = arith.constant 5.000000e-01 : f32
    %140 = vector.broadcast %cst_59 : f32 to vector<8x64xf32>
    %141 = arith.mulf %140, %139 : vector<8x64xf32>
    %142 = arith.mulf %129, %141 : vector<8x64xf32>
    %143 = arith.truncf %142 : vector<8x64xf32> to vector<8x64xbf16>
    %c0_60 = arith.constant 0 : index
    %c0_61 = arith.constant 0 : index
    %144 = vector.load %arg18[%c0_60, %c0_61] : memref<64x32xbf16, #tpu.memory_space<vmem>>, vector<64x32xbf16>
    %cst_62 = arith.constant dense<0.000000e+00> : vector<8x32xf32>
    %145 = tpu.matmul %143, %144, %cst_62 {dimension_numbers = #tpu.dot_dimension_numbers<[1], [0], [0], [1], [0, 0, 1, 1], [], []>} : vector<8x64xbf16>, vector<64x32xbf16>, vector<8x32xf32> -> vector<8x32xf32>
    %c0_63 = arith.constant 0 : index
    %c0_64 = arith.constant 0 : index
    %146 = vector.load %arg19[%c0_63, %c0_64] : memref<1x32xf32, #tpu.memory_space<vmem>>, vector<1x32xf32>
    %147 = vector.broadcast %146 : vector<1x32xf32> to vector<8x32xf32>
    %148 = arith.addf %145, %147 : vector<8x32xf32>
    %149 = arith.addf %99, %148 : vector<8x32xf32>
    %c0_65 = arith.constant 0 : index
    %c0_66 = arith.constant 0 : index
    %150 = vector.load %arg20[%c0_65, %c0_66] : memref<8x32xf32, #tpu.memory_space<vmem>>, vector<8x32xf32>
    tpu.vector_store %arg20[%c0_65, %c0_66], %149 {strides = array<i32>} : memref<8x32xf32, #tpu.memory_space<vmem>>, vector<8x32xf32>,
    return
  }
  func.func @transform_0(%arg0: i32) -> (i32, i32) {
    %c0_i32 = arith.constant 0 : i32
    %c0_i32_0 = arith.constant 0 : i32
    return %arg0, %c0_i32 : i32, i32
  }
  func.func @transform_1(%arg0: i32) -> (i32, i32) {
    %c0_i32 = arith.constant 0 : i32
    %c0_i32_0 = arith.constant 0 : i32
    %c0_i32_1 = arith.constant 0 : i32
    return %c0_i32, %c0_i32_0 : i32, i32
  }
  func.func @transform_2(%arg0: i32) -> (i32, i32) {
    %c0_i32 = arith.constant 0 : i32
    %c0_i32_0 = arith.constant 0 : i32
    %c0_i32_1 = arith.constant 0 : i32
    return %c0_i32, %c0_i32_0 : i32, i32
  }
  func.func @transform_3(%arg0: i32) -> (i32, i32) {
    %c0_i32 = arith.constant 0 : i32
    %c0_i32_0 = arith.constant 0 : i32
    %c0_i32_1 = arith.constant 0 : i32
    return %c0_i32, %c0_i32_0 : i32, i32
  }
  func.func @transform_4(%arg0: i32) -> (i32, i32) {
    %c0_i32 = arith.constant 0 : i32
    %c0_i32_0 = arith.constant 0 : i32
    %c0_i32_1 = arith.constant 0 : i32
    return %c0_i32, %c0_i32_0 : i32, i32
  }
  func.func @transform_5(%arg0: i32) -> (i32, i32) {
    %c0_i32 = arith.constant 0 : i32
    %c0_i32_0 = arith.constant 0 : i32
    %c0_i32_1 = arith.constant 0 : i32
    return %c0_i32, %c0_i32_0 : i32, i32
  }
  func.func @transform_6(%arg0: i32) -> (i32, i32) {
    %c0_i32 = arith.constant 0 : i32
    %c0_i32_0 = arith.constant 0 : i32
    %c0_i32_1 = arith.constant 0 : i32
    return %c0_i32, %c0_i32_0 : i32, i32
  }
  func.func @transform_7(%arg0: i32) -> (i32, i32) {
    %c0_i32 = arith.constant 0 : i32
    %c0_i32_0 = arith.constant 0 : i32
    %c0_i32_1 = arith.constant 0 : i32
    return %c0_i32, %c0_i32_0 : i32, i32
  }
  func.func @transform_8(%arg0: i32) -> (i32, i32) {
    %c0_i32 = arith.constant 0 : i32
    %c0_i32_0 = arith.constant 0 : i32
    %c0_i32_1 = arith.constant 0 : i32
    return %c0_i32, %c0_i32_0 : i32, i32
  }
  func.func @transform_9(%arg0: i32) -> (i32, i32) {
    %c0_i32 = arith.constant 0 : i32
    %c0_i32_0 = arith.constant 0 : i32
    %c0_i32_1 = arith.constant 0 : i32
    return %c0_i32, %c0_i32_0 : i32, i32
  }
  func.func @transform_10(%arg0: i32) -> (i32, i32) {
    %c0_i32 = arith.constant 0 : i32
    %c0_i32_0 = arith.constant 0 : i32
    %c0_i32_1 = arith.constant 0 : i32
    return %c0_i32, %c0_i32_0 : i32, i32
  }
  func.func @transform_11(%arg0: i32) -> (i32, i32) {
    %c0_i32 = arith.constant 0 : i32
    %c0_i32_0 = arith.constant 0 : i32
    %c0_i32_1 = arith.constant 0 : i32
    return %c0_i32, %c0_i32_0 : i32, i32
  }
  func.func @transform_12(%arg0: i32) -> (i32, i32) {
    %c0_i32 = arith.constant 0 : i32
    %c0_i32_0 = arith.constant 0 : i32
    %c0_i32_1 = arith.constant 0 : i32
    return %c0_i32, %c0_i32_0 : i32, i32
  }
  func.func @transform_13(%arg0: i32) -> (i32, i32) {
    %c0_i32 = arith.constant 0 : i32
    %c0_i32_0 = arith.constant 0 : i32
    %c0_i32_1 = arith.constant 0 : i32
    return %c0_i32, %c0_i32_0 : i32, i32
  }
  func.func @transform_14(%arg0: i32) -> (i32, i32) {
    %c0_i32 = arith.constant 0 : i32
    %c0_i32_0 = arith.constant 0 : i32
    %c0_i32_1 = arith.constant 0 : i32
    return %c0_i32, %c0_i32_0 : i32, i32
  }
  func.func @transform_15(%arg0: i32) -> (i32, i32) {
    %c0_i32 = arith.constant 0 : i32
    %c0_i32_0 = arith.constant 0 : i32
    %c0_i32_1 = arith.constant 0 : i32
    return %c0_i32, %c0_i32_0 : i32, i32
  }
  func.func @transform_16(%arg0: i32) -> (i32, i32) {
    %c0_i32 = arith.constant 0 : i32
    %c0_i32_0 = arith.constant 0 : i32
    %c0_i32_1 = arith.constant 0 : i32
    return %c0_i32, %c0_i32_0 : i32, i32
  }
  func.func @transform_17(%arg0: i32) -> (i32, i32) {
    %c0_i32 = arith.constant 0 : i32
    %c0_i32_0 = arith.constant 0 : i32
    %c0_i32_1 = arith.constant 0 : i32
    return %c0_i32, %c0_i32_0 : i32, i32
  }
  func.func @transform_18(%arg0: i32) -> (i32, i32) {
    %c0_i32 = arith.constant 0 : i32
    %c0_i32_0 = arith.constant 0 : i32
    %c0_i32_1 = arith.constant 0 : i32
    return %c0_i32, %c0_i32_0 : i32, i32
  }
  func.func @transform_19(%arg0: i32) -> (i32, i32) {
    %c0_i32 = arith.constant 0 : i32
    %c0_i32_0 = arith.constant 0 : i32
    return %arg0, %c0_i32 : i32, i32
  }
}

</mosaic_0001>

<llo_original>
// kernel: tpu_custom_call.1
$region0: #{tpu_custom_call.1}
  #allocation0 [shape = 'u32[]', space=smem, size = 0x4, offset = 0x4, fixed_abs, tag = 'smem constant byte address 0x4 - core index']
  #allocation1 [shape = 'u32[144,128]{1,0:T(1,128)}', space=vmem, size = 0x12000, scoped, tag = 'internal scratch']
  %s0 = inlined_call_operand.vmem [shape: f32[16,32], index: 0, kind: input, shape index: {}]
  %s1 = inlined_call_operand.vmem [shape: bf16[32,32], index: 1, kind: input, shape index: {}]
  %s2 = inlined_call_operand.vmem [shape: f32[1,32], index: 2, kind: input, shape index: {}]
  %s3 = inlined_call_operand.vmem [shape: bf16[32,32], index: 3, kind: input, shape index: {}]
  %s4 = inlined_call_operand.vmem [shape: f32[1,32], index: 4, kind: input, shape index: {}]
  %s5 = inlined_call_operand.hbm [shape: bf16[32,32], index: 5, kind: input, shape index: {}]
  %s6 = inlined_call_operand.hbm [shape: f32[1,32], index: 6, kind: input, shape index: {}]
  %s7 = inlined_call_operand.hbm [shape: bf16[32,32], index: 7, kind: input, shape index: {}]
  %s8 = inlined_call_operand.hbm [shape: f32[1,32], index: 8, kind: input, shape index: {}]
  %s9 = inlined_call_operand.hbm [shape: f32[1,32], index: 9, kind: input, shape index: {}]
  %s10 = inlined_call_operand.vmem [shape: f32[1,32], index: 10, kind: input, shape index: {}]
  %s11 = inlined_call_operand.vmem [shape: f32[1,32], index: 11, kind: input, shape index: {}]
  %s12 = inlined_call_operand.vmem [shape: f32[1,32], index: 12, kind: input, shape index: {}]
  %s13 = inlined_call_operand.vmem [shape: f32[1,32], index: 13, kind: input, shape index: {}]
  %s14 = inlined_call_operand.vmem [shape: f32[1,32], index: 14, kind: input, shape index: {}]
  %s15 = inlined_call_operand.vmem [shape: bf16[32,64], index: 15, kind: input, shape index: {}]
  %s16 = inlined_call_operand.vmem [shape: f32[1,64], index: 16, kind: input, shape index: {}]
  %s17 = inlined_call_operand.vmem [shape: bf16[64,32], index: 17, kind: input, shape index: {}]
  %s18 = inlined_call_operand.vmem [shape: f32[1,32], index: 18, kind: input, shape index: {}]
  %s19 = inlined_call_operand.hbm [shape: f32[16,32], index: 19, kind: output, shape index: {}]
  %s20 = sld [smem:[#allocation0]]
  $region129: #{tpu_custom_call.1} parent=0
    _
  %s22 = ssub.s32 1, %s20
  %s23 = scalar_select 0, %s22, %s20
  $region1: #{tpu_custom_call.1} parent=0
    #allocation2 [shape = 'u8[8192]{0}', space=vmem, size = 0x2000, scoped, tag = 'input window, operand 5, single buffered']
    #allocation3 [shape = 's32[2]{0}', space=sflag, size = 0x8, scoped, tag = 'scoped memory for tpu_custom_call.1']
    #allocation4 [shape = 's32[2]{0}', space=sflag, size = 0x8, scoped, tag = 'scoped memory for tpu_custom_call.1']
    #allocation5 [shape = 'u8[512]{0}', space=vmem, size = 0x400, scoped, tag = 'input window, operand 6, single buffered']
    #allocation6 [shape = 's32[1]{0}', space=sflag, size = 0x4, scoped, tag = 'scoped memory for tpu_custom_call.1']
    #allocation7 [shape = 'u8[8192]{0}', space=vmem, size = 0x2000, scoped, tag = 'input window, operand 7, single buffered']
    #allocation8 [shape = 'u8[512]{0}', space=vmem, size = 0x400, scoped, tag = 'input window, operand 8, single buffered']
    #allocation9 [shape = 's32[1]{0}', space=sflag, size = 0x4, scoped, tag = 'scoped memory for tpu_custom_call.1']
    #allocation10 [shape = 'u8[512]{0}', space=vmem, size = 0x400, scoped, tag = 'input window, operand 9, single buffered']
    #allocation11 [shape = 'u8[8192]{0}', space=vmem, size = 0x2000, scoped, tag = 'output window, operand 0']
    %24 = vsyncpa [#allocation3], 0
    %25 = vsyncpa [#allocation6], 0
    %26 = vsyncpa [#allocation9], 0
    %27 = vsyncpa [#allocation4], 0
    %s28 = scalar_lea.sflag [#allocation4], 1
    %29 = vsyncpa %s28, 0
    loop: start=0, step=1, limit=4
    $region2: #{tpu_custom_call.1} parent=1 // loop_pre_header
      _
    $region3: #{tpu_custom_call.1} parent=1 // loop_header
      %s31 = sphi 0, %s35
      %p32 = scmp.ge.s32.totalorder %s31, 4
      %s41 = sphi 0, %s43
      %s44 = sphi 0, %s41
      %s45 = sphi 0, %s44
      %s61 = sphi 0, %s45
      %s65 = sphi 0, %s65
      %s67 = sphi 0, %s65
      %s68 = sphi 0, %s67
      %s82 = sphi 0, %s68
      %s86 = sphi 0, %s86
      %s88 = sphi 0, %s86
      %s89 = sphi 0, %s88
      %s103 = sphi 0, %s89
      %s107 = sphi 0, %s107
      %s109 = sphi 0, %s107
      %s110 = sphi 0, %s109
      %s124 = sphi 0, %s110
      %s128 = sphi 0, %s128
      %s130 = sphi 0, %s128
      %s131 = sphi 0, %s130
      %s145 = sphi 0, %s131
      %s149 = sphi 0, %s149
      %s151 = sphi 0, %s149
      %s152 = sphi 0, %s151
      %s166 = sphi 0, %s152
      %s170 = sphi 0, %s170
      %s172 = sphi 0, %s170
      %s173 = sphi 0, %s172
      %s187 = sphi 0, %s173
      %s191 = sphi 0, %s191
      %s193 = sphi 0, %s191
      %s194 = sphi 0, %s193
      %s208 = sphi 0, %s194
      %s212 = sphi 0, %s212
      %s214 = sphi 0, %s212
      %s215 = sphi 0, %s214
      %s229 = sphi 0, %s215
      %s233 = sphi 0, %s233
      %s235 = sphi 0, %s233
      %s236 = sphi 0, %s235
      %s250 = sphi 0, %s236
      %s254 = sphi 0, %s254
      %s256 = sphi 0, %s254
      %s257 = sphi 0, %s256
      %s271 = sphi 0, %s257
      %s275 = sphi 0, %s275
      %s277 = sphi 0, %s275
      %s278 = sphi 0, %s277
      %s292 = sphi 0, %s278
      %s296 = sphi 0, %s296
      %s298 = sphi 0, %s296
      %s299 = sphi 0, %s298
      %s313 = sphi 0, %s299
      %s317 = sphi 0, %s317
      %s319 = sphi 0, %s317
      %s320 = sphi 0, %s319
      %s334 = sphi 0, %s320
      %s338 = sphi 0, %s338
      %s340 = sphi 0, %s338
      %s341 = sphi 0, %s340
      %s355 = sphi 0, %s341
      %s359 = sphi 0, %s359
      %s361 = sphi 0, %s359
      %s362 = sphi 0, %s361
      %s376 = sphi 0, %s362
      %s380 = sphi 0, %s380
      %s382 = sphi 0, %s380
      %s383 = sphi 0, %s382
      %s397 = sphi 0, %s383
      %s401 = sphi 0, %s401
      %s403 = sphi 0, %s401
      %s404 = sphi 0, %s403
      %s418 = sphi 0, %s404
      %s422 = sphi 0, %s422
      %s424 = sphi 0, %s422
      %s425 = sphi 0, %s424
      %s439 = sphi 0, %s425
      %s445 = sphi 0, %s447
      %s448 = sphi 0, %s445
      %s449 = sphi 0, %s448
      %s465 = sphi 0, %s449
    $region4: #{tpu_custom_call.1} parent=1 // loop_header_branch
      %34 = sbr.rel (%p32) target = $region8
    $region5: #{tpu_custom_call.1} parent=1 // loop_body
      %s36 = ssub.s32 %s31, 1
      %s37 = ssub.s32 %s31, 2
      %s38 = sadd.s32 %s31, 1
      %s39 = ssub.s32 %s31, %s38
      %p40 = scmp.eq.s32.totalorder %s39, 0
      %s42 = sadd.s32 %s41, 1
      %s43 = scalar_select %p40, %s41, %s42
      %p46 = pneg %p40
      %p47 = scmp.eq.s32.totalorder %s31, 1
      %p48 = por %p46, %p47
      %p49 = scmp.ne.s32.totalorder %s41, %s44
      %p50 = scmp.eq.s32.totalorder %s31, 0
      %p51 = por %p49, %p50
      %p52 = scmp.ne.s32.totalorder %s41, %s44
      %p53 = scmp.eq.s32.totalorder %s36, 1
      %p54 = por %p52, %p53
      %p55 = scmp.ne.s32.totalorder %s44, %s45
      %p56 = scmp.eq.s32.totalorder %s36, 0
      %p57 = por %p55, %p56
      %p58 = scmp.ne.s32.totalorder %s44, %s45
      %p59 = scmp.eq.s32.totalorder %s37, 1
      %p60 = por %p58, %p59
      %p62 = scmp.ne.s32.totalorder %s45, %s61
      %p63 = scmp.eq.s32.totalorder %s37, 0
      %p64 = por %p62, %p63
      %s66 = sadd.s32 %s65, 1
      %p69 = scmp.eq.s32.totalorder %s31, 1
      %p70 = scmp.ne.s32.totalorder %s65, %s67
      %p71 = scmp.eq.s32.totalorder %s31, 0
      %p72 = por %p70, %p71
      %p73 = scmp.ne.s32.totalorder %s65, %s67
      %p74 = scmp.eq.s32.totalorder %s36, 1
      %p75 = por %p73, %p74
      %p76 = scmp.ne.s32.totalorder %s67, %s68
      %p77 = scmp.eq.s32.totalorder %s36, 0
      %p78 = por %p76, %p77
      %p79 = scmp.ne.s32.totalorder %s67, %s68
      %p80 = scmp.eq.s32.totalorder %s37, 1
      %p81 = por %p79, %p80
      %p83 = scmp.ne.s32.totalorder %s68, %s82
      %p84 = scmp.eq.s32.totalorder %s37, 0
      %p85 = por %p83, %p84
      %s87 = sadd.s32 %s86, 1
      %p90 = scmp.eq.s32.totalorder %s31, 1
      %p91 = scmp.ne.s32.totalorder %s86, %s88
      %p92 = scmp.eq.s32.totalorder %s31, 0
      %p93 = por %p91, %p92
      %p94 = scmp.ne.s32.totalorder %s86, %s88
      %p95 = scmp.eq.s32.totalorder %s36, 1
      %p96 = por %p94, %p95
      %p97 = scmp.ne.s32.totalorder %s88, %s89
      %p98 = scmp.eq.s32.totalorder %s36, 0
      %p99 = por %p97, %p98
      %p100 = scmp.ne.s32.totalorder %s88, %s89
      %p101 = scmp.eq.s32.totalorder %s37, 1
      %p102 = por %p100, %p101
      %p104 = scmp.ne.s32.totalorder %s89, %s103
      %p105 = scmp.eq.s32.totalorder %s37, 0
      %p106 = por %p104, %p105
      %s108 = sadd.s32 %s107, 1
      %p111 = scmp.eq.s32.totalorder %s31, 1
      %p112 = scmp.ne.s32.totalorder %s107, %s109
      %p113 = scmp.eq.s32.totalorder %s31, 0
      %p114 = por %p112, %p113
      %p115 = scmp.ne.s32.totalorder %s107, %s109
      %p116 = scmp.eq.s32.totalorder %s36, 1
      %p117 = por %p115, %p116
      %p118 = scmp.ne.s32.totalorder %s109, %s110
      %p119 = scmp.eq.s32.totalorder %s36, 0
      %p120 = por %p118, %p119
      %p121 = scmp.ne.s32.totalorder %s109, %s110
      %p122 = scmp.eq.s32.totalorder %s37, 1
      %p123 = por %p121, %p122
      %p125 = scmp.ne.s32.totalorder %s110, %s124
      %p126 = scmp.eq.s32.totalorder %s37, 0
      %p127 = por %p125, %p126
      %s129 = sadd.s32 %s128, 1
      %p132 = scmp.eq.s32.totalorder %s31, 1
      %p133 = scmp.ne.s32.totalorder %s128, %s130
      %p134 = scmp.eq.s32.totalorder %s31, 0
      %p135 = por %p133, %p134
      %p136 = scmp.ne.s32.totalorder %s128, %s130
      %p137 = scmp.eq.s32.totalorder %s36, 1
      %p138 = por %p136, %p137
      %p139 = scmp.ne.s32.totalorder %s130, %s131
      %p140 = scmp.eq.s32.totalorder %s36, 0
      %p141 = por %p139, %p140
      %p142 = scmp.ne.s32.totalorder %s130, %s131
      %p143 = scmp.eq.s32.totalorder %s37, 1
      %p144 = por %p142, %p143
      %p146 = scmp.ne.s32.totalorder %s131, %s145
      %p147 = scmp.eq.s32.totalorder %s37, 0
      %p148 = por %p146, %p147
      %s150 = sadd.s32 %s149, 1
      %p153 = scmp.eq.s32.totalorder %s31, 1
      %p154 = scmp.ne.s32.totalorder %s149, %s151
      %p155 = scmp.eq.s32.totalorder %s31, 0
      %p156 = por %p154, %p155
      %p157 = scmp.ne.s32.totalorder %s149, %s151
      %p158 = scmp.eq.s32.totalorder %s36, 1
      %p159 = por %p157, %p158
      %p160 = scmp.ne.s32.totalorder %s151, %s152
      %p161 = scmp.eq.s32.totalorder %s36, 0
      %p162 = por %p160, %p161
      %p163 = scmp.ne.s32.totalorder %s151, %s152
      %p164 = scmp.eq.s32.totalorder %s37, 1
      %p165 = por %p163, %p164
      %p167 = scmp.ne.s32.totalorder %s152, %s166
      %p168 = scmp.eq.s32.totalorder %s37, 0
      %p169 = por %p167, %p168
      %s171 = sadd.s32 %s170, 1
      %p174 = scmp.eq.s32.totalorder %s31, 1
      %p175 = scmp.ne.s32.totalorder %s170, %s172
      %p176 = scmp.eq.s32.totalorder %s31, 0
      %p177 = por %p175, %p176
      %p178 = scmp.ne.s32.totalorder %s170, %s172
      %p179 = scmp.eq.s32.totalorder %s36, 1
      %p180 = por %p178, %p179
      %p181 = scmp.ne.s32.totalorder %s172, %s173
      %p182 = scmp.eq.s32.totalorder %s36, 0
      %p183 = por %p181, %p182
      %p184 = scmp.ne.s32.totalorder %s172, %s173
      %p185 = scmp.eq.s32.totalorder %s37, 1
      %p186 = por %p184, %p185
      %p188 = scmp.ne.s32.totalorder %s173, %s187
      %p189 = scmp.eq.s32.totalorder %s37, 0
      %p190 = por %p188, %p189
      %s192 = sadd.s32 %s191, 1
      %p195 = scmp.eq.s32.totalorder %s31, 1
      %p196 = scmp.ne.s32.totalorder %s191, %s193
      %p197 = scmp.eq.s32.totalorder %s31, 0
      %p198 = por %p196, %p197
      %p199 = scmp.ne.s32.totalorder %s191, %s193
      %p200 = scmp.eq.s32.totalorder %s36, 1
      %p201 = por %p199, %p200
      %p202 = scmp.ne.s32.totalorder %s193, %s194
      %p203 = scmp.eq.s32.totalorder %s36, 0
      %p204 = por %p202, %p203
      %p205 = scmp.ne.s32.totalorder %s193, %s194
      %p206 = scmp.eq.s32.totalorder %s37, 1
      %p207 = por %p205, %p206
      %p209 = scmp.ne.s32.totalorder %s194, %s208
      %p210 = scmp.eq.s32.totalorder %s37, 0
      %p211 = por %p209, %p210
      %s213 = sadd.s32 %s212, 1
      %p216 = scmp.eq.s32.totalorder %s31, 1
      %p217 = scmp.ne.s32.totalorder %s212, %s214
      %p218 = scmp.eq.s32.totalorder %s31, 0
      %p219 = por %p217, %p218
      %p220 = scmp.ne.s32.totalorder %s212, %s214
      %p221 = scmp.eq.s32.totalorder %s36, 1
      %p222 = por %p220, %p221
      %p223 = scmp.ne.s32.totalorder %s214, %s215
      %p224 = scmp.eq.s32.totalorder %s36, 0
      %p225 = por %p223, %p224
      %p226 = scmp.ne.s32.totalorder %s214, %s215
      %p227 = scmp.eq.s32.totalorder %s37, 1
      %p228 = por %p226, %p227
      %p230 = scmp.ne.s32.totalorder %s215, %s229
      %p231 = scmp.eq.s32.totalorder %s37, 0
      %p232 = por %p230, %p231
      %s234 = sadd.s32 %s233, 1
      %p237 = scmp.eq.s32.totalorder %s31, 1
      %p238 = scmp.ne.s32.totalorder %s233, %s235
      %p239 = scmp.eq.s32.totalorder %s31, 0
      %p240 = por %p238, %p239
      %p241 = scmp.ne.s32.totalorder %s233, %s235
      %p242 = scmp.eq.s32.totalorder %s36, 1
      %p243 = por %p241, %p242
      %p244 = scmp.ne.s32.totalorder %s235, %s236
      %p245 = scmp.eq.s32.totalorder %s36, 0
      %p246 = por %p244, %p245
      %p247 = scmp.ne.s32.totalorder %s235, %s236
      %p248 = scmp.eq.s32.totalorder %s37, 1
      %p249 = por %p247, %p248
      %p251 = scmp.ne.s32.totalorder %s236, %s250
      %p252 = scmp.eq.s32.totalorder %s37, 0
      %p253 = por %p251, %p252
      %s255 = sadd.s32 %s254, 1
      %p258 = scmp.eq.s32.totalorder %s31, 1
      %p259 = scmp.ne.s32.totalorder %s254, %s256
      %p260 = scmp.eq.s32.totalorder %s31, 0
      %p261 = por %p259, %p260
      %p262 = scmp.ne.s32.totalorder %s254, %s256
      %p263 = scmp.eq.s32.totalorder %s36, 1
      %p264 = por %p262, %p263
      %p265 = scmp.ne.s32.totalorder %s256, %s257
      %p266 = scmp.eq.s32.totalorder %s36, 0
      %p267 = por %p265, %p266
      %p268 = scmp.ne.s32.totalorder %s256, %s257
      %p269 = scmp.eq.s32.totalorder %s37, 1
      %p270 = por %p268, %p269
      %p272 = scmp.ne.s32.totalorder %s257, %s271
      %p273 = scmp.eq.s32.totalorder %s37, 0
      %p274 = por %p272, %p273
      %s276 = sadd.s32 %s275, 1
      %p279 = scmp.eq.s32.totalorder %s31, 1
      %p280 = scmp.ne.s32.totalorder %s275, %s277
      %p281 = scmp.eq.s32.totalorder %s31, 0
      %p282 = por %p280, %p281
      %p283 = scmp.ne.s32.totalorder %s275, %s277
      %p284 = scmp.eq.s32.totalorder %s36, 1
      %p285 = por %p283, %p284
      %p286 = scmp.ne.s32.totalorder %s277, %s278
      %p287 = scmp.eq.s32.totalorder %s36, 0
      %p288 = por %p286, %p287
      %p289 = scmp.ne.s32.totalorder %s277, %s278
      %p290 = scmp.eq.s32.totalorder %s37, 1
      %p291 = por %p289, %p290
      %p293 = scmp.ne.s32.totalorder %s278, %s292
      %p294 = scmp.eq.s32.totalorder %s37, 0
      %p295 = por %p293, %p294
      %s297 = sadd.s32 %s296, 1
      %p300 = scmp.eq.s32.totalorder %s31, 1
      %p301 = scmp.ne.s32.totalorder %s296, %s298
      %p302 = scmp.eq.s32.totalorder %s31, 0
      %p303 = por %p301, %p302
      %p304 = scmp.ne.s32.totalorder %s296, %s298
      %p305 = scmp.eq.s32.totalorder %s36, 1
      %p306 = por %p304, %p305
      %p307 = scmp.ne.s32.totalorder %s298, %s299
      %p308 = scmp.eq.s32.totalorder %s36, 0
      %p309 = por %p307, %p308
      %p310 = scmp.ne.s32.totalorder %s298, %s299
      %p311 = scmp.eq.s32.totalorder %s37, 1
      %p312 = por %p310, %p311
      %p314 = scmp.ne.s32.totalorder %s299, %s313
      %p315 = scmp.eq.s32.totalorder %s37, 0
      %p316 = por %p314, %p315
      %s318 = sadd.s32 %s317, 1
      %p321 = scmp.eq.s32.totalorder %s31, 1
      %p322 = scmp.ne.s32.totalorder %s317, %s319
      %p323 = scmp.eq.s32.totalorder %s31, 0
      %p324 = por %p322, %p323
      %p325 = scmp.ne.s32.totalorder %s317, %s319
      %p326 = scmp.eq.s32.totalorder %s36, 1
      %p327 = por %p325, %p326
      %p328 = scmp.ne.s32.totalorder %s319, %s320
      %p329 = scmp.eq.s32.totalorder %s36, 0
      %p330 = por %p328, %p329
      %p331 = scmp.ne.s32.totalorder %s319, %s320
      %p332 = scmp.eq.s32.totalorder %s37, 1
      %p333 = por %p331, %p332
      %p335 = scmp.ne.s32.totalorder %s320, %s334
      %p336 = scmp.eq.s32.totalorder %s37, 0
      %p337 = por %p335, %p336
      %s339 = sadd.s32 %s338, 1
      %p342 = scmp.eq.s32.totalorder %s31, 1
      %p343 = scmp.ne.s32.totalorder %s338, %s340
      %p344 = scmp.eq.s32.totalorder %s31, 0
      %p345 = por %p343, %p344
      %p346 = scmp.ne.s32.totalorder %s338, %s340
      %p347 = scmp.eq.s32.totalorder %s36, 1
      %p348 = por %p346, %p347
      %p349 = scmp.ne.s32.totalorder %s340, %s341
      %p350 = scmp.eq.s32.totalorder %s36, 0
      %p351 = por %p349, %p350
      %p352 = scmp.ne.s32.totalorder %s340, %s341
      %p353 = scmp.eq.s32.totalorder %s37, 1
      %p354 = por %p352, %p353
      %p356 = scmp.ne.s32.totalorder %s341, %s355
      %p357 = scmp.eq.s32.totalorder %s37, 0
      %p358 = por %p356, %p357
      %s360 = sadd.s32 %s359, 1
      %p363 = scmp.eq.s32.totalorder %s31, 1
      %p364 = scmp.ne.s32.totalorder %s359, %s361
      %p365 = scmp.eq.s32.totalorder %s31, 0
      %p366 = por %p364, %p365
      %p367 = scmp.ne.s32.totalorder %s359, %s361
      %p368 = scmp.eq.s32.totalorder %s36, 1
      %p369 = por %p367, %p368
      %p370 = scmp.ne.s32.totalorder %s361, %s362
      %p371 = scmp.eq.s32.totalorder %s36, 0
      %p372 = por %p370, %p371
      %p373 = scmp.ne.s32.totalorder %s361, %s362
      %p374 = scmp.eq.s32.totalorder %s37, 1
      %p375 = por %p373, %p374
      %p377 = scmp.ne.s32.totalorder %s362, %s376
      %p378 = scmp.eq.s32.totalorder %s37, 0
      %p379 = por %p377, %p378
      %s381 = sadd.s32 %s380, 1
      %p384 = scmp.eq.s32.totalorder %s31, 1
      %p385 = scmp.ne.s32.totalorder %s380, %s382
      %p386 = scmp.eq.s32.totalorder %s31, 0
      %p387 = por %p385, %p386
      %p388 = scmp.ne.s32.totalorder %s380, %s382
      %p389 = scmp.eq.s32.totalorder %s36, 1
      %p390 = por %p388, %p389
      %p391 = scmp.ne.s32.totalorder %s382, %s383
      %p392 = scmp.eq.s32.totalorder %s36, 0
      %p393 = por %p391, %p392
      %p394 = scmp.ne.s32.totalorder %s382, %s383
      %p395 = scmp.eq.s32.totalorder %s37, 1
      %p396 = por %p394, %p395
      %p398 = scmp.ne.s32.totalorder %s383, %s397
      %p399 = scmp.eq.s32.totalorder %s37, 0
      %p400 = por %p398, %p399
      %s402 = sadd.s32 %s401, 1
      %p405 = scmp.eq.s32.totalorder %s31, 1
      %p406 = scmp.ne.s32.totalorder %s401, %s403
      %p407 = scmp.eq.s32.totalorder %s31, 0
      %p408 = por %p406, %p407
      %p409 = scmp.ne.s32.totalorder %s401, %s403
      %p410 = scmp.eq.s32.totalorder %s36, 1
      %p411 = por %p409, %p410
      %p412 = scmp.ne.s32.totalorder %s403, %s404
      %p413 = scmp.eq.s32.totalorder %s36, 0
      %p414 = por %p412, %p413
      %p415 = scmp.ne.s32.totalorder %s403, %s404
      %p416 = scmp.eq.s32.totalorder %s37, 1
      %p417 = por %p415, %p416
      %p419 = scmp.ne.s32.totalorder %s404, %s418
      %p420 = scmp.eq.s32.totalorder %s37, 0
      %p421 = por %p419, %p420
      %s423 = sadd.s32 %s422, 1
      %p426 = scmp.eq.s32.totalorder %s31, 1
      %p427 = scmp.ne.s32.totalorder %s422, %s424
      %p428 = scmp.eq.s32.totalorder %s31, 0
      %p429 = por %p427, %p428
      %p430 = scmp.ne.s32.totalorder %s422, %s424
      %p431 = scmp.eq.s32.totalorder %s36, 1
      %p432 = por %p430, %p431
      %p433 = scmp.ne.s32.totalorder %s424, %s425
      %p434 = scmp.eq.s32.totalorder %s36, 0
      %p435 = por %p433, %p434
      %p436 = scmp.ne.s32.totalorder %s424, %s425
      %p437 = scmp.eq.s32.totalorder %s37, 1
      %p438 = por %p436, %p437
      %p440 = scmp.ne.s32.totalorder %s425, %s439
      %p441 = scmp.eq.s32.totalorder %s37, 0
      %p442 = por %p440, %p441
      %s443 = ssub.s32 %s31, %s38
      %p444 = scmp.eq.s32.totalorder %s443, 0
      %s446 = sadd.s32 %s445, 1
      %s447 = scalar_select %p444, %s445, %s446
      %p450 = pneg %p444
      %p451 = scmp.eq.s32.totalorder %s31, 1
      %p452 = por %p450, %p451
      %p453 = scmp.ne.s32.totalorder %s445, %s448
      %p454 = scmp.eq.s32.totalorder %s31, 0
      %p455 = por %p453, %p454
      %p456 = scmp.ne.s32.totalorder %s445, %s448
      %p457 = scmp.eq.s32.totalorder %s36, 1
      %p458 = por %p456, %p457
      %p459 = scmp.ne.s32.totalorder %s448, %s449
      %p460 = scmp.eq.s32.totalorder %s36, 0
      %p461 = por %p459, %p460
      %p462 = scmp.ne.s32.totalorder %s448, %s449
      %p463 = scmp.eq.s32.totalorder %s37, 1
      %p464 = por %p462, %p463
      %p466 = scmp.ne.s32.totalorder %s449, %s465
      %p467 = scmp.eq.s32.totalorder %s37, 0
      %p468 = por %p466, %p467
      %p469 = scmp.le.s32.totalorder 1, %s31
      %p470 = scmp.lt.s32.totalorder %s31, 3
      %p471 = pnand %p469, %p470
      %p472 = pneg %p471
      // Predicated region
      $region9: #{tpu_custom_call.1} parent=5 // pred_check
        _
      $region10: #{tpu_custom_call.1} parent=5 // pred_check_branch
        %474 = sbr.rel (%p471) target = $region12
      $region11: #{tpu_custom_call.1} parent=5 // pred_region
        %s475 = ssub.s32 %s31, 1
        // Predicated region
        $region13: #{tpu_custom_call.1} parent=11 // pred_check
          %p476 = pneg %p78
        $region14: #{tpu_custom_call.1} parent=11 // pred_check_branch
          %478 = sbr.rel (%p476) target = $region16
        $region15: #{tpu_custom_call.1} parent=11 // pred_region
          _
        $region16: #{tpu_custom_call.1} parent=11 // pred_fallthru
          _
        // Predicated region
        $region17: #{tpu_custom_call.1} parent=11 // pred_check
          %p479 = pneg %p99
        $region18: #{tpu_custom_call.1} parent=11 // pred_check_branch
          %481 = sbr.rel (%p479) target = $region20
        $region19: #{tpu_custom_call.1} parent=11 // pred_region
          _
        $region20: #{tpu_custom_call.1} parent=11 // pred_fallthru
          _
        // Predicated region
        $region21: #{tpu_custom_call.1} parent=11 // pred_check
          %p482 = pneg %p120
        $region22: #{tpu_custom_call.1} parent=11 // pred_check_branch
          %484 = sbr.rel (%p482) target = $region24
        $region23: #{tpu_custom_call.1} parent=11 // pred_region
          _
        $region24: #{tpu_custom_call.1} parent=11 // pred_fallthru
          _
        // Predicated region
        $region25: #{tpu_custom_call.1} parent=11 // pred_check
          %p485 = pneg %p141
        $region26: #{tpu_custom_call.1} parent=11 // pred_check_branch
          %487 = sbr.rel (%p485) target = $region28
        $region27: #{tpu_custom_call.1} parent=11 // pred_region
          _
        $region28: #{tpu_custom_call.1} parent=11 // pred_fallthru
          _
        // Predicated region
        $region29: #{tpu_custom_call.1} parent=11 // pred_check
          %p488 = pneg %p162
        $region30: #{tpu_custom_call.1} parent=11 // pred_check_branch
          %490 = sbr.rel (%p488) target = $region32
        $region31: #{tpu_custom_call.1} parent=11 // pred_region
          %s492 = ssub.s32 256, 256
          %493 = vsyncadd [#allocation3], %s492
          %s494 = sshll.u32 [#allocation2], 4
          %s495 = int_to_ptr.vmem [resolvable:$true] %s494
          %500 = dma.hbm_to_vmem [thread:$0]  %s5, 256, %s495, [#allocation3], 64, 64, 4
        $region32: #{tpu_custom_call.1} parent=11 // pred_fallthru
          _
        // Predicated region
        $region33: #{tpu_custom_call.1} parent=11 // pred_check
          %p501 = pneg %p183
        $region34: #{tpu_custom_call.1} parent=11 // pred_check_branch
          %503 = sbr.rel (%p501) target = $region36
        $region35: #{tpu_custom_call.1} parent=11 // pred_region
          %s505 = ssub.s32 16, 16
          %506 = vsyncadd [#allocation6], %s505
          %s508 = sshll.u32 [#allocation5], 4
          %s509 = int_to_ptr.vmem [resolvable:$true] %s508
          %511 = dma.hbm_to_vmem [thread:$0]  %s6, 16, %s509, [#allocation6]
        $region36: #{tpu_custom_call.1} parent=11 // pred_fallthru
          _
        // Predicated region
        $region37: #{tpu_custom_call.1} parent=11 // pred_check
          %p512 = pneg %p204
        $region38: #{tpu_custom_call.1} parent=11 // pred_check_branch
          %514 = sbr.rel (%p512) target = $region40
        $region39: #{tpu_custom_call.1} parent=11 // pred_region
          %s516 = ssub.s32 256, 256
          %517 = vsyncadd [#allocation6], %s516
          %s518 = sshll.u32 [#allocation7], 4
          %s519 = int_to_ptr.vmem [resolvable:$true] %s518
          %524 = dma.hbm_to_vmem [thread:$0]  %s7, 256, %s519, [#allocation6], 64, 64, 4
        $region40: #{tpu_custom_call.1} parent=11 // pred_fallthru
          _
        // Predicated region
        $region41: #{tpu_custom_call.1} parent=11 // pred_check
          %p525 = pneg %p225
        $region42: #{tpu_custom_call.1} parent=11 // pred_check_branch
          %527 = sbr.rel (%p525) target = $region44
        $region43: #{tpu_custom_call.1} parent=11 // pred_region
          %s529 = ssub.s32 16, 16
          %530 = vsyncadd [#allocation9], %s529
          %s532 = sshll.u32 [#allocation8], 4
          %s533 = int_to_ptr.vmem [resolvable:$true] %s532
          %535 = dma.hbm_to_vmem [thread:$0]  %s8, 16, %s533, [#allocation9]
        $region44: #{tpu_custom_call.1} parent=11 // pred_fallthru
          _
        // Predicated region
        $region45: #{tpu_custom_call.1} parent=11 // pred_check
          %p536 = pneg %p246
        $region46: #{tpu_custom_call.1} parent=11 // pred_check_branch
          %538 = sbr.rel (%p536) target = $region48
        $region47: #{tpu_custom_call.1} parent=11 // pred_region
          %s540 = ssub.s32 16, 16
          %541 = vsyncadd [#allocation9], %s540
          %s543 = sshll.u32 [#allocation10], 4
          %s544 = int_to_ptr.vmem [resolvable:$true] %s543
          %546 = dma.hbm_to_vmem [thread:$0]  %s9, 16, %s544, [#allocation9]
        $region48: #{tpu_custom_call.1} parent=11 // pred_fallthru
          _
        // Predicated region
        $region49: #{tpu_custom_call.1} parent=11 // pred_check
          %p547 = pneg %p267
        $region50: #{tpu_custom_call.1} parent=11 // pred_check_branch
          %549 = sbr.rel (%p547) target = $region52
        $region51: #{tpu_custom_call.1} parent=11 // pred_region
          _
        $region52: #{tpu_custom_call.1} parent=11 // pred_fallthru
          _
        // Predicated region
        $region53: #{tpu_custom_call.1} parent=11 // pred_check
          %p550 = pneg %p288
        $region54: #{tpu_custom_call.1} parent=11 // pred_check_branch
          %552 = sbr.rel (%p550) target = $region56
        $region55: #{tpu_custom_call.1} parent=11 // pred_region
          _
        $region56: #{tpu_custom_call.1} parent=11 // pred_fallthru
          _
        // Predicated region
        $region57: #{tpu_custom_call.1} parent=11 // pred_check
          %p553 = pneg %p309
        $region58: #{tpu_custom_call.1} parent=11 // pred_check_branch
          %555 = sbr.rel (%p553) target = $region60
        $region59: #{tpu_custom_call.1} parent=11 // pred_region
          _
        $region60: #{tpu_custom_call.1} parent=11 // pred_fallthru
          _
        // Predicated region
        $region61: #{tpu_custom_call.1} parent=11 // pred_check
          %p556 = pneg %p330
        $region62: #{tpu_custom_call.1} parent=11 // pred_check_branch
          %558 = sbr.rel (%p556) target = $region64
        $region63: #{tpu_custom_call.1} parent=11 // pred_region
          _
        $region64: #{tpu_custom_call.1} parent=11 // pred_fallthru
          _
        // Predicated region
        $region65: #{tpu_custom_call.1} parent=11 // pred_check
          %p559 = pneg %p351
        $region66: #{tpu_custom_call.1} parent=11 // pred_check_branch
          %561 = sbr.rel (%p559) target = $region68
        $region67: #{tpu_custom_call.1} parent=11 // pred_region
          _
        $region68: #{tpu_custom_call.1} parent=11 // pred_fallthru
          _
        // Predicated region
        $region69: #{tpu_custom_call.1} parent=11 // pred_check
          %p562 = pneg %p372
        $region70: #{tpu_custom_call.1} parent=11 // pred_check_branch
          %564 = sbr.rel (%p562) target = $region72
        $region71: #{tpu_custom_call.1} parent=11 // pred_region
          _
        $region72: #{tpu_custom_call.1} parent=11 // pred_fallthru
          _
        // Predicated region
        $region73: #{tpu_custom_call.1} parent=11 // pred_check
          %p565 = pneg %p393
        $region74: #{tpu_custom_call.1} parent=11 // pred_check_branch
          %567 = sbr.rel (%p565) target = $region76
        $region75: #{tpu_custom_call.1} parent=11 // pred_region
          _
        $region76: #{tpu_custom_call.1} parent=11 // pred_fallthru
          _
        // Predicated region
        $region77: #{tpu_custom_call.1} parent=11 // pred_check
          %p568 = pneg %p414
        $region78: #{tpu_custom_call.1} parent=11 // pred_check_branch
          %570 = sbr.rel (%p568) target = $region80
        $region79: #{tpu_custom_call.1} parent=11 // pred_region
          _
        $region80: #{tpu_custom_call.1} parent=11 // pred_fallthru
          _
        // Predicated region
        $region81: #{tpu_custom_call.1} parent=11 // pred_check
          %p571 = pneg %p435
        $region82: #{tpu_custom_call.1} parent=11 // pred_check_branch
          %573 = sbr.rel (%p571) target = $region84
        $region83: #{tpu_custom_call.1} parent=11 // pred_region
          _
        $region84: #{tpu_custom_call.1} parent=11 // pred_fallthru
          _
      $region12: #{tpu_custom_call.1} parent=5 // pred_fallthru
        _
      %p574 = scmp.lt.s32.totalorder %s31, 2
      // Predicated region
      $region85: #{tpu_custom_call.1} parent=5 // pred_check
        %p575 = pneg %p574
      $region86: #{tpu_custom_call.1} parent=5 // pred_check_branch
        %577 = sbr.rel (%p575) target = $region88
      $region87: #{tpu_custom_call.1} parent=5 // pred_region
        // Predicated region
        $region89: #{tpu_custom_call.1} parent=87 // pred_check
          %p578 = pneg %p51
        $region90: #{tpu_custom_call.1} parent=87 // pred_check_branch
          %580 = sbr.rel (%p578) target = $region92
        $region91: #{tpu_custom_call.1} parent=87 // pred_region
          %p581 = scmp.lt.s32.totalorder %s31, 1
          %s582 = scalar_select %p581, %s31, 1
          %s583 = smul.addr %s582, 8
          %s584 = scalar_lea.vmem %s0, %s583
        $region92: #{tpu_custom_call.1} parent=87 // pred_fallthru
          _
      $region88: #{tpu_custom_call.1} parent=5 // pred_fallthru
        _
      %p585 = scmp.le.s32.totalorder 1, %s31
      %p586 = scmp.lt.s32.totalorder %s31, 3
      %p587 = pnand %p585, %p586
      %p588 = pneg %p587
      // Predicated region
      $region93: #{tpu_custom_call.1} parent=5 // pred_check
        _
      $region94: #{tpu_custom_call.1} parent=5 // pred_check_branch
        %590 = sbr.rel (%p587) target = $region96
      $region95: #{tpu_custom_call.1} parent=5 // pred_region
        %s591 = ssub.s32 %s31, 1
        // Predicated region
        $region97: #{tpu_custom_call.1} parent=95 // pred_check
          %p592 = pneg %p162
        $region98: #{tpu_custom_call.1} parent=95 // pred_check_branch
          %594 = sbr.rel (%p592) target = $region100
        $region99: #{tpu_custom_call.1} parent=95 // pred_region
          %595 = dma.done [#allocation3], 256
        $region100: #{tpu_custom_call.1} parent=95 // pred_fallthru
          _
        // Predicated region
        $region101: #{tpu_custom_call.1} parent=95 // pred_check
          %p596 = pneg %p183
        $region102: #{tpu_custom_call.1} parent=95 // pred_check_branch
          %598 = sbr.rel (%p596) target = $region104
        $region103: #{tpu_custom_call.1} parent=95 // pred_region
          %599 = dma.done [#allocation6], 16
        $region104: #{tpu_custom_call.1} parent=95 // pred_fallthru
          _
        // Predicated region
        $region105: #{tpu_custom_call.1} parent=95 // pred_check
          %p600 = pneg %p204
        $region106: #{tpu_custom_call.1} parent=95 // pred_check_branch
          %602 = sbr.rel (%p600) target = $region108
        $region107: #{tpu_custom_call.1} parent=95 // pred_region
          %603 = dma.done [#allocation6], 256
        $region108: #{tpu_custom_call.1} parent=95 // pred_fallthru
          _
        // Predicated region
        $region109: #{tpu_custom_call.1} parent=95 // pred_check
          %p604 = pneg %p225
        $region110: #{tpu_custom_call.1} parent=95 // pred_check_branch
          %606 = sbr.rel (%p604) target = $region112
        $region111: #{tpu_custom_call.1} parent=95 // pred_region
          %607 = dma.done [#allocation9], 16
        $region112: #{tpu_custom_call.1} parent=95 // pred_fallthru
          _
        // Predicated region
        $region113: #{tpu_custom_call.1} parent=95 // pred_check
          %p608 = pneg %p246
        $region114: #{tpu_custom_call.1} parent=95 // pred_check_branch
          %610 = sbr.rel (%p608) target = $region116
        $region115: #{tpu_custom_call.1} parent=95 // pred_region
          %611 = dma.done [#allocation9], 16
        $region116: #{tpu_custom_call.1} parent=95 // pred_fallthru
          _
        %p612 = scmp.lt.s32.totalorder %s36, 1
        %s613 = scalar_select %p612, %s36, 1
        %s614 = smul.addr %s613, 8
        %s615 = scalar_lea.vmem %s0, %s614
        %p616 = pneg %p57
        %p617 = pneg %p54
        %p618 = pneg %p78
        %p619 = pneg %p75
        %p620 = pneg %p99
        %p621 = pneg %p96
        %p622 = pneg %p120
        %p623 = pneg %p117
        %p624 = pneg %p141
        %p625 = pneg %p138
        %p626 = pneg %p162
        %p627 = pneg %p159
        %p628 = pneg %p183
        %p629 = pneg %p180
        %p630 = pneg %p204
        %p631 = pneg %p201
        %p632 = pneg %p225
        %p633 = pneg %p222
        %p634 = pneg %p246
        %p635 = pneg %p243
        %p636 = pneg %p267
        %p637 = pneg %p264
        %p638 = pneg %p288
        %p639 = pneg %p285
        %p640 = pneg %p309
        %p641 = pneg %p306
        %p642 = pneg %p330
        %p643 = pneg %p327
        %p644 = pneg %p351
        %p645 = pneg %p348
        %p646 = pneg %p372
        %p647 = pneg %p369
        %p648 = pneg %p393
        %p649 = pneg %p390
        %p650 = pneg %p414
        %p651 = pneg %p411
        %p652 = pneg %p435
        %p653 = pneg %p432
        %p654 = pneg %p461
        %p655 = pneg %p458
        %s656 = sand.u32 %s448, 1
        %s657 = scalar_lea.sflag [#allocation4], %s656
        %s658 = sand.u32 %s448, 1
        %s659 = smul.addr %s658, 8
        %s660 = scalar_lea.vmem [#allocation11], %s659
        %p661 = scmp.lt.s32.totalorder %s36, 1
        %s662 = scalar_select %p661, %s36, 1
        %s663 = smul.addr %s662, 8
        %s664 = scalar_lea.vmem %s0, %s663
        %v666 = vld [vmem:[%s664] sm:$0xff]
        %vm667 = vcmask 261120
        %v668 = vsel %vm667, %v666, 0.0
        %669 = vadd.xlane.f32.xlu0 %v668
        %v670 = vpop.xlane.xlu0 %669
        %v671 = vrcp.pop 32.0
        %v672 = vmul.f32 %v670, %v671
        %v673 = vmul.f32 %v666, %v666
        %v674 = vsel %vm667, %v673, 0.0
        %675 = vadd.xlane.f32.xlu0 %v674
        %v676 = vpop.xlane.xlu0 %675
        %v677 = vmul.f32 %v676, %v671
        %v678 = vmul.f32 %v672, %v672
        %v679 = vsub.f32 %v677, %v678
        %v680 = vsub.f32 %v666, %v672
        %v681 = vadd.f32 %v679, 1e-05
        %v682 = vrsqrt.pop %v681
        %v683 = vmul.f32 %v680, %v682
        %v684 = vld [vmem:[#allocation10] sm:$0x1]
        %v686 = vlaneseq
        %v687 = vshrl.u32 %v686, 7
        %v688 = vsub.s32 0, %v687
        %v689 = vrot.slane %v684, %v688
        %v691 = vmul.f32 %v683, %v689
        %v692 = vld [vmem:[%s10] sm:$0x1]
        %v694 = vlaneseq
        %v695 = vshrl.u32 %v694, 7
        %v696 = vsub.s32 0, %v695
        %v697 = vrot.slane %v692, %v696
        %v699 = vadd.f32 %v691, %v697
        %v700 = vpack.c.bf16 %v699, %v699
        %v701 = vld [vmem:[%s1] sm:$0xf]
        %v702 = vld [vmem:[%s1 + $0x4] sm:$0xf]
        %v703 = vld [vmem:[%s1 + $0x8] sm:$0xf]
        %v704 = vld [vmem:[%s1 + $0xc] sm:$0xf]
        %v705 = vld [vmem:[%s2] sm:$0x1]
        %v707 = vlaneseq
        %v708 = vshrl.u32 %v707, 7
        %v709 = vsub.s32 0, %v708
        %v710 = vrot.slane %v705, %v709
        %v716 = vunpack.c.l.b16 %v701
        %v717 = vunpack.c.l.b16 %v702
        %v718 = vunpack.c.l.b16 %v703
        %v719 = vunpack.c.l.b16 %v704
        %v720 = vpack.c.b16 %v717, %v716
        %v721 = vpack.c.b16 %v719, %v718
        %v725 = vsel %vm667, %v700, 0
        %727 = vmatprep.subr.bf16.mxu0 0
        %728 = vmatpush1.bf16.msra.mxu0 %v720
        %729 = vmatprep.subr.bf16.mxu0 0
        %730 = vmatpush1.bf16.msra.mxu0 %v721
        %731 = vmatprep.subr.bf16.mxu0 0
        %732 = vmatpush1.bf16.msra.mxu0 0
        %733 = vmatprep.subr.bf16.mxu0 0
        %734 = vmatpush1.bf16.msra.mxu0 0
        %735 = vmatprep.subr.bf16.mxu0 0
        %736 = vmatpush1.bf16.msra.mxu0 0
        %737 = vmatprep.subr.bf16.mxu0 0
        %738 = vmatpush1.bf16.msra.mxu0 0
        %739 = vmatprep.subr.bf16.mxu0 0
        %740 = vmatpush1.bf16.msra.mxu0 0
        %741 = vmatprep.subr.bf16.mxu0 0
        %742 = vmatpush1.bf16.msra.mxu0 0
        %743 = vmatprep.subr.bf16.mxu0 0
        %744 = vmatpush1.bf16.msra.mxu0 0
        %745 = vmatprep.subr.bf16.mxu0 0
        %746 = vmatpush1.bf16.msra.mxu0 0
        %747 = vmatprep.subr.bf16.mxu0 0
        %748 = vmatpush1.bf16.msra.mxu0 0
        %749 = vmatprep.subr.bf16.mxu0 0
        %750 = vmatpush1.bf16.msra.mxu0 0
        %751 = vmatprep.subr.bf16.mxu0 0
        %752 = vmatpush1.bf16.msra.mxu0 0
        %753 = vmatprep.subr.bf16.mxu0 0
        %754 = vmatpush1.bf16.msra.mxu0 0
        %755 = vmatprep.subr.bf16.mxu0 0
        %756 = vmatpush1.bf16.msra.mxu0 0
        %757 = vmatprep.subr.bf16.mxu0 0
        %758 = vmatpush1.bf16.msra.mxu0 0
        %759 = vmatprep.mubr.bf16.mxu0 0
        %760 = vmatmul.mubr.bf16.gmra.mrb[0].mxu0 %v725
        %v761 = vpop.f32.mrb[0].mxu0
        %v762 = vadd.f32 %v710, %v761
        %v763 = vpop.f32.mrb[0].mxu0
        %v764 = vpop.f32.mrb[0].mxu0
        %v765 = vpop.f32.mrb[0].mxu0
        %766 = vdwg.mxu0
        %v767 = vld [vmem:[%s3] sm:$0xf]
        %v768 = vld [vmem:[%s3 + $0x4] sm:$0xf]
        %v769 = vld [vmem:[%s3 + $0x8] sm:$0xf]
        %v770 = vld [vmem:[%s3 + $0xc] sm:$0xf]
        %v771 = vld [vmem:[%s4] sm:$0x1]
        %v773 = vlaneseq
        %v774 = vshrl.u32 %v773, 7
        %v775 = vsub.s32 0, %v774
        %v776 = vrot.slane %v771, %v775
        %v782 = vunpack.c.l.b16 %v767
        %v783 = vunpack.c.l.b16 %v768
        %v784 = vunpack.c.l.b16 %v769
        %v785 = vunpack.c.l.b16 %v770
        %v786 = vpack.c.b16 %v783, %v782
        %v787 = vpack.c.b16 %v785, %v784
        %790 = vmatprep.subr.bf16.mxu0 0
        %791 = vmatpush1.bf16.msra.mxu0 %v786
        %792 = vmatprep.subr.bf16.mxu0 0
        %793 = vmatpush1.bf16.msra.mxu0 %v787
        %794 = vmatprep.subr.bf16.mxu0 0
        %795 = vmatpush1.bf16.msra.mxu0 0
        %796 = vmatprep.subr.bf16.mxu0 0
        %797 = vmatpush1.bf16.msra.mxu0 0
        %798 = vmatprep.subr.bf16.mxu0 0
        %799 = vmatpush1.bf16.msra.mxu0 0
        %800 = vmatprep.subr.bf16.mxu0 0
        %801 = vmatpush1.bf16.msra.mxu0 0
        %802 = vmatprep.subr.bf16.mxu0 0
        %803 = vmatpush1.bf16.msra.mxu0 0
        %804 = vmatprep.subr.bf16.mxu0 0
        %805 = vmatpush1.bf16.msra.mxu0 0
        %806 = vmatprep.subr.bf16.mxu0 0
        %807 = vmatpush1.bf16.msra.mxu0 0
        %808 = vmatprep.subr.bf16.mxu0 0
        %809 = vmatpush1.bf16.msra.mxu0 0
        %810 = vmatprep.subr.bf16.mxu0 0
        %811 = vmatpush1.bf16.msra.mxu0 0
        %812 = vmatprep.subr.bf16.mxu0 0
        %813 = vmatpush1.bf16.msra.mxu0 0
        %814 = vmatprep.subr.bf16.mxu0 0
        %815 = vmatpush1.bf16.msra.mxu0 0
        %816 = vmatprep.subr.bf16.mxu0 0
        %817 = vmatpush1.bf16.msra.mxu0 0
        %818 = vmatprep.subr.bf16.mxu0 0
        %819 = vmatpush1.bf16.msra.mxu0 0
        %820 = vmatprep.subr.bf16.mxu0 0
        %821 = vmatpush1.bf16.msra.mxu0 0
        %822 = vmatprep.mubr.bf16.mxu0 0
        %823 = vmatmul.mubr.bf16.gmra.mrb[0].mxu0 %v725
        %v824 = vpop.f32.mrb[0].mxu0
        %v825 = vadd.f32 %v776, %v824
        %v826 = vpop.f32.mrb[0].mxu0
        %v827 = vpop.f32.mrb[0].mxu0
        %v828 = vpop.f32.mrb[0].mxu0
        %829 = vdwg.mxu0
        %v830 = vld [vmem:[#allocation2] sm:$0xf]
        %v831 = vld [vmem:[#allocation2 + $0x4] sm:$0xf]
        %v832 = vld [vmem:[#allocation2 + $0x8] sm:$0xf]
        %v833 = vld [vmem:[#allocation2 + $0xc] sm:$0xf]
        %v834 = vld [vmem:[#allocation5] sm:$0x1]
        %v836 = vlaneseq
        %v837 = vshrl.u32 %v836, 7
        %v838 = vsub.s32 0, %v837
        %v839 = vrot.slane %v834, %v838
        %v845 = vunpack.c.l.b16 %v830
        %v846 = vunpack.c.l.b16 %v831
        %v847 = vunpack.c.l.b16 %v832
        %v848 = vunpack.c.l.b16 %v833
        %v849 = vpack.c.b16 %v846, %v845
        %v850 = vpack.c.b16 %v848, %v847
        %853 = vmatprep.subr.bf16.mxu0 0
        %854 = vmatpush1.bf16.msra.mxu0 %v849
        %855 = vmatprep.subr.bf16.mxu0 0
        %856 = vmatpush1.bf16.msra.mxu0 %v850
        %857 = vmatprep.subr.bf16.mxu0 0
        %858 = vmatpush1.bf16.msra.mxu0 0
        %859 = vmatprep.subr.bf16.mxu0 0
        %860 = vmatpush1.bf16.msra.mxu0 0
        %861 = vmatprep.subr.bf16.mxu0 0
        %862 = vmatpush1.bf16.msra.mxu0 0
        %863 = vmatprep.subr.bf16.mxu0 0
        %864 = vmatpush1.bf16.msra.mxu0 0
        %865 = vmatprep.subr.bf16.mxu0 0
        %866 = vmatpush1.bf16.msra.mxu0 0
        %867 = vmatprep.subr.bf16.mxu0 0
        %868 = vmatpush1.bf16.msra.mxu0 0
        %869 = vmatprep.subr.bf16.mxu0 0
        %870 = vmatpush1.bf16.msra.mxu0 0
        %871 = vmatprep.subr.bf16.mxu0 0
        %872 = vmatpush1.bf16.msra.mxu0 0
        %873 = vmatprep.subr.bf16.mxu0 0
        %874 = vmatpush1.bf16.msra.mxu0 0
        %875 = vmatprep.subr.bf16.mxu0 0
        %876 = vmatpush1.bf16.msra.mxu0 0
        %877 = vmatprep.subr.bf16.mxu0 0
        %878 = vmatpush1.bf16.msra.mxu0 0
        %879 = vmatprep.subr.bf16.mxu0 0
        %880 = vmatpush1.bf16.msra.mxu0 0
        %881 = vmatprep.subr.bf16.mxu0 0
        %882 = vmatpush1.bf16.msra.mxu0 0
        %883 = vmatprep.subr.bf16.mxu0 0
        %884 = vmatpush1.bf16.msra.mxu0 0
        %885 = vmatprep.mubr.bf16.mxu0 0
        %886 = vmatmul.mubr.bf16.gmra.mrb[0].mxu0 %v725
        %v887 = vpop.f32.mrb[0].mxu0
        %v888 = vadd.f32 %v839, %v887
        %v889 = vpop.f32.mrb[0].mxu0
        %v890 = vpop.f32.mrb[0].mxu0
        %v891 = vpop.f32.mrb[0].mxu0
        %892 = vdwg.mxu0
        %894 = vrot.lane.b32.xlu0 %v762, 120
        %v895 = vpop.permute.xlu0 %894
        %897 = vrot.lane.b32.xlu0 %v762, 112
        %v898 = vpop.permute.xlu0 %897
        %900 = vrot.lane.b32.xlu0 %v762, 104
        %v901 = vpop.permute.xlu0 %900
        %v903 = vcombine.low %v762, %v898
        %v904 = vcombine.high %v762, %v898
        %v906 = vunpack.c.l.s4 1983009808
        %v907 = vunpack.c.0.s8 %v906
        %v908 = vlaneseq
        %v909 = vshrl.u32 %v908, 7
        %v910 = vsub.s32 %v907, %v909
        %v911 = vrot.slane %v903, %v910
        %v913 = vunpack.c.l.s4 1983009808
        %v914 = vunpack.c.0.s8 %v913
        %v915 = vlaneseq
        %v916 = vshrl.u32 %v915, 7
        %v917 = vsub.s32 %v914, %v916
        %v918 = vrot.slane %v904, %v917
        %v919 = vcombine.low %v895, %v901
        %v920 = vcombine.high %v895, %v901
        %v922 = vunpack.c.l.s4 1983009808
        %v923 = vunpack.c.0.s8 %v922
        %v924 = vlaneseq
        %v925 = vshrl.u32 %v924, 7
        %v926 = vsub.s32 %v923, %v925
        %v927 = vrot.slane %v919, %v926
        %v929 = vunpack.c.l.s4 1983009808
        %v930 = vunpack.c.0.s8 %v929
        %v931 = vlaneseq
        %v932 = vshrl.u32 %v931, 7
        %v933 = vsub.s32 %v930, %v932
        %v934 = vrot.slane %v920, %v933
        %v935 = vcombine.low %v911, %v927
        %v936 = vcombine.high %v911, %v927
        %v938 = vunpack.c.l.s4 1934713408
        %v939 = vunpack.c.0.s8 %v938
        %v940 = vlaneseq
        %v941 = vshrl.u32 %v940, 7
        %v942 = vsub.s32 %v939, %v941
        %v943 = vrot.slane %v935, %v942
        %v945 = vunpack.c.l.s4 1934713408
        %v946 = vunpack.c.0.s8 %v945
        %v947 = vlaneseq
        %v948 = vshrl.u32 %v947, 7
        %v949 = vsub.s32 %v946, %v948
        %v950 = vrot.slane %v936, %v949
        %v951 = vcombine.low %v918, %v934
        %v952 = vcombine.high %v918, %v934
        %v954 = vunpack.c.l.s4 1934713408
        %v955 = vunpack.c.0.s8 %v954
        %v956 = vlaneseq
        %v957 = vshrl.u32 %v956, 7
        %v958 = vsub.s32 %v955, %v957
        %v959 = vrot.slane %v951, %v958
        %v961 = vunpack.c.l.s4 1934713408
        %v962 = vunpack.c.0.s8 %v961
        %v963 = vlaneseq
        %v964 = vshrl.u32 %v963, 7
        %v965 = vsub.s32 %v962, %v964
        %v966 = vrot.slane %v952, %v965
        %v967 = vcombine.high %v943, 0.0
        %v968 = vcombine.high %v950, 0.0
        %v969 = vcombine.high %v959, 0.0
        %v970 = vcombine.high %v966, 0.0
        %v971 = vcombine.low %v943, %v950
        %v973 = vunpack.c.l.s4 1983009808
        %v974 = vunpack.c.0.s8 %v973
        %v975 = vlaneseq
        %v976 = vshrl.u32 %v975, 7
        %v977 = vsub.s32 %v974, %v976
        %v978 = vrot.slane %v971, %v977
        %v979 = vcombine.low %v967, %v968
        %v981 = vunpack.c.l.s4 1983009808
        %v982 = vunpack.c.0.s8 %v981
        %v983 = vlaneseq
        %v984 = vshrl.u32 %v983, 7
        %v985 = vsub.s32 %v982, %v984
        %v986 = vrot.slane %v979, %v985
        %v987 = vcombine.low %v959, %v966
        %v989 = vunpack.c.l.s4 1983009808
        %v990 = vunpack.c.0.s8 %v989
        %v991 = vlaneseq
        %v992 = vshrl.u32 %v991, 7
        %v993 = vsub.s32 %v990, %v992
        %v994 = vrot.slane %v987, %v993
        %v995 = vcombine.low %v969, %v970
        %v997 = vunpack.c.l.s4 1983009808
        %v998 = vunpack.c.0.s8 %v997
        %v999 = vlaneseq
        %v1000 = vshrl.u32 %v999, 7
        %v1001 = vsub.s32 %v998, %v1000
        %v1002 = vrot.slane %v995, %v1001
        %v1003 = vcombine.low %v978, %v986
        %v1004 = vcombine.high %v978, %v986
        %v1006 = vunpack.c.l.s4 1934713408
        %v1007 = vunpack.c.0.s8 %v1006
        %v1008 = vlaneseq
        %v1009 = vshrl.u32 %v1008, 7
        %v1010 = vsub.s32 %v1007, %v1009
        %v1011 = vrot.slane %v1003, %v1010
        %v1013 = vunpack.c.l.s4 1934713408
        %v1014 = vunpack.c.0.s8 %v1013
        %v1015 = vlaneseq
        %v1016 = vshrl.u32 %v1015, 7
        %v1017 = vsub.s32 %v1014, %v1016
        %v1018 = vrot.slane %v1004, %v1017
        %v1019 = vcombine.low %v994, %v1002
        %v1020 = vcombine.high %v994, %v1002
        %v1022 = vunpack.c.l.s4 1934713408
        %v1023 = vunpack.c.0.s8 %v1022
        %v1024 = vlaneseq
        %v1025 = vshrl.u32 %v1024, 7
        %v1026 = vsub.s32 %v1023, %v1025
        %v1027 = vrot.slane %v1019, %v1026
        %v1029 = vunpack.c.l.s4 1934713408
        %v1030 = vunpack.c.0.s8 %v1029
        %v1031 = vlaneseq
        %v1032 = vshrl.u32 %v1031, 7
        %v1033 = vsub.s32 %v1030, %v1032
        %v1034 = vrot.slane %v1020, %v1033
        %v1035 = vcombine.low %v1011, %v1027
        %v1036 = vcombine.high %v1011, %v1027
        %v1037 = vcombine.low %v1018, %v1034
        %v1038 = vcombine.high %v1018, %v1034
        %v1039 = vpack.c.bf16 %v1035, %v1035
        %v1040 = vpack.c.bf16 %v1036, %v1036
        %v1041 = vpack.c.bf16 %v1037, %v1037
        %v1042 = vpack.c.bf16 %v1038, %v1038
        %1044 = vrot.lane.b32.xlu0 %v825, 120
        %v1045 = vpop.permute.xlu0 %1044
        %1047 = vrot.lane.b32.xlu0 %v825, 112
        %v1048 = vpop.permute.xlu0 %1047
        %1050 = vrot.lane.b32.xlu0 %v825, 104
        %v1051 = vpop.permute.xlu0 %1050
        %v1053 = vcombine.low %v825, %v1048
        %v1054 = vcombine.high %v825, %v1048
        %v1056 = vunpack.c.l.s4 1983009808
        %v1057 = vunpack.c.0.s8 %v1056
        %v1058 = vlaneseq
        %v1059 = vshrl.u32 %v1058, 7
        %v1060 = vsub.s32 %v1057, %v1059
        %v1061 = vrot.slane %v1053, %v1060
        %v1063 = vunpack.c.l.s4 1983009808
        %v1064 = vunpack.c.0.s8 %v1063
        %v1065 = vlaneseq
        %v1066 = vshrl.u32 %v1065, 7
        %v1067 = vsub.s32 %v1064, %v1066
        %v1068 = vrot.slane %v1054, %v1067
        %v1069 = vcombine.low %v1045, %v1051
        %v1070 = vcombine.high %v1045, %v1051
        %v1072 = vunpack.c.l.s4 1983009808
        %v1073 = vunpack.c.0.s8 %v1072
        %v1074 = vlaneseq
        %v1075 = vshrl.u32 %v1074, 7
        %v1076 = vsub.s32 %v1073, %v1075
        %v1077 = vrot.slane %v1069, %v1076
        %v1079 = vunpack.c.l.s4 1983009808
        %v1080 = vunpack.c.0.s8 %v1079
        %v1081 = vlaneseq
        %v1082 = vshrl.u32 %v1081, 7
        %v1083 = vsub.s32 %v1080, %v1082
        %v1084 = vrot.slane %v1070, %v1083
        %v1085 = vcombine.low %v1061, %v1077
        %v1086 = vcombine.high %v1061, %v1077
        %v1088 = vunpack.c.l.s4 1934713408
        %v1089 = vunpack.c.0.s8 %v1088
        %v1090 = vlaneseq
        %v1091 = vshrl.u32 %v1090, 7
        %v1092 = vsub.s32 %v1089, %v1091
        %v1093 = vrot.slane %v1085, %v1092
        %v1095 = vunpack.c.l.s4 1934713408
        %v1096 = vunpack.c.0.s8 %v1095
        %v1097 = vlaneseq
        %v1098 = vshrl.u32 %v1097, 7
        %v1099 = vsub.s32 %v1096, %v1098
        %v1100 = vrot.slane %v1086, %v1099
        %v1101 = vcombine.low %v1068, %v1084
        %v1102 = vcombine.high %v1068, %v1084
        %v1104 = vunpack.c.l.s4 1934713408
        %v1105 = vunpack.c.0.s8 %v1104
        %v1106 = vlaneseq
        %v1107 = vshrl.u32 %v1106, 7
        %v1108 = vsub.s32 %v1105, %v1107
        %v1109 = vrot.slane %v1101, %v1108
        %v1111 = vunpack.c.l.s4 1934713408
        %v1112 = vunpack.c.0.s8 %v1111
        %v1113 = vlaneseq
        %v1114 = vshrl.u32 %v1113, 7
        %v1115 = vsub.s32 %v1112, %v1114
        %v1116 = vrot.slane %v1102, %v1115
        %v1117 = vcombine.high %v1093, 0.0
        %v1118 = vcombine.high %v1100, 0.0
        %v1119 = vcombine.high %v1109, 0.0
        %v1120 = vcombine.high %v1116, 0.0
        %v1121 = vcombine.low %v1093, %v1100
        %v1123 = vunpack.c.l.s4 1983009808
        %v1124 = vunpack.c.0.s8 %v1123
        %v1125 = vlaneseq
        %v1126 = vshrl.u32 %v1125, 7
        %v1127 = vsub.s32 %v1124, %v1126
        %v1128 = vrot.slane %v1121, %v1127
        %v1129 = vcombine.low %v1117, %v1118
        %v1131 = vunpack.c.l.s4 1983009808
        %v1132 = vunpack.c.0.s8 %v1131
        %v1133 = vlaneseq
        %v1134 = vshrl.u32 %v1133, 7
        %v1135 = vsub.s32 %v1132, %v1134
        %v1136 = vrot.slane %v1129, %v1135
        %v1137 = vcombine.low %v1109, %v1116
        %v1139 = vunpack.c.l.s4 1983009808
        %v1140 = vunpack.c.0.s8 %v1139
        %v1141 = vlaneseq
        %v1142 = vshrl.u32 %v1141, 7
        %v1143 = vsub.s32 %v1140, %v1142
        %v1144 = vrot.slane %v1137, %v1143
        %v1145 = vcombine.low %v1119, %v1120
        %v1147 = vunpack.c.l.s4 1983009808
        %v1148 = vunpack.c.0.s8 %v1147
        %v1149 = vlaneseq
        %v1150 = vshrl.u32 %v1149, 7
        %v1151 = vsub.s32 %v1148, %v1150
        %v1152 = vrot.slane %v1145, %v1151
        %v1153 = vcombine.low %v1128, %v1136
        %v1154 = vcombine.high %v1128, %v1136
        %v1156 = vunpack.c.l.s4 1934713408
        %v1157 = vunpack.c.0.s8 %v1156
        %v1158 = vlaneseq
        %v1159 = vshrl.u32 %v1158, 7
        %v1160 = vsub.s32 %v1157, %v1159
        %v1161 = vrot.slane %v1153, %v1160
        %v1163 = vunpack.c.l.s4 1934713408
        %v1164 = vunpack.c.0.s8 %v1163
        %v1165 = vlaneseq
        %v1166 = vshrl.u32 %v1165, 7
        %v1167 = vsub.s32 %v1164, %v1166
        %v1168 = vrot.slane %v1154, %v1167
        %v1169 = vcombine.low %v1144, %v1152
        %v1170 = vcombine.high %v1144, %v1152
        %v1172 = vunpack.c.l.s4 1934713408
        %v1173 = vunpack.c.0.s8 %v1172
        %v1174 = vlaneseq
        %v1175 = vshrl.u32 %v1174, 7
        %v1176 = vsub.s32 %v1173, %v1175
        %v1177 = vrot.slane %v1169, %v1176
        %v1179 = vunpack.c.l.s4 1934713408
        %v1180 = vunpack.c.0.s8 %v1179
        %v1181 = vlaneseq
        %v1182 = vshrl.u32 %v1181, 7
        %v1183 = vsub.s32 %v1180, %v1182
        %v1184 = vrot.slane %v1170, %v1183
        %v1185 = vcombine.low %v1161, %v1177
        %v1186 = vcombine.high %v1161, %v1177
        %v1187 = vcombine.low %v1168, %v1184
        %v1188 = vcombine.high %v1168, %v1184
        %v1189 = vpack.c.bf16 %v1185, %v1185
        %v1190 = vpack.c.bf16 %v1186, %v1186
        %v1191 = vpack.c.bf16 %v1187, %v1187
        %v1192 = vpack.c.bf16 %v1188, %v1188
        %1194 = vrot.lane.b32.xlu0 %v888, 120
        %v1195 = vpop.permute.xlu0 %1194
        %1197 = vrot.lane.b32.xlu0 %v888, 112
        %v1198 = vpop.permute.xlu0 %1197
        %1200 = vrot.lane.b32.xlu0 %v888, 104
        %v1201 = vpop.permute.xlu0 %1200
        %v1203 = vcombine.low %v888, %v1198
        %v1204 = vcombine.high %v888, %v1198
        %v1206 = vunpack.c.l.s4 1983009808
        %v1207 = vunpack.c.0.s8 %v1206
        %v1208 = vlaneseq
        %v1209 = vshrl.u32 %v1208, 7
        %v1210 = vsub.s32 %v1207, %v1209
        %v1211 = vrot.slane %v1203, %v1210
        %v1213 = vunpack.c.l.s4 1983009808
        %v1214 = vunpack.c.0.s8 %v1213
        %v1215 = vlaneseq
        %v1216 = vshrl.u32 %v1215, 7
        %v1217 = vsub.s32 %v1214, %v1216
        %v1218 = vrot.slane %v1204, %v1217
        %v1219 = vcombine.low %v1195, %v1201
        %v1220 = vcombine.high %v1195, %v1201
        %v1222 = vunpack.c.l.s4 1983009808
        %v1223 = vunpack.c.0.s8 %v1222
        %v1224 = vlaneseq
        %v1225 = vshrl.u32 %v1224, 7
        %v1226 = vsub.s32 %v1223, %v1225
        %v1227 = vrot.slane %v1219, %v1226
        %v1229 = vunpack.c.l.s4 1983009808
        %v1230 = vunpack.c.0.s8 %v1229
        %v1231 = vlaneseq
        %v1232 = vshrl.u32 %v1231, 7
        %v1233 = vsub.s32 %v1230, %v1232
        %v1234 = vrot.slane %v1220, %v1233
        %v1235 = vcombine.low %v1211, %v1227
        %v1236 = vcombine.high %v1211, %v1227
        %v1238 = vunpack.c.l.s4 1934713408
        %v1239 = vunpack.c.0.s8 %v1238
        %v1240 = vlaneseq
        %v1241 = vshrl.u32 %v1240, 7
        %v1242 = vsub.s32 %v1239, %v1241
        %v1243 = vrot.slane %v1235, %v1242
        %v1245 = vunpack.c.l.s4 1934713408
        %v1246 = vunpack.c.0.s8 %v1245
        %v1247 = vlaneseq
        %v1248 = vshrl.u32 %v1247, 7
        %v1249 = vsub.s32 %v1246, %v1248
        %v1250 = vrot.slane %v1236, %v1249
        %v1251 = vcombine.low %v1218, %v1234
        %v1252 = vcombine.high %v1218, %v1234
        %v1254 = vunpack.c.l.s4 1934713408
        %v1255 = vunpack.c.0.s8 %v1254
        %v1256 = vlaneseq
        %v1257 = vshrl.u32 %v1256, 7
        %v1258 = vsub.s32 %v1255, %v1257
        %v1259 = vrot.slane %v1251, %v1258
        %v1261 = vunpack.c.l.s4 1934713408
        %v1262 = vunpack.c.0.s8 %v1261
        %v1263 = vlaneseq
        %v1264 = vshrl.u32 %v1263, 7
        %v1265 = vsub.s32 %v1262, %v1264
        %v1266 = vrot.slane %v1252, %v1265
        %v1267 = vcombine.high %v1243, 0.0
        %v1268 = vcombine.high %v1250, 0.0
        %v1269 = vcombine.high %v1259, 0.0
        %v1270 = vcombine.high %v1266, 0.0
        %v1271 = vcombine.low %v1243, %v1250
        %v1273 = vunpack.c.l.s4 1983009808
        %v1274 = vunpack.c.0.s8 %v1273
        %v1275 = vlaneseq
        %v1276 = vshrl.u32 %v1275, 7
        %v1277 = vsub.s32 %v1274, %v1276
        %v1278 = vrot.slane %v1271, %v1277
        %v1279 = vcombine.low %v1267, %v1268
        %v1281 = vunpack.c.l.s4 1983009808
        %v1282 = vunpack.c.0.s8 %v1281
        %v1283 = vlaneseq
        %v1284 = vshrl.u32 %v1283, 7
        %v1285 = vsub.s32 %v1282, %v1284
        %v1286 = vrot.slane %v1279, %v1285
        %v1287 = vcombine.low %v1259, %v1266
        %v1289 = vunpack.c.l.s4 1983009808
        %v1290 = vunpack.c.0.s8 %v1289
        %v1291 = vlaneseq
        %v1292 = vshrl.u32 %v1291, 7
        %v1293 = vsub.s32 %v1290, %v1292
        %v1294 = vrot.slane %v1287, %v1293
        %v1295 = vcombine.low %v1269, %v1270
        %v1297 = vunpack.c.l.s4 1983009808
        %v1298 = vunpack.c.0.s8 %v1297
        %v1299 = vlaneseq
        %v1300 = vshrl.u32 %v1299, 7
        %v1301 = vsub.s32 %v1298, %v1300
        %v1302 = vrot.slane %v1295, %v1301
        %v1303 = vcombine.low %v1278, %v1286
        %v1304 = vcombine.high %v1278, %v1286
        %v1306 = vunpack.c.l.s4 1934713408
        %v1307 = vunpack.c.0.s8 %v1306
        %v1308 = vlaneseq
        %v1309 = vshrl.u32 %v1308, 7
        %v1310 = vsub.s32 %v1307, %v1309
        %v1311 = vrot.slane %v1303, %v1310
        %v1313 = vunpack.c.l.s4 1934713408
        %v1314 = vunpack.c.0.s8 %v1313
        %v1315 = vlaneseq
        %v1316 = vshrl.u32 %v1315, 7
        %v1317 = vsub.s32 %v1314, %v1316
        %v1318 = vrot.slane %v1304, %v1317
        %v1319 = vcombine.low %v1294, %v1302
        %v1320 = vcombine.high %v1294, %v1302
        %v1322 = vunpack.c.l.s4 1934713408
        %v1323 = vunpack.c.0.s8 %v1322
        %v1324 = vlaneseq
        %v1325 = vshrl.u32 %v1324, 7
        %v1326 = vsub.s32 %v1323, %v1325
        %v1327 = vrot.slane %v1319, %v1326
        %v1329 = vunpack.c.l.s4 1934713408
        %v1330 = vunpack.c.0.s8 %v1329
        %v1331 = vlaneseq
        %v1332 = vshrl.u32 %v1331, 7
        %v1333 = vsub.s32 %v1330, %v1332
        %v1334 = vrot.slane %v1320, %v1333
        %v1335 = vcombine.low %v1311, %v1327
        %v1336 = vcombine.high %v1311, %v1327
        %v1337 = vcombine.low %v1318, %v1334
        %v1338 = vcombine.high %v1318, %v1334
        %v1339 = vpack.c.bf16 %v1335, %v1335
        %v1340 = vpack.c.bf16 %v1336, %v1336
        %v1341 = vpack.c.bf16 %v1337, %v1337
        %v1342 = vpack.c.bf16 %v1338, %v1338
        %vm1343 = vcmask 64512
        %v1345 = vsel %vm1343, %v1039, 0
        %v1348 = vsel %vm1343, %v1189, 0
        %1350 = vmatprep.subr.bf16.mxu0 0
        %1351 = vmatpush1.bf16.xpose.msra.mxu0 %v1348
        %1352 = vmatprep.subr.bf16.mxu0 0
        %1353 = vmatpush1.bf16.xpose.msra.mxu0 0
        %1354 = vmatprep.subr.bf16.mxu0 0
        %1355 = vmatpush1.bf16.xpose.msra.mxu0 0
        %1356 = vmatprep.subr.bf16.mxu0 0
        %1357 = vmatpush1.bf16.xpose.msra.mxu0 0
        %1358 = vmatprep.subr.bf16.mxu0 0
        %1359 = vmatpush1.bf16.xpose.msra.mxu0 0
        %1360 = vmatprep.subr.bf16.mxu0 0
        %1361 = vmatpush1.bf16.xpose.msra.mxu0 0
        %1362 = vmatprep.subr.bf16.mxu0 0
        %1363 = vmatpush1.bf16.xpose.msra.mxu0 0
        %1364 = vmatprep.subr.bf16.mxu0 0
        %1365 = vmatpush1.bf16.xpose.msra.mxu0 0
        %1366 = vmatprep.subr.bf16.mxu0 0
        %1367 = vmatpush1.bf16.xpose.msra.mxu0 0
        %1368 = vmatprep.subr.bf16.mxu0 0
        %1369 = vmatpush1.bf16.xpose.msra.mxu0 0
        %1370 = vmatprep.subr.bf16.mxu0 0
        %1371 = vmatpush1.bf16.xpose.msra.mxu0 0
        %1372 = vmatprep.subr.bf16.mxu0 0
        %1373 = vmatpush1.bf16.xpose.msra.mxu0 0
        %1374 = vmatprep.subr.bf16.mxu0 0
        %1375 = vmatpush1.bf16.xpose.msra.mxu0 0
        %1376 = vmatprep.subr.bf16.mxu0 0
        %1377 = vmatpush1.bf16.xpose.msra.mxu0 0
        %1378 = vmatprep.subr.bf16.mxu0 0
        %1379 = vmatpush1.bf16.xpose.msra.mxu0 0
        %1380 = vmatprep.subr.bf16.mxu0 0
        %1381 = vmatpush1.bf16.xpose.msra.mxu0 0
        %1382 = vmatprep.mubr.bf16.mxu0 0
        %1383 = vmatmul.mubr.bf16.gmra.mrb[0].mxu0 %v1345
        %v1384 = vpop.f32.mrb[0].mxu0
        %v1385 = vadd.f32 0.0, %v1384
        %v1386 = vpop.f32.mrb[0].mxu0
        %v1387 = vpop.f32.mrb[0].mxu0
        %v1388 = vpop.f32.mrb[0].mxu0
        %1389 = vdwg.mxu0
        %v1391 = vsel %vm1343, %v1040, 0
        %v1394 = vsel %vm1343, %v1190, 0
        %1396 = vmatprep.subr.bf16.mxu0 0
        %1397 = vmatpush1.bf16.xpose.msra.mxu0 %v1394
        %1398 = vmatprep.subr.bf16.mxu0 0
        %1399 = vmatpush1.bf16.xpose.msra.mxu0 0
        %1400 = vmatprep.subr.bf16.mxu0 0
        %1401 = vmatpush1.bf16.xpose.msra.mxu0 0
        %1402 = vmatprep.subr.bf16.mxu0 0
        %1403 = vmatpush1.bf16.xpose.msra.mxu0 0
        %1404 = vmatprep.subr.bf16.mxu0 0
        %1405 = vmatpush1.bf16.xpose.msra.mxu0 0
        %1406 = vmatprep.subr.bf16.mxu0 0
        %1407 = vmatpush1.bf16.xpose.msra.mxu0 0
        %1408 = vmatprep.subr.bf16.mxu0 0
        %1409 = vmatpush1.bf16.xpose.msra.mxu0 0
        %1410 = vmatprep.subr.bf16.mxu0 0
        %1411 = vmatpush1.bf16.xpose.msra.mxu0 0
        %1412 = vmatprep.subr.bf16.mxu0 0
        %1413 = vmatpush1.bf16.xpose.msra.mxu0 0
        %1414 = vmatprep.subr.bf16.mxu0 0
        %1415 = vmatpush1.bf16.xpose.msra.mxu0 0
        %1416 = vmatprep.subr.bf16.mxu0 0
        %1417 = vmatpush1.bf16.xpose.msra.mxu0 0
        %1418 = vmatprep.subr.bf16.mxu0 0
        %1419 = vmatpush1.bf16.xpose.msra.mxu0 0
        %1420 = vmatprep.subr.bf16.mxu0 0
        %1421 = vmatpush1.bf16.xpose.msra.mxu0 0
        %1422 = vmatprep.subr.bf16.mxu0 0
        %1423 = vmatpush1.bf16.xpose.msra.mxu0 0
        %1424 = vmatprep.subr.bf16.mxu0 0
        %1425 = vmatpush1.bf16.xpose.msra.mxu0 0
        %1426 = vmatprep.subr.bf16.mxu0 0
        %1427 = vmatpush1.bf16.xpose.msra.mxu0 0
        %1428 = vmatprep.mubr.bf16.mxu0 0
        %1429 = vmatmul.mubr.bf16.gmra.mrb[0].mxu0 %v1391
        %v1430 = vpop.f32.mrb[0].mxu0
        %v1431 = vadd.f32 0.0, %v1430
        %v1432 = vpop.f32.mrb[0].mxu0
        %v1433 = vpop.f32.mrb[0].mxu0
        %v1434 = vpop.f32.mrb[0].mxu0
        %1435 = vdwg.mxu0
        %v1437 = vsel %vm1343, %v1041, 0
        %v1440 = vsel %vm1343, %v1191, 0
        %1442 = vmatprep.subr.bf16.mxu0 0
        %1443 = vmatpush1.bf16.xpose.msra.mxu0 %v1440
        %1444 = vmatprep.subr.bf16.mxu0 0
        %1445 = vmatpush1.bf16.xpose.msra.mxu0 0
        %1446 = vmatprep.subr.bf16.mxu0 0
        %1447 = vmatpush1.bf16.xpose.msra.mxu0 0
        %1448 = vmatprep.subr.bf16.mxu0 0
        %1449 = vmatpush1.bf16.xpose.msra.mxu0 0
        %1450 = vmatprep.subr.bf16.mxu0 0
        %1451 = vmatpush1.bf16.xpose.msra.mxu0 0
        %1452 = vmatprep.subr.bf16.mxu0 0
        %1453 = vmatpush1.bf16.xpose.msra.mxu0 0
        %1454 = vmatprep.subr.bf16.mxu0 0
        %1455 = vmatpush1.bf16.xpose.msra.mxu0 0
        %1456 = vmatprep.subr.bf16.mxu0 0
        %1457 = vmatpush1.bf16.xpose.msra.mxu0 0
        %1458 = vmatprep.subr.bf16.mxu0 0
        %1459 = vmatpush1.bf16.xpose.msra.mxu0 0
        %1460 = vmatprep.subr.bf16.mxu0 0
        %1461 = vmatpush1.bf16.xpose.msra.mxu0 0
        %1462 = vmatprep.subr.bf16.mxu0 0
        %1463 = vmatpush1.bf16.xpose.msra.mxu0 0
        %1464 = vmatprep.subr.bf16.mxu0 0
        %1465 = vmatpush1.bf16.xpose.msra.mxu0 0
        %1466 = vmatprep.subr.bf16.mxu0 0
        %1467 = vmatpush1.bf16.xpose.msra.mxu0 0
        %1468 = vmatprep.subr.bf16.mxu0 0
        %1469 = vmatpush1.bf16.xpose.msra.mxu0 0
        %1470 = vmatprep.subr.bf16.mxu0 0
        %1471 = vmatpush1.bf16.xpose.msra.mxu0 0
        %1472 = vmatprep.subr.bf16.mxu0 0
        %1473 = vmatpush1.bf16.xpose.msra.mxu0 0
        %1474 = vmatprep.mubr.bf16.mxu0 0
        %1475 = vmatmul.mubr.bf16.gmra.mrb[0].mxu0 %v1437
        %v1476 = vpop.f32.mrb[0].mxu0
        %v1477 = vadd.f32 0.0, %v1476
        %v1478 = vpop.f32.mrb[0].mxu0
        %v1479 = vpop.f32.mrb[0].mxu0
        %v1480 = vpop.f32.mrb[0].mxu0
        %1481 = vdwg.mxu0
        %v1483 = vsel %vm1343, %v1042, 0
        %v1486 = vsel %vm1343, %v1192, 0
        %1488 = vmatprep.subr.bf16.mxu0 0
        %1489 = vmatpush1.bf16.xpose.msra.mxu0 %v1486
        %1490 = vmatprep.subr.bf16.mxu0 0
        %1491 = vmatpush1.bf16.xpose.msra.mxu0 0
        %1492 = vmatprep.subr.bf16.mxu0 0
        %1493 = vmatpush1.bf16.xpose.msra.mxu0 0
        %1494 = vmatprep.subr.bf16.mxu0 0
        %1495 = vmatpush1.bf16.xpose.msra.mxu0 0
        %1496 = vmatprep.subr.bf16.mxu0 0
        %1497 = vmatpush1.bf16.xpose.msra.mxu0 0
        %1498 = vmatprep.subr.bf16.mxu0 0
        %1499 = vmatpush1.bf16.xpose.msra.mxu0 0
        %1500 = vmatprep.subr.bf16.mxu0 0
        %1501 = vmatpush1.bf16.xpose.msra.mxu0 0
        %1502 = vmatprep.subr.bf16.mxu0 0
        %1503 = vmatpush1.bf16.xpose.msra.mxu0 0
        %1504 = vmatprep.subr.bf16.mxu0 0
        %1505 = vmatpush1.bf16.xpose.msra.mxu0 0
        %1506 = vmatprep.subr.bf16.mxu0 0
        %1507 = vmatpush1.bf16.xpose.msra.mxu0 0
        %1508 = vmatprep.subr.bf16.mxu0 0
        %1509 = vmatpush1.bf16.xpose.msra.mxu0 0
        %1510 = vmatprep.subr.bf16.mxu0 0
        %1511 = vmatpush1.bf16.xpose.msra.mxu0 0
        %1512 = vmatprep.subr.bf16.mxu0 0
        %1513 = vmatpush1.bf16.xpose.msra.mxu0 0
        %1514 = vmatprep.subr.bf16.mxu0 0
        %1515 = vmatpush1.bf16.xpose.msra.mxu0 0
        %1516 = vmatprep.subr.bf16.mxu0 0
        %1517 = vmatpush1.bf16.xpose.msra.mxu0 0
        %1518 = vmatprep.subr.bf16.mxu0 0
        %1519 = vmatpush1.bf16.xpose.msra.mxu0 0
        %1520 = vmatprep.mubr.bf16.mxu0 0
        %1521 = vmatmul.mubr.bf16.gmra.mrb[0].mxu0 %v1483
        %v1522 = vpop.f32.mrb[0].mxu0
        %v1523 = vadd.f32 0.0, %v1522
        %v1524 = vpop.f32.mrb[0].mxu0
        %v1525 = vpop.f32.mrb[0].mxu0
        %v1526 = vpop.f32.mrb[0].mxu0
        %1527 = vdwg.mxu0
        %v1528 = vsel %vm1343, %v1385, -inf
        %1529 = vmax.xlane.f32.xlu0 %v1528
        %v1530 = vpop.xlane.xlu0 %1529
        %v1531 = vsel %vm1343, %v1431, -inf
        %1532 = vmax.xlane.f32.xlu0 %v1531
        %v1533 = vpop.xlane.xlu0 %1532
        %v1534 = vsel %vm1343, %v1477, -inf
        %1535 = vmax.xlane.f32.xlu0 %v1534
        %v1536 = vpop.xlane.xlu0 %1535
        %v1537 = vsel %vm1343, %v1523, -inf
        %1538 = vmax.xlane.f32.xlu0 %v1537
        %v1539 = vpop.xlane.xlu0 %1538
        %v1540 = vsub.f32 %v1385, %v1530
        %v1541 = vsub.f32 %v1431, %v1533
        %v1542 = vsub.f32 %v1477, %v1536
        %v1543 = vsub.f32 %v1523, %v1539
        %v1544 = vmul.f32 %v1540, 1.442695
        %v1545 = vpow.pop %v1544
        %v1546 = vmul.f32 %v1541, 1.442695
        %v1547 = vpow.pop %v1546
        %v1548 = vmul.f32 %v1542, 1.442695
        %v1549 = vpow.pop %v1548
        %v1550 = vmul.f32 %v1543, 1.442695
        %v1551 = vpow.pop %v1550
        %v1552 = vsel %vm1343, %v1545, 0.0
        %1553 = vadd.xlane.f32.xlu0 %v1552
        %v1554 = vpop.xlane.xlu0 %1553
        %v1555 = vsel %vm1343, %v1547, 0.0
        %1556 = vadd.xlane.f32.xlu0 %v1555
        %v1557 = vpop.xlane.xlu0 %1556
        %v1558 = vsel %vm1343, %v1549, 0.0
        %1559 = vadd.xlane.f32.xlu0 %v1558
        %v1560 = vpop.xlane.xlu0 %1559
        %v1561 = vsel %vm1343, %v1551, 0.0
        %1562 = vadd.xlane.f32.xlu0 %v1561
        %v1563 = vpop.xlane.xlu0 %1562
        %v1564 = vrcp.pop %v1554
        %v1565 = vrcp.pop %v1557
        %v1566 = vrcp.pop %v1560
        %v1567 = vrcp.pop %v1563
        %v1568 = vmul.f32 %v1545, %v1564
        %v1569 = vmul.f32 %v1547, %v1565
        %v1570 = vmul.f32 %v1549, %v1566
        %v1571 = vmul.f32 %v1551, %v1567
        %v1572 = vpack.c.bf16 %v1568, %v1568
        %v1573 = vpack.c.bf16 %v1569, %v1569
        %v1574 = vpack.c.bf16 %v1570, %v1570
        %v1575 = vpack.c.bf16 %v1571, %v1571
        %v1577 = vsel %vm1343, %v1572, 0
        %vm1579 = vcmask 1043456
        %v1581 = vsel %vm1579, %v1339, 0
        %1583 = vmatprep.subr.bf16.mxu0 0
        %1584 = vmatpush1.bf16.msra.mxu0 %v1581
        %1585 = vmatprep.subr.bf16.mxu0 0
        %1586 = vmatpush1.bf16.msra.mxu0 0
        %1587 = vmatprep.subr.bf16.mxu0 0
        %1588 = vmatpush1.bf16.msra.mxu0 0
        %1589 = vmatprep.subr.bf16.mxu0 0
        %1590 = vmatpush1.bf16.msra.mxu0 0
        %1591 = vmatprep.subr.bf16.mxu0 0
        %1592 = vmatpush1.bf16.msra.mxu0 0
        %1593 = vmatprep.subr.bf16.mxu0 0
        %1594 = vmatpush1.bf16.msra.mxu0 0
        %1595 = vmatprep.subr.bf16.mxu0 0
        %1596 = vmatpush1.bf16.msra.mxu0 0
        %1597 = vmatprep.subr.bf16.mxu0 0
        %1598 = vmatpush1.bf16.msra.mxu0 0
        %1599 = vmatprep.subr.bf16.mxu0 0
        %1600 = vmatpush1.bf16.msra.mxu0 0
        %1601 = vmatprep.subr.bf16.mxu0 0
        %1602 = vmatpush1.bf16.msra.mxu0 0
        %1603 = vmatprep.subr.bf16.mxu0 0
        %1604 = vmatpush1.bf16.msra.mxu0 0
        %1605 = vmatprep.subr.bf16.mxu0 0
        %1606 = vmatpush1.bf16.msra.mxu0 0
        %1607 = vmatprep.subr.bf16.mxu0 0
        %1608 = vmatpush1.bf16.msra.mxu0 0
        %1609 = vmatprep.subr.bf16.mxu0 0
        %1610 = vmatpush1.bf16.msra.mxu0 0
        %1611 = vmatprep.subr.bf16.mxu0 0
        %1612 = vmatpush1.bf16.msra.mxu0 0
        %1613 = vmatprep.subr.bf16.mxu0 0
        %1614 = vmatpush1.bf16.msra.mxu0 0
        %1615 = vmatprep.mubr.bf16.mxu0 0
        %1616 = vmatmul.mubr.bf16.gmra.mrb[0].mxu0 %v1577
        %v1617 = vpop.f32.mrb[0].mxu0
        %v1618 = vadd.f32 0.0, %v1617
        %v1619 = vpop.f32.mrb[0].mxu0
        %v1620 = vpop.f32.mrb[0].mxu0
        %v1621 = vpop.f32.mrb[0].mxu0
        %1622 = vdwg.mxu0
        %v1624 = vsel %vm1343, %v1573, 0
        %v1627 = vsel %vm1579, %v1340, 0
        %1629 = vmatprep.subr.bf16.mxu0 0
        %1630 = vmatpush1.bf16.msra.mxu0 %v1627
        %1631 = vmatprep.subr.bf16.mxu0 0
        %1632 = vmatpush1.bf16.msra.mxu0 0
        %1633 = vmatprep.subr.bf16.mxu0 0
        %1634 = vmatpush1.bf16.msra.mxu0 0
        %1635 = vmatprep.subr.bf16.mxu0 0
        %1636 = vmatpush1.bf16.msra.mxu0 0
        %1637 = vmatprep.subr.bf16.mxu0 0
        %1638 = vmatpush1.bf16.msra.mxu0 0
        %1639 = vmatprep.subr.bf16.mxu0 0
        %1640 = vmatpush1.bf16.msra.mxu0 0
        %1641 = vmatprep.subr.bf16.mxu0 0
        %1642 = vmatpush1.bf16.msra.mxu0 0
        %1643 = vmatprep.subr.bf16.mxu0 0
        %1644 = vmatpush1.bf16.msra.mxu0 0
        %1645 = vmatprep.subr.bf16.mxu0 0
        %1646 = vmatpush1.bf16.msra.mxu0 0
        %1647 = vmatprep.subr.bf16.mxu0 0
        %1648 = vmatpush1.bf16.msra.mxu0 0
        %1649 = vmatprep.subr.bf16.mxu0 0
        %1650 = vmatpush1.bf16.msra.mxu0 0
        %1651 = vmatprep.subr.bf16.mxu0 0
        %1652 = vmatpush1.bf16.msra.mxu0 0
        %1653 = vmatprep.subr.bf16.mxu0 0
        %1654 = vmatpush1.bf16.msra.mxu0 0
        %1655 = vmatprep.subr.bf16.mxu0 0
        %1656 = vmatpush1.bf16.msra.mxu0 0
        %1657 = vmatprep.subr.bf16.mxu0 0
        %1658 = vmatpush1.bf16.msra.mxu0 0
        %1659 = vmatprep.subr.bf16.mxu0 0
        %1660 = vmatpush1.bf16.msra.mxu0 0
        %1661 = vmatprep.mubr.bf16.mxu0 0
        %1662 = vmatmul.mubr.bf16.gmra.mrb[0].mxu0 %v1624
        %v1663 = vpop.f32.mrb[0].mxu0
        %v1664 = vadd.f32 0.0, %v1663
        %v1665 = vpop.f32.mrb[0].mxu0
        %v1666 = vpop.f32.mrb[0].mxu0
        %v1667 = vpop.f32.mrb[0].mxu0
        %1668 = vdwg.mxu0
        %v1670 = vsel %vm1343, %v1574, 0
        %v1673 = vsel %vm1579, %v1341, 0
        %1675 = vmatprep.subr.bf16.mxu0 0
        %1676 = vmatpush1.bf16.msra.mxu0 %v1673
        %1677 = vmatprep.subr.bf16.mxu0 0
        %1678 = vmatpush1.bf16.msra.mxu0 0
        %1679 = vmatprep.subr.bf16.mxu0 0
        %1680 = vmatpush1.bf16.msra.mxu0 0
        %1681 = vmatprep.subr.bf16.mxu0 0
        %1682 = vmatpush1.bf16.msra.mxu0 0
        %1683 = vmatprep.subr.bf16.mxu0 0
        %1684 = vmatpush1.bf16.msra.mxu0 0
        %1685 = vmatprep.subr.bf16.mxu0 0
        %1686 = vmatpush1.bf16.msra.mxu0 0
        %1687 = vmatprep.subr.bf16.mxu0 0
        %1688 = vmatpush1.bf16.msra.mxu0 0
        %1689 = vmatprep.subr.bf16.mxu0 0
        %1690 = vmatpush1.bf16.msra.mxu0 0
        %1691 = vmatprep.subr.bf16.mxu0 0
        %1692 = vmatpush1.bf16.msra.mxu0 0
        %1693 = vmatprep.subr.bf16.mxu0 0
        %1694 = vmatpush1.bf16.msra.mxu0 0
        %1695 = vmatprep.subr.bf16.mxu0 0
        %1696 = vmatpush1.bf16.msra.mxu0 0
        %1697 = vmatprep.subr.bf16.mxu0 0
        %1698 = vmatpush1.bf16.msra.mxu0 0
        %1699 = vmatprep.subr.bf16.mxu0 0
        %1700 = vmatpush1.bf16.msra.mxu0 0
        %1701 = vmatprep.subr.bf16.mxu0 0
        %1702 = vmatpush1.bf16.msra.mxu0 0
        %1703 = vmatprep.subr.bf16.mxu0 0
        %1704 = vmatpush1.bf16.msra.mxu0 0
        %1705 = vmatprep.subr.bf16.mxu0 0
        %1706 = vmatpush1.bf16.msra.mxu0 0
        %1707 = vmatprep.mubr.bf16.mxu0 0
        %1708 = vmatmul.mubr.bf16.gmra.mrb[0].mxu0 %v1670
        %v1709 = vpop.f32.mrb[0].mxu0
        %v1710 = vadd.f32 0.0, %v1709
        %v1711 = vpop.f32.mrb[0].mxu0
        %v1712 = vpop.f32.mrb[0].mxu0
        %v1713 = vpop.f32.mrb[0].mxu0
        %1714 = vdwg.mxu0
        %v1716 = vsel %vm1343, %v1575, 0
        %v1719 = vsel %vm1579, %v1342, 0
        %1721 = vmatprep.subr.bf16.mxu0 0
        %1722 = vmatpush1.bf16.msra.mxu0 %v1719
        %1723 = vmatprep.subr.bf16.mxu0 0
        %1724 = vmatpush1.bf16.msra.mxu0 0
        %1725 = vmatprep.subr.bf16.mxu0 0
        %1726 = vmatpush1.bf16.msra.mxu0 0
        %1727 = vmatprep.subr.bf16.mxu0 0
        %1728 = vmatpush1.bf16.msra.mxu0 0
        %1729 = vmatprep.subr.bf16.mxu0 0
        %1730 = vmatpush1.bf16.msra.mxu0 0
        %1731 = vmatprep.subr.bf16.mxu0 0
        %1732 = vmatpush1.bf16.msra.mxu0 0
        %1733 = vmatprep.subr.bf16.mxu0 0
        %1734 = vmatpush1.bf16.msra.mxu0 0
        %1735 = vmatprep.subr.bf16.mxu0 0
        %1736 = vmatpush1.bf16.msra.mxu0 0
        %1737 = vmatprep.subr.bf16.mxu0 0
        %1738 = vmatpush1.bf16.msra.mxu0 0
        %1739 = vmatprep.subr.bf16.mxu0 0
        %1740 = vmatpush1.bf16.msra.mxu0 0
        %1741 = vmatprep.subr.bf16.mxu0 0
        %1742 = vmatpush1.bf16.msra.mxu0 0
        %1743 = vmatprep.subr.bf16.mxu0 0
        %1744 = vmatpush1.bf16.msra.mxu0 0
        %1745 = vmatprep.subr.bf16.mxu0 0
        %1746 = vmatpush1.bf16.msra.mxu0 0
        %1747 = vmatprep.subr.bf16.mxu0 0
        %1748 = vmatpush1.bf16.msra.mxu0 0
        %1749 = vmatprep.subr.bf16.mxu0 0
        %1750 = vmatpush1.bf16.msra.mxu0 0
        %1751 = vmatprep.subr.bf16.mxu0 0
        %1752 = vmatpush1.bf16.msra.mxu0 0
        %1753 = vmatprep.mubr.bf16.mxu0 0
        %1754 = vmatmul.mubr.bf16.gmra.mrb[0].mxu0 %v1716
        %v1755 = vpop.f32.mrb[0].mxu0
        %v1756 = vadd.f32 0.0, %v1755
        %v1757 = vpop.f32.mrb[0].mxu0
        %v1758 = vpop.f32.mrb[0].mxu0
        %v1759 = vpop.f32.mrb[0].mxu0
        %1760 = vdwg.mxu0
        %v1761 = vcombine.low %v1618, %v1710
        %v1762 = vcombine.high %v1618, %v1710
        %v1764 = vunpack.c.l.s4 1983009808
        %v1765 = vunpack.c.0.s8 %v1764
        %v1766 = vlaneseq
        %v1767 = vshrl.u32 %v1766, 7
        %v1768 = vsub.s32 %v1765, %v1767
        %v1769 = vrot.slane %v1761, %v1768
        %v1771 = vunpack.c.l.s4 1983009808
        %v1772 = vunpack.c.0.s8 %v1771
        %v1773 = vlaneseq
        %v1774 = vshrl.u32 %v1773, 7
        %v1775 = vsub.s32 %v1772, %v1774
        %v1776 = vrot.slane %v1762, %v1775
        %v1777 = vcombine.low %v1664, %v1756
        %v1778 = vcombine.high %v1664, %v1756
        %v1780 = vunpack.c.l.s4 1983009808
        %v1781 = vunpack.c.0.s8 %v1780
        %v1782 = vlaneseq
        %v1783 = vshrl.u32 %v1782, 7
        %v1784 = vsub.s32 %v1781, %v1783
        %v1785 = vrot.slane %v1777, %v1784
        %v1787 = vunpack.c.l.s4 1983009808
        %v1788 = vunpack.c.0.s8 %v1787
        %v1789 = vlaneseq
        %v1790 = vshrl.u32 %v1789, 7
        %v1791 = vsub.s32 %v1788, %v1790
        %v1792 = vrot.slane %v1778, %v1791
        %v1793 = vcombine.low %v1769, %v1785
        %v1794 = vcombine.high %v1769, %v1785
        %v1796 = vunpack.c.l.s4 1934713408
        %v1797 = vunpack.c.0.s8 %v1796
        %v1798 = vlaneseq
        %v1799 = vshrl.u32 %v1798, 7
        %v1800 = vsub.s32 %v1797, %v1799
        %v1801 = vrot.slane %v1793, %v1800
        %v1803 = vunpack.c.l.s4 1934713408
        %v1804 = vunpack.c.0.s8 %v1803
        %v1805 = vlaneseq
        %v1806 = vshrl.u32 %v1805, 7
        %v1807 = vsub.s32 %v1804, %v1806
        %v1808 = vrot.slane %v1794, %v1807
        %v1809 = vcombine.low %v1776, %v1792
        %v1810 = vcombine.high %v1776, %v1792
        %v1812 = vunpack.c.l.s4 1934713408
        %v1813 = vunpack.c.0.s8 %v1812
        %v1814 = vlaneseq
        %v1815 = vshrl.u32 %v1814, 7
        %v1816 = vsub.s32 %v1813, %v1815
        %v1817 = vrot.slane %v1809, %v1816
        %v1819 = vunpack.c.l.s4 1934713408
        %v1820 = vunpack.c.0.s8 %v1819
        %v1821 = vlaneseq
        %v1822 = vshrl.u32 %v1821, 7
        %v1823 = vsub.s32 %v1820, %v1822
        %v1824 = vrot.slane %v1810, %v1823
        %v1825 = vcombine.high %v1801, 0.0
        %v1826 = vcombine.high %v1808, 0.0
        %v1827 = vcombine.high %v1817, 0.0
        %v1828 = vcombine.high %v1824, 0.0
        %v1829 = vcombine.low %v1801, %v1808
        %v1831 = vunpack.c.l.s4 1983009808
        %v1832 = vunpack.c.0.s8 %v1831
        %v1833 = vlaneseq
        %v1834 = vshrl.u32 %v1833, 7
        %v1835 = vsub.s32 %v1832, %v1834
        %v1836 = vrot.slane %v1829, %v1835
        %v1837 = vcombine.low %v1825, %v1826
        %v1839 = vunpack.c.l.s4 1983009808
        %v1840 = vunpack.c.0.s8 %v1839
        %v1841 = vlaneseq
        %v1842 = vshrl.u32 %v1841, 7
        %v1843 = vsub.s32 %v1840, %v1842
        %v1844 = vrot.slane %v1837, %v1843
        %v1845 = vcombine.low %v1817, %v1824
        %v1847 = vunpack.c.l.s4 1983009808
        %v1848 = vunpack.c.0.s8 %v1847
        %v1849 = vlaneseq
        %v1850 = vshrl.u32 %v1849, 7
        %v1851 = vsub.s32 %v1848, %v1850
        %v1852 = vrot.slane %v1845, %v1851
        %v1853 = vcombine.low %v1827, %v1828
        %v1855 = vunpack.c.l.s4 1983009808
        %v1856 = vunpack.c.0.s8 %v1855
        %v1857 = vlaneseq
        %v1858 = vshrl.u32 %v1857, 7
        %v1859 = vsub.s32 %v1856, %v1858
        %v1860 = vrot.slane %v1853, %v1859
        %v1861 = vcombine.low %v1836, %v1844
        %v1862 = vcombine.high %v1836, %v1844
        %v1864 = vunpack.c.l.s4 1934713408
        %v1865 = vunpack.c.0.s8 %v1864
        %v1866 = vlaneseq
        %v1867 = vshrl.u32 %v1866, 7
        %v1868 = vsub.s32 %v1865, %v1867
        %v1869 = vrot.slane %v1861, %v1868
        %v1871 = vunpack.c.l.s4 1934713408
        %v1872 = vunpack.c.0.s8 %v1871
        %v1873 = vlaneseq
        %v1874 = vshrl.u32 %v1873, 7
        %v1875 = vsub.s32 %v1872, %v1874
        %v1876 = vrot.slane %v1862, %v1875
        %v1877 = vcombine.low %v1852, %v1860
        %v1878 = vcombine.high %v1852, %v1860
        %v1880 = vunpack.c.l.s4 1934713408
        %v1881 = vunpack.c.0.s8 %v1880
        %v1882 = vlaneseq
        %v1883 = vshrl.u32 %v1882, 7
        %v1884 = vsub.s32 %v1881, %v1883
        %v1885 = vrot.slane %v1877, %v1884
        %v1887 = vunpack.c.l.s4 1934713408
        %v1888 = vunpack.c.0.s8 %v1887
        %v1889 = vlaneseq
        %v1890 = vshrl.u32 %v1889, 7
        %v1891 = vsub.s32 %v1888, %v1890
        %v1892 = vrot.slane %v1878, %v1891
        %v1893 = vcombine.low %v1869, %v1885
        %v1894 = vcombine.high %v1869, %v1885
        %v1895 = vcombine.low %v1876, %v1892
        %v1896 = vcombine.high %v1876, %v1892
        %1898 = vrot.lane.b32.xlu0 %v1894, 8
        %v1899 = vpop.permute.xlu0 %1898
        %1902 = vrot.lane.b32.xlu0 %v1895, 16
        %v1903 = vpop.permute.xlu0 %1902
        %1906 = vrot.lane.b32.xlu0 %v1896, 24
        %v1907 = vpop.permute.xlu0 %1906
        %v1909 = vsel %vm1343, %v1893, %v1899
        %vm1910 = vcmask 130048
        %v1911 = vsel %vm1910, %v1909, %v1903
        %vm1912 = vcmask 195584
        %v1913 = vsel %vm1912, %v1911, %v1907
        %v1914 = vpack.c.bf16 %v1913, %v1913
        %v1915 = vld [vmem:[#allocation7] sm:$0xf]
        %v1916 = vld [vmem:[#allocation7 + $0x4] sm:$0xf]
        %v1917 = vld [vmem:[#allocation7 + $0x8] sm:$0xf]
        %v1918 = vld [vmem:[#allocation7 + $0xc] sm:$0xf]
        %v1919 = vld [vmem:[#allocation8] sm:$0x1]
        %v1921 = vlaneseq
        %v1922 = vshrl.u32 %v1921, 7
        %v1923 = vsub.s32 0, %v1922
        %v1924 = vrot.slane %v1919, %v1923
        %v1930 = vunpack.c.l.b16 %v1915
        %v1931 = vunpack.c.l.b16 %v1916
        %v1932 = vunpack.c.l.b16 %v1917
        %v1933 = vunpack.c.l.b16 %v1918
        %v1934 = vpack.c.b16 %v1931, %v1930
        %v1935 = vpack.c.b16 %v1933, %v1932
        %v1939 = vsel %vm667, %v1914, 0
        %1941 = vmatprep.subr.bf16.mxu0 0
        %1942 = vmatpush1.bf16.msra.mxu0 %v1934
        %1943 = vmatprep.subr.bf16.mxu0 0
        %1944 = vmatpush1.bf16.msra.mxu0 %v1935
        %1945 = vmatprep.subr.bf16.mxu0 0
        %1946 = vmatpush1.bf16.msra.mxu0 0
        %1947 = vmatprep.subr.bf16.mxu0 0
        %1948 = vmatpush1.bf16.msra.mxu0 0
        %1949 = vmatprep.subr.bf16.mxu0 0
        %1950 = vmatpush1.bf16.msra.mxu0 0
        %1951 = vmatprep.subr.bf16.mxu0 0
        %1952 = vmatpush1.bf16.msra.mxu0 0
        %1953 = vmatprep.subr.bf16.mxu0 0
        %1954 = vmatpush1.bf16.msra.mxu0 0
        %1955 = vmatprep.subr.bf16.mxu0 0
        %1956 = vmatpush1.bf16.msra.mxu0 0
        %1957 = vmatprep.subr.bf16.mxu0 0
        %1958 = vmatpush1.bf16.msra.mxu0 0
        %1959 = vmatprep.subr.bf16.mxu0 0
        %1960 = vmatpush1.bf16.msra.mxu0 0
        %1961 = vmatprep.subr.bf16.mxu0 0
        %1962 = vmatpush1.bf16.msra.mxu0 0
        %1963 = vmatprep.subr.bf16.mxu0 0
        %1964 = vmatpush1.bf16.msra.mxu0 0
        %1965 = vmatprep.subr.bf16.mxu0 0
        %1966 = vmatpush1.bf16.msra.mxu0 0
        %1967 = vmatprep.subr.bf16.mxu0 0
        %1968 = vmatpush1.bf16.msra.mxu0 0
        %1969 = vmatprep.subr.bf16.mxu0 0
        %1970 = vmatpush1.bf16.msra.mxu0 0
        %1971 = vmatprep.subr.bf16.mxu0 0
        %1972 = vmatpush1.bf16.msra.mxu0 0
        %1973 = vmatprep.mubr.bf16.mxu0 0
        %1974 = vmatmul.mubr.bf16.gmra.mrb[0].mxu0 %v1939
        %v1975 = vpop.f32.mrb[0].mxu0
        %v1976 = vadd.f32 %v1924, %v1975
        %v1977 = vpop.f32.mrb[0].mxu0
        %v1978 = vpop.f32.mrb[0].mxu0
        %v1979 = vpop.f32.mrb[0].mxu0
        %1980 = vdwg.mxu0
        %v1981 = vsel %vm667, %v1976, 0.0
        %1982 = vadd.xlane.f32.xlu0 %v1981
        %v1983 = vpop.xlane.xlu0 %1982
        %v1984 = vmul.f32 %v1983, %v671
        %v1985 = vmul.f32 %v1976, %v1976
        %v1986 = vsel %vm667, %v1985, 0.0
        %1987 = vadd.xlane.f32.xlu0 %v1986
        %v1988 = vpop.xlane.xlu0 %1987
        %v1989 = vmul.f32 %v1988, %v671
        %v1990 = vmul.f32 %v1984, %v1984
        %v1991 = vsub.f32 %v1989, %v1990
        %v1992 = vsub.f32 %v1976, %v1984
        %v1993 = vadd.f32 %v1991, 1e-05
        %v1994 = vrsqrt.pop %v1993
        %v1995 = vmul.f32 %v1992, %v1994
        %v1996 = vld [vmem:[%s11] sm:$0x1]
        %v1998 = vlaneseq
        %v1999 = vshrl.u32 %v1998, 7
        %v2000 = vsub.s32 0, %v1999
        %v2001 = vrot.slane %v1996, %v2000
        %v2003 = vmul.f32 %v1995, %v2001
        %v2004 = vld [vmem:[%s12] sm:$0x1]
        %v2006 = vlaneseq
        %v2007 = vshrl.u32 %v2006, 7
        %v2008 = vsub.s32 0, %v2007
        %v2009 = vrot.slane %v2004, %v2008
        %v2011 = vadd.f32 %v2003, %v2009
        %v2012 = vadd.f32 %v666, %v2011
        %v2013 = vsel %vm667, %v2012, 0.0
        %2014 = vadd.xlane.f32.xlu0 %v2013
        %v2015 = vpop.xlane.xlu0 %2014
        %v2016 = vmul.f32 %v2015, %v671
        %v2017 = vmul.f32 %v2012, %v2012
        %v2018 = vsel %vm667, %v2017, 0.0
        %2019 = vadd.xlane.f32.xlu0 %v2018
        %v2020 = vpop.xlane.xlu0 %2019
        %v2021 = vmul.f32 %v2020, %v671
        %v2022 = vmul.f32 %v2016, %v2016
        %v2023 = vsub.f32 %v2021, %v2022
        %v2024 = vsub.f32 %v2012, %v2016
        %v2025 = vadd.f32 %v2023, 1e-05
        %v2026 = vrsqrt.pop %v2025
        %v2027 = vmul.f32 %v2024, %v2026
        %v2028 = vld [vmem:[%s13] sm:$0x1]
        %v2030 = vlaneseq
        %v2031 = vshrl.u32 %v2030, 7
        %v2032 = vsub.s32 0, %v2031
        %v2033 = vrot.slane %v2028, %v2032
        %v2035 = vmul.f32 %v2027, %v2033
        %v2036 = vld [vmem:[%s14] sm:$0x1]
        %v2038 = vlaneseq
        %v2039 = vshrl.u32 %v2038, 7
        %v2040 = vsub.s32 0, %v2039
        %v2041 = vrot.slane %v2036, %v2040
        %v2043 = vadd.f32 %v2035, %v2041
        %v2044 = vpack.c.bf16 %v2043, %v2043
        %v2045 = vld [vmem:[%s15] sm:$0xf]
        %v2046 = vld [vmem:[%s15 + $0x4] sm:$0xf]
        %v2047 = vld [vmem:[%s15 + $0x8] sm:$0xf]
        %v2048 = vld [vmem:[%s15 + $0xc] sm:$0xf]
        %v2049 = vld [vmem:[%s16] sm:$0x1]
        %v2051 = vlaneseq
        %v2052 = vshrl.u32 %v2051, 7
        %v2053 = vsub.s32 0, %v2052
        %v2054 = vrot.slane %v2049, %v2053
        %v2060 = vunpack.c.l.b16 %v2045
        %v2061 = vunpack.c.l.b16 %v2046
        %v2062 = vunpack.c.l.b16 %v2047
        %v2063 = vunpack.c.l.b16 %v2048
        %v2064 = vpack.c.b16 %v2061, %v2060
        %v2065 = vpack.c.b16 %v2063, %v2062
        %v2069 = vsel %vm667, %v2044, 0
        %2071 = vmatprep.subr.bf16.mxu0 0
        %2072 = vmatpush1.bf16.msra.mxu0 %v2064
        %2073 = vmatprep.subr.bf16.mxu0 0
        %2074 = vmatpush1.bf16.msra.mxu0 %v2065
        %2075 = vmatprep.subr.bf16.mxu0 0
        %2076 = vmatpush1.bf16.msra.mxu0 0
        %2077 = vmatprep.subr.bf16.mxu0 0
        %2078 = vmatpush1.bf16.msra.mxu0 0
        %2079 = vmatprep.subr.bf16.mxu0 0
        %2080 = vmatpush1.bf16.msra.mxu0 0
        %2081 = vmatprep.subr.bf16.mxu0 0
        %2082 = vmatpush1.bf16.msra.mxu0 0
        %2083 = vmatprep.subr.bf16.mxu0 0
        %2084 = vmatpush1.bf16.msra.mxu0 0
        %2085 = vmatprep.subr.bf16.mxu0 0
        %2086 = vmatpush1.bf16.msra.mxu0 0
        %2087 = vmatprep.subr.bf16.mxu0 0
        %2088 = vmatpush1.bf16.msra.mxu0 0
        %2089 = vmatprep.subr.bf16.mxu0 0
        %2090 = vmatpush1.bf16.msra.mxu0 0
        %2091 = vmatprep.subr.bf16.mxu0 0
        %2092 = vmatpush1.bf16.msra.mxu0 0
        %2093 = vmatprep.subr.bf16.mxu0 0
        %2094 = vmatpush1.bf16.msra.mxu0 0
        %2095 = vmatprep.subr.bf16.mxu0 0
        %2096 = vmatpush1.bf16.msra.mxu0 0
        %2097 = vmatprep.subr.bf16.mxu0 0
        %2098 = vmatpush1.bf16.msra.mxu0 0
        %2099 = vmatprep.subr.bf16.mxu0 0
        %2100 = vmatpush1.bf16.msra.mxu0 0
        %2101 = vmatprep.subr.bf16.mxu0 0
        %2102 = vmatpush1.bf16.msra.mxu0 0
        %2103 = vmatprep.mubr.bf16.mxu0 0
        %2104 = vmatmul.mubr.bf16.gmra.mrb[0].mxu0 %v2069
        %v2105 = vpop.f32.mrb[0].mxu0
        %v2106 = vadd.f32 %v2054, %v2105
        %v2107 = vpop.f32.mrb[0].mxu0
        %v2108 = vpop.f32.mrb[0].mxu0
        %v2109 = vpop.f32.mrb[0].mxu0
        %2110 = vdwg.mxu0
        %v2111 = vmul.f32 %v2106, %v2106
        %v2112 = vmul.f32 %v2106, %v2111
        %v2113 = vmul.f32 %v2112, 0.044715
        %v2114 = vadd.f32 %v2106, %v2113
        %v2115 = vmul.f32 %v2114, 0.7978846
        %v2116 = vtanh.pop %v2115
        %v2117 = vadd.f32 %v2116, 1.0
        %v2118 = vmul.f32 %v2117, 0.5
        %v2119 = vmul.f32 %v2106, %v2118
        %v2120 = vpack.c.bf16 %v2119, %v2119
        %v2121 = vld [vmem:[%s17] sm:$0xf]
        %v2122 = vld [vmem:[%s17 + $0x4] sm:$0xf]
        %v2123 = vld [vmem:[%s17 + $0x8] sm:$0xf]
        %v2124 = vld [vmem:[%s17 + $0xc] sm:$0xf]
        %v2125 = vld [vmem:[%s17 + $0x10] sm:$0xf]
        %v2126 = vld [vmem:[%s17 + $0x14] sm:$0xf]
        %v2127 = vld [vmem:[%s17 + $0x18] sm:$0xf]
        %v2128 = vld [vmem:[%s17 + $0x1c] sm:$0xf]
        %v2129 = vld [vmem:[%s18] sm:$0x1]
        %v2131 = vlaneseq
        %v2132 = vshrl.u32 %v2131, 7
        %v2133 = vsub.s32 0, %v2132
        %v2134 = vrot.slane %v2129, %v2133
        %v2144 = vunpack.c.l.b16 %v2121
        %v2145 = vunpack.c.l.b16 %v2122
        %v2146 = vunpack.c.l.b16 %v2123
        %v2147 = vunpack.c.l.b16 %v2124
        %v2148 = vunpack.c.l.b16 %v2125
        %v2149 = vunpack.c.l.b16 %v2126
        %v2150 = vunpack.c.l.b16 %v2127
        %v2151 = vunpack.c.l.b16 %v2128
        %v2152 = vpack.c.b16 %v2145, %v2144
        %v2153 = vpack.c.b16 %v2147, %v2146
        %v2154 = vpack.c.b16 %v2149, %v2148
        %v2155 = vpack.c.b16 %v2151, %v2150
        %vm2160 = vcmask 523264
        %v2162 = vsel %vm2160, %v2120, 0
        %2164 = vmatprep.subr.bf16.mxu0 0
        %2165 = vmatpush1.bf16.msra.mxu0 %v2152
        %2166 = vmatprep.subr.bf16.mxu0 0
        %2167 = vmatpush1.bf16.msra.mxu0 %v2153
        %2168 = vmatprep.subr.bf16.mxu0 0
        %2169 = vmatpush1.bf16.msra.mxu0 %v2154
        %2170 = vmatprep.subr.bf16.mxu0 0
        %2171 = vmatpush1.bf16.msra.mxu0 %v2155
        %2172 = vmatprep.subr.bf16.mxu0 0
        %2173 = vmatpush1.bf16.msra.mxu0 0
        %2174 = vmatprep.subr.bf16.mxu0 0
        %2175 = vmatpush1.bf16.msra.mxu0 0
        %2176 = vmatprep.subr.bf16.mxu0 0
        %2177 = vmatpush1.bf16.msra.mxu0 0
        %2178 = vmatprep.subr.bf16.mxu0 0
        %2179 = vmatpush1.bf16.msra.mxu0 0
        %2180 = vmatprep.subr.bf16.mxu0 0
        %2181 = vmatpush1.bf16.msra.mxu0 0
        %2182 = vmatprep.subr.bf16.mxu0 0
        %2183 = vmatpush1.bf16.msra.mxu0 0
        %2184 = vmatprep.subr.bf16.mxu0 0
        %2185 = vmatpush1.bf16.msra.mxu0 0
        %2186 = vmatprep.subr.bf16.mxu0 0
        %2187 = vmatpush1.bf16.msra.mxu0 0
        %2188 = vmatprep.subr.bf16.mxu0 0
        %2189 = vmatpush1.bf16.msra.mxu0 0
        %2190 = vmatprep.subr.bf16.mxu0 0
        %2191 = vmatpush1.bf16.msra.mxu0 0
        %2192 = vmatprep.subr.bf16.mxu0 0
        %2193 = vmatpush1.bf16.msra.mxu0 0
        %2194 = vmatprep.subr.bf16.mxu0 0
        %2195 = vmatpush1.bf16.msra.mxu0 0
        %2196 = vmatprep.mubr.bf16.mxu0 0
        %2197 = vmatmul.mubr.bf16.gmra.mrb[0].mxu0 %v2162
        %v2198 = vpop.f32.mrb[0].mxu0
        %v2199 = vadd.f32 %v2134, %v2198
        %v2200 = vpop.f32.mrb[0].mxu0
        %v2201 = vpop.f32.mrb[0].mxu0
        %v2202 = vpop.f32.mrb[0].mxu0
        %2203 = vdwg.mxu0
        %v2204 = vadd.f32 %v2012, %v2199
        %2205 = vst.msk [vmem:[%s660] sm:$0xff] %vm667, %v2204
        %s2206 = sand.u32 %s448, 1
        %s2207 = scalar_lea.sflag [#allocation4], %s2206
        %s2208 = sand.u32 %s448, 1
        %s2209 = smul.addr %s2208, 8
        %s2210 = scalar_lea.vmem [#allocation11], %s2209
        // Predicated region
        $region117: #{tpu_custom_call.1} parent=95 // pred_check
          %p2211 = pneg %p458
        $region118: #{tpu_custom_call.1} parent=95 // pred_check_branch
          %2213 = sbr.rel (%p2211) target = $region120
        $region119: #{tpu_custom_call.1} parent=95 // pred_region
          %s2215 = ssub.s32 128, 128
          %2216 = vsyncadd %s2207, %s2215
          %s2217 = smul.addr %s36, 128
          %s2218 = scalar_lea.hbm %s19, %s2217
          %s2220 = sshll.u32 %s2210, 4
          %s2221 = int_to_ptr.vmem [resolvable:$true] %s2220
          %2223 = dma.vmem_to_hbm [thread:$0]  %s2221, 128, %s2218, %s2207
        $region120: #{tpu_custom_call.1} parent=95 // pred_fallthru
          _
      $region96: #{tpu_custom_call.1} parent=5 // pred_fallthru
        _
      %p2224 = scmp.le.s32.totalorder 2, %s31
      // Predicated region
      $region121: #{tpu_custom_call.1} parent=5 // pred_check
        %p2225 = pneg %p2224
      $region122: #{tpu_custom_call.1} parent=5 // pred_check_branch
        %2227 = sbr.rel (%p2225) target = $region124
      $region123: #{tpu_custom_call.1} parent=5 // pred_region
        %s2228 = ssub.s32 %s31, 2
        // Predicated region
        $region125: #{tpu_custom_call.1} parent=123 // pred_check
          %p2229 = pneg %p464
        $region126: #{tpu_custom_call.1} parent=123 // pred_check_branch
          %2231 = sbr.rel (%p2229) target = $region128
        $region127: #{tpu_custom_call.1} parent=123 // pred_region
          %s2232 = sand.u32 %s449, 1
          %s2233 = scalar_lea.sflag [#allocation4], %s2232
          %s2234 = sand.u32 %s449, 1
          %s2235 = smul.addr %s2234, 8
          %s2236 = scalar_lea.vmem [#allocation11], %s2235
          %2237 = dma.done %s2233, 128
        $region128: #{tpu_custom_call.1} parent=123 // pred_fallthru
          _
      $region124: #{tpu_custom_call.1} parent=5 // pred_fallthru
        _
    $region6: #{tpu_custom_call.1} parent=1 // loop_footer
      %s35 = sadd.s32 1, %s31
    $region7: #{tpu_custom_call.1} parent=1 // loop_footer_branch
      %30 = sbr.rel target = $region3
    $region8: #{tpu_custom_call.1} parent=1 // loop_exit
      _
    %2238 = vsyncpa [#allocation3], 1
    %s2239 = scalar_lea.sflag [#allocation3], 1
    %2240 = vsyncpa %s2239, 1
    %2241 = vsyncpa [#allocation6], 1
    %2242 = vsyncpa [#allocation9], 1
    %2243 = vsyncpa [#allocation4], 1
    %s2244 = scalar_lea.sflag [#allocation4], 1
    %2245 = vsyncpa %s2244, 1

// kernel: tpu_custom_call.1
$region0: #{tpu_custom_call.1}
  #allocation0 [shape = 'u32[]', space=smem, size = 0x4, offset = 0x4, fixed_abs, tag = 'smem constant byte address 0x4 - core index']
  #allocation1 [shape = 'u32[144,128]{1,0:T(1,128)}', space=vmem, size = 0x12000, scoped, tag = 'internal scratch']
  %s0 = inlined_call_operand.vmem [shape: f32[16,32], index: 0, kind: input, shape index: {}]
  %s1 = inlined_call_operand.vmem [shape: bf16[32,32], index: 1, kind: input, shape index: {}]
  %s2 = inlined_call_operand.vmem [shape: f32[1,32], index: 2, kind: input, shape index: {}]
  %s3 = inlined_call_operand.vmem [shape: bf16[32,32], index: 3, kind: input, shape index: {}]
  %s4 = inlined_call_operand.vmem [shape: f32[1,32], index: 4, kind: input, shape index: {}]
  %s5 = inlined_call_operand.hbm [shape: bf16[32,32], index: 5, kind: input, shape index: {}]
  %s6 = inlined_call_operand.hbm [shape: f32[1,32], index: 6, kind: input, shape index: {}]
  %s7 = inlined_call_operand.hbm [shape: bf16[32,32], index: 7, kind: input, shape index: {}]
  %s8 = inlined_call_operand.hbm [shape: f32[1,32], index: 8, kind: input, shape index: {}]
  %s9 = inlined_call_operand.hbm [shape: f32[1,32], index: 9, kind: input, shape index: {}]
  %s10 = inlined_call_operand.vmem [shape: f32[1,32], index: 10, kind: input, shape index: {}]
  %s11 = inlined_call_operand.vmem [shape: f32[1,32], index: 11, kind: input, shape index: {}]
  %s12 = inlined_call_operand.vmem [shape: f32[1,32], index: 12, kind: input, shape index: {}]
  %s13 = inlined_call_operand.vmem [shape: f32[1,32], index: 13, kind: input, shape index: {}]
  %s14 = inlined_call_operand.vmem [shape: f32[1,32], index: 14, kind: input, shape index: {}]
  %s15 = inlined_call_operand.vmem [shape: bf16[32,64], index: 15, kind: input, shape index: {}]
  %s16 = inlined_call_operand.vmem [shape: f32[1,64], index: 16, kind: input, shape index: {}]
  %s17 = inlined_call_operand.vmem [shape: bf16[64,32], index: 17, kind: input, shape index: {}]
  %s18 = inlined_call_operand.vmem [shape: f32[1,32], index: 18, kind: input, shape index: {}]
  %s19 = inlined_call_operand.hbm [shape: f32[16,32], index: 19, kind: output, shape index: {}]
  %s20 = sld [smem:[#allocation0]]
  $region129: #{tpu_custom_call.1} parent=0
    _
  %s22 = ssub.s32 1, %s20
  %s23 = scalar_select 0, %s22, %s20
  $region1: #{tpu_custom_call.1} parent=0
    #allocation2 [shape = 'u8[8192]{0}', space=vmem, size = 0x2000, scoped, tag = 'input window, operand 5, single buffered']
    #allocation3 [shape = 's32[2]{0}', space=sflag, size = 0x8, scoped, tag = 'scoped memory for tpu_custom_call.1']
    #allocation4 [shape = 's32[2]{0}', space=sflag, size = 0x8, scoped, tag = 'scoped memory for tpu_custom_call.1']
    #allocation5 [shape = 'u8[512]{0}', space=vmem, size = 0x400, scoped, tag = 'input window, operand 6, single buffered']
    #allocation6 [shape = 's32[1]{0}', space=sflag, size = 0x4, scoped, tag = 'scoped memory for tpu_custom_call.1']
    #allocation7 [shape = 'u8[8192]{0}', space=vmem, size = 0x2000, scoped, tag = 'input window, operand 7, single buffered']
    #allocation8 [shape = 'u8[512]{0}', space=vmem, size = 0x400, scoped, tag = 'input window, operand 8, single buffered']
    #allocation9 [shape = 's32[1]{0}', space=sflag, size = 0x4, scoped, tag = 'scoped memory for tpu_custom_call.1']
    #allocation10 [shape = 'u8[512]{0}', space=vmem, size = 0x400, scoped, tag = 'input window, operand 9, single buffered']
    #allocation11 [shape = 'u8[8192]{0}', space=vmem, size = 0x2000, scoped, tag = 'output window, operand 0']
    %24 = vsyncpa [#allocation3], 0
    %25 = vsyncpa [#allocation6], 0
    %26 = vsyncpa [#allocation9], 0
    %27 = vsyncpa [#allocation4], 0
    %s28 = scalar_lea.sflag [#allocation4], 1
    %29 = vsyncpa %s28, 0
    loop: start=0, step=1, limit=4
    $region2: #{tpu_custom_call.1} parent=1 // loop_pre_header
      _
    $region3: #{tpu_custom_call.1} parent=1 // loop_header
      %s31 = sphi 0, %s35
      %p32 = scmp.ge.s32.totalorder %s31, 4
      %s41 = sphi 0, %s43
      %s44 = sphi 0, %s41
      %s45 = sphi 0, %s44
      %s61 = sphi 0, %s45
      %s65 = sphi 0, %s65
      %s67 = sphi 0, %s65
      %s68 = sphi 0, %s67
      %s82 = sphi 0, %s68
      %s86 = sphi 0, %s86
      %s88 = sphi 0, %s86
      %s89 = sphi 0, %s88
      %s103 = sphi 0, %s89
      %s107 = sphi 0, %s107
      %s109 = sphi 0, %s107
      %s110 = sphi 0, %s109
      %s124 = sphi 0, %s110
      %s128 = sphi 0, %s128
      %s130 = sphi 0, %s128
      %s131 = sphi 0, %s130
      %s145 = sphi 0, %s131
      %s149 = sphi 0, %s149
      %s151 = sphi 0, %s149
      %s152 = sphi 0, %s151
      %s166 = sphi 0, %s152
      %s170 = sphi 0, %s170
      %s172 = sphi 0, %s170
      %s173 = sphi 0, %s172
      %s187 = sphi 0, %s173
      %s191 = sphi 0, %s191
      %s193 = sphi 0, %s191
      %s194 = sphi 0, %s193
      %s208 = sphi 0, %s194
      %s212 = sphi 0, %s212
      %s214 = sphi 0, %s212
      %s215 = sphi 0, %s214
      %s229 = sphi 0, %s215
      %s233 = sphi 0, %s233
      %s235 = sphi 0, %s233
      %s236 = sphi 0, %s235
      %s250 = sphi 0, %s236
      %s254 = sphi 0, %s254
      %s256 = sphi 0, %s254
      %s257 = sphi 0, %s256
      %s271 = sphi 0, %s257
      %s275 = sphi 0, %s275
      %s277 = sphi 0, %s275
      %s278 = sphi 0, %s277
      %s292 = sphi 0, %s278
      %s296 = sphi 0, %s296
      %s298 = sphi 0, %s296
      %s299 = sphi 0, %s298
      %s313 = sphi 0, %s299
      %s317 = sphi 0, %s317
      %s319 = sphi 0, %s317
      %s320 = sphi 0, %s319
      %s334 = sphi 0, %s320
      %s338 = sphi 0, %s338
      %s340 = sphi 0, %s338
      %s341 = sphi 0, %s340
      %s355 = sphi 0, %s341
      %s359 = sphi 0, %s359
      %s361 = sphi 0, %s359
      %s362 = sphi 0, %s361
      %s376 = sphi 0, %s362
      %s380 = sphi 0, %s380
      %s382 = sphi 0, %s380
      %s383 = sphi 0, %s382
      %s397 = sphi 0, %s383
      %s401 = sphi 0, %s401
      %s403 = sphi 0, %s401
      %s404 = sphi 0, %s403
      %s418 = sphi 0, %s404
      %s422 = sphi 0, %s422
      %s424 = sphi 0, %s422
      %s425 = sphi 0, %s424
      %s439 = sphi 0, %s425
      %s445 = sphi 0, %s447
      %s448 = sphi 0, %s445
      %s449 = sphi 0, %s448
      %s465 = sphi 0, %s449
    $region4: #{tpu_custom_call.1} parent=1 // loop_header_branch
      %34 = sbr.rel (%p32) target = $region8
    $region5: #{tpu_custom_call.1} parent=1 // loop_body
      %s36 = ssub.s32 %s31, 1
      %s37 = ssub.s32 %s31, 2
      %s38 = sadd.s32 %s31, 1
      %s39 = ssub.s32 %s31, %s38
      %p40 = scmp.eq.s32.totalorder %s39, 0
      %s42 = sadd.s32 %s41, 1
      %s43 = scalar_select %p40, %s41, %s42
      %p46 = pneg %p40
      %p47 = scmp.eq.s32.totalorder %s31, 1
      %p48 = por %p46, %p47
      %p49 = scmp.ne.s32.totalorder %s41, %s44
      %p50 = scmp.eq.s32.totalorder %s31, 0
      %p51 = por %p49, %p50
      %p52 = scmp.ne.s32.totalorder %s41, %s44
      %p53 = scmp.eq.s32.totalorder %s36, 1
      %p54 = por %p52, %p53
      %p55 = scmp.ne.s32.totalorder %s44, %s45
      %p56 = scmp.eq.s32.totalorder %s36, 0
      %p57 = por %p55, %p56
      %p58 = scmp.ne.s32.totalorder %s44, %s45
      %p59 = scmp.eq.s32.totalorder %s37, 1
      %p60 = por %p58, %p59
      %p62 = scmp.ne.s32.totalorder %s45, %s61
      %p63 = scmp.eq.s32.totalorder %s37, 0
      %p64 = por %p62, %p63
      %s66 = sadd.s32 %s65, 1
      %p69 = scmp.eq.s32.totalorder %s31, 1
      %p70 = scmp.ne.s32.totalorder %s65, %s67
      %p71 = scmp.eq.s32.totalorder %s31, 0
      %p72 = por %p70, %p71
      %p73 = scmp.ne.s32.totalorder %s65, %s67
      %p74 = scmp.eq.s32.totalorder %s36, 1
      %p75 = por %p73, %p74
      %p76 = scmp.ne.s32.totalorder %s67, %s68
      %p77 = scmp.eq.s32.totalorder %s36, 0
      %p78 = por %p76, %p77
      %p79 = scmp.ne.s32.totalorder %s67, %s68
      %p80 = scmp.eq.s32.totalorder %s37, 1
      %p81 = por %p79, %p80
      %p83 = scmp.ne.s32.totalorder %s68, %s82
      %p84 = scmp.eq.s32.totalorder %s37, 0
      %p85 = por %p83, %p84
      %s87 = sadd.s32 %s86, 1
      %p90 = scmp.eq.s32.totalorder %s31, 1
      %p91 = scmp.ne.s32.totalorder %s86, %s88
      %p92 = scmp.eq.s32.totalorder %s31, 0
      %p93 = por %p91, %p92
      %p94 = scmp.ne.s32.totalorder %s86, %s88
      %p95 = scmp.eq.s32.totalorder %s36, 1
      %p96 = por %p94, %p95
      %p97 = scmp.ne.s32.totalorder %s88, %s89
      %p98 = scmp.eq.s32.totalorder %s36, 0
      %p99 = por %p97, %p98
      %p100 = scmp.ne.s32.totalorder %s88, %s89
      %p101 = scmp.eq.s32.totalorder %s37, 1
      %p102 = por %p100, %p101
      %p104 = scmp.ne.s32.totalorder %s89, %s103
      %p105 = scmp.eq.s32.totalorder %s37, 0
      %p106 = por %p104, %p105
      %s108 = sadd.s32 %s107, 1
      %p111 = scmp.eq.s32.totalorder %s31, 1
      %p112 = scmp.ne.s32.totalorder %s107, %s109
      %p113 = scmp.eq.s32.totalorder %s31, 0
      %p114 = por %p112, %p113
      %p115 = scmp.ne.s32.totalorder %s107, %s109
      %p116 = scmp.eq.s32.totalorder %s36, 1
      %p117 = por %p115, %p116
      %p118 = scmp.ne.s32.totalorder %s109, %s110
      %p119 = scmp.eq.s32.totalorder %s36, 0
      %p120 = por %p118, %p119
      %p121 = scmp.ne.s32.totalorder %s109, %s110
      %p122 = scmp.eq.s32.totalorder %s37, 1
      %p123 = por %p121, %p122
      %p125 = scmp.ne.s32.totalorder %s110, %s124
      %p126 = scmp.eq.s32.totalorder %s37, 0
      %p127 = por %p125, %p126
      %s129 = sadd.s32 %s128, 1
      %p132 = scmp.eq.s32.totalorder %s31, 1
      %p133 = scmp.ne.s32.totalorder %s128, %s130
      %p134 = scmp.eq.s32.totalorder %s31, 0
      %p135 = por %p133, %p134
      %p136 = scmp.ne.s32.totalorder %s128, %s130
      %p137 = scmp.eq.s32.totalorder %s36, 1
      %p138 = por %p136, %p137
      %p139 = scmp.ne.s32.totalorder %s130, %s131
      %p140 = scmp.eq.s32.totalorder %s36, 0
      %p141 = por %p139, %p140
      %p142 = scmp.ne.s32.totalorder %s130, %s131
      %p143 = scmp.eq.s32.totalorder %s37, 1
      %p144 = por %p142, %p143
      %p146 = scmp.ne.s32.totalorder %s131, %s145
      %p147 = scmp.eq.s32.totalorder %s37, 0
      %p148 = por %p146, %p147
      %s150 = sadd.s32 %s149, 1
      %p153 = scmp.eq.s32.totalorder %s31, 1
      %p154 = scmp.ne.s32.totalorder %s149, %s151
      %p155 = scmp.eq.s32.totalorder %s31, 0
      %p156 = por %p154, %p155
      %p157 = scmp.ne.s32.totalorder %s149, %s151
      %p158 = scmp.eq.s32.totalorder %s36, 1
      %p159 = por %p157, %p158
      %p160 = scmp.ne.s32.totalorder %s151, %s152
      %p161 = scmp.eq.s32.totalorder %s36, 0
      %p162 = por %p160, %p161
      %p163 = scmp.ne.s32.totalorder %s151, %s152
      %p164 = scmp.eq.s32.totalorder %s37, 1
      %p165 = por %p163, %p164
      %p167 = scmp.ne.s32.totalorder %s152, %s166
      %p168 = scmp.eq.s32.totalorder %s37, 0
      %p169 = por %p167, %p168
      %s171 = sadd.s32 %s170, 1
      %p174 = scmp.eq.s32.totalorder %s31, 1
      %p175 = scmp.ne.s32.totalorder %s170, %s172
      %p176 = scmp.eq.s32.totalorder %s31, 0
      %p177 = por %p175, %p176
      %p178 = scmp.ne.s32.totalorder %s170, %s172
      %p179 = scmp.eq.s32.totalorder %s36, 1
      %p180 = por %p178, %p179
      %p181 = scmp.ne.s32.totalorder %s172, %s173
      %p182 = scmp.eq.s32.totalorder %s36, 0
      %p183 = por %p181, %p182
      %p184 = scmp.ne.s32.totalorder %s172, %s173
      %p185 = scmp.eq.s32.totalorder %s37, 1
      %p186 = por %p184, %p185
      %p188 = scmp.ne.s32.totalorder %s173, %s187
      %p189 = scmp.eq.s32.totalorder %s37, 0
      %p190 = por %p188, %p189
      %s192 = sadd.s32 %s191, 1
      %p195 = scmp.eq.s32.totalorder %s31, 1
      %p196 = scmp.ne.s32.totalorder %s191, %s193
      %p197 = scmp.eq.s32.totalorder %s31, 0
      %p198 = por %p196, %p197
      %p199 = scmp.ne.s32.totalorder %s191, %s193
      %p200 = scmp.eq.s32.totalorder %s36, 1
      %p201 = por %p199, %p200
      %p202 = scmp.ne.s32.totalorder %s193, %s194
      %p203 = scmp.eq.s32.totalorder %s36, 0
      %p204 = por %p202, %p203
      %p205 = scmp.ne.s32.totalorder %s193, %s194
      %p206 = scmp.eq.s32.totalorder %s37, 1
      %p207 = por %p205, %p206
      %p209 = scmp.ne.s32.totalorder %s194, %s208
      %p210 = scmp.eq.s32.totalorder %s37, 0
      %p211 = por %p209, %p210
      %s213 = sadd.s32 %s212, 1
      %p216 = scmp.eq.s32.totalorder %s31, 1
      %p217 = scmp.ne.s32.totalorder %s212, %s214
      %p218 = scmp.eq.s32.totalorder %s31, 0
      %p219 = por %p217, %p218
      %p220 = scmp.ne.s32.totalorder %s212, %s214
      %p221 = scmp.eq.s32.totalorder %s36, 1
      %p222 = por %p220, %p221
      %p223 = scmp.ne.s32.totalorder %s214, %s215
      %p224 = scmp.eq.s32.totalorder %s36, 0
      %p225 = por %p223, %p224
      %p226 = scmp.ne.s32.totalorder %s214, %s215
      %p227 = scmp.eq.s32.totalorder %s37, 1
      %p228 = por %p226, %p227
      %p230 = scmp.ne.s32.totalorder %s215, %s229
      %p231 = scmp.eq.s32.totalorder %s37, 0
      %p232 = por %p230, %p231
      %s234 = sadd.s32 %s233, 1
      %p237 = scmp.eq.s32.totalorder %s31, 1
      %p238 = scmp.ne.s32.totalorder %s233, %s235
      %p239 = scmp.eq.s32.totalorder %s31, 0
      %p240 = por %p238, %p239
      %p241 = scmp.ne.s32.totalorder %s233, %s235
      %p242 = scmp.eq.s32.totalorder %s36, 1
      %p243 = por %p241, %p242
      %p244 = scmp.ne.s32.totalorder %s235, %s236
      %p245 = scmp.eq.s32.totalorder %s36, 0
      %p246 = por %p244, %p245
      %p247 = scmp.ne.s32.totalorder %s235, %s236
      %p248 = scmp.eq.s32.totalorder %s37, 1
      %p249 = por %p247, %p248
      %p251 = scmp.ne.s32.totalorder %s236, %s250
      %p252 = scmp.eq.s32.totalorder %s37, 0
      %p253 = por %p251, %p252
      %s255 = sadd.s32 %s254, 1
      %p258 = scmp.eq.s32.totalorder %s31, 1
      %p259 = scmp.ne.s32.totalorder %s254, %s256
      %p260 = scmp.eq.s32.totalorder %s31, 0
      %p261 = por %p259, %p260
      %p262 = scmp.ne.s32.totalorder %s254, %s256
      %p263 = scmp.eq.s32.totalorder %s36, 1
      %p264 = por %p262, %p263
      %p265 = scmp.ne.s32.totalorder %s256, %s257
      %p266 = scmp.eq.s32.totalorder %s36, 0
      %p267 = por %p265, %p266
      %p268 = scmp.ne.s32.totalorder %s256, %s257
      %p269 = scmp.eq.s32.totalorder %s37, 1
      %p270 = por %p268, %p269
      %p272 = scmp.ne.s32.totalorder %s257, %s271
      %p273 = scmp.eq.s32.totalorder %s37, 0
      %p274 = por %p272, %p273
      %s276 = sadd.s32 %s275, 1
      %p279 = scmp.eq.s32.totalorder %s31, 1
      %p280 = scmp.ne.s32.totalorder %s275, %s277
      %p281 = scmp.eq.s32.totalorder %s31, 0
      %p282 = por %p280, %p281
      %p283 = scmp.ne.s32.totalorder %s275, %s277
      %p284 = scmp.eq.s32.totalorder %s36, 1
      %p285 = por %p283, %p284
      %p286 = scmp.ne.s32.totalorder %s277, %s278
      %p287 = scmp.eq.s32.totalorder %s36, 0
      %p288 = por %p286, %p287
      %p289 = scmp.ne.s32.totalorder %s277, %s278
      %p290 = scmp.eq.s32.totalorder %s37, 1
      %p291 = por %p289, %p290
      %p293 = scmp.ne.s32.totalorder %s278, %s292
      %p294 = scmp.eq.s32.totalorder %s37, 0
      %p295 = por %p293, %p294
      %s297 = sadd.s32 %s296, 1
      %p300 = scmp.eq.s32.totalorder %s31, 1
      %p301 = scmp.ne.s32.totalorder %s296, %s298
      %p302 = scmp.eq.s32.totalorder %s31, 0
      %p303 = por %p301, %p302
      %p304 = scmp.ne.s32.totalorder %s296, %s298
      %p305 = scmp.eq.s32.totalorder %s36, 1
      %p306 = por %p304, %p305
      %p307 = scmp.ne.s32.totalorder %s298, %s299
      %p308 = scmp.eq.s32.totalorder %s36, 0
      %p309 = por %p307, %p308
      %p310 = scmp.ne.s32.totalorder %s298, %s299
      %p311 = scmp.eq.s32.totalorder %s37, 1
      %p312 = por %p310, %p311
      %p314 = scmp.ne.s32.totalorder %s299, %s313
      %p315 = scmp.eq.s32.totalorder %s37, 0
      %p316 = por %p314, %p315
      %s318 = sadd.s32 %s317, 1
      %p321 = scmp.eq.s32.totalorder %s31, 1
      %p322 = scmp.ne.s32.totalorder %s317, %s319
      %p323 = scmp.eq.s32.totalorder %s31, 0
      %p324 = por %p322, %p323
      %p325 = scmp.ne.s32.totalorder %s317, %s319
      %p326 = scmp.eq.s32.totalorder %s36, 1
      %p327 = por %p325, %p326
      %p328 = scmp.ne.s32.totalorder %s319, %s320
      %p329 = scmp.eq.s32.totalorder %s36, 0
      %p330 = por %p328, %p329
      %p331 = scmp.ne.s32.totalorder %s319, %s320
      %p332 = scmp.eq.s32.totalorder %s37, 1
      %p333 = por %p331, %p332
      %p335 = scmp.ne.s32.totalorder %s320, %s334
      %p336 = scmp.eq.s32.totalorder %s37, 0
      %p337 = por %p335, %p336
      %s339 = sadd.s32 %s338, 1
      %p342 = scmp.eq.s32.totalorder %s31, 1
      %p343 = scmp.ne.s32.totalorder %s338, %s340
      %p344 = scmp.eq.s32.totalorder %s31, 0
      %p345 = por %p343, %p344
      %p346 = scmp.ne.s32.totalorder %s338, %s340
      %p347 = scmp.eq.s32.totalorder %s36, 1
      %p348 = por %p346, %p347
      %p349 = scmp.ne.s32.totalorder %s340, %s341
      %p350 = scmp.eq.s32.totalorder %s36, 0
      %p351 = por %p349, %p350
      %p352 = scmp.ne.s32.totalorder %s340, %s341
      %p353 = scmp.eq.s32.totalorder %s37, 1
      %p354 = por %p352, %p353
      %p356 = scmp.ne.s32.totalorder %s341, %s355
      %p357 = scmp.eq.s32.totalorder %s37, 0
      %p358 = por %p356, %p357
      %s360 = sadd.s32 %s359, 1
      %p363 = scmp.eq.s32.totalorder %s31, 1
      %p364 = scmp.ne.s32.totalorder %s359, %s361
      %p365 = scmp.eq.s32.totalorder %s31, 0
      %p366 = por %p364, %p365
      %p367 = scmp.ne.s32.totalorder %s359, %s361
      %p368 = scmp.eq.s32.totalorder %s36, 1
      %p369 = por %p367, %p368
      %p370 = scmp.ne.s32.totalorder %s361, %s362
      %p371 = scmp.eq.s32.totalorder %s36, 0
      %p372 = por %p370, %p371
      %p373 = scmp.ne.s32.totalorder %s361, %s362
      %p374 = scmp.eq.s32.totalorder %s37, 1
      %p375 = por %p373, %p374
      %p377 = scmp.ne.s32.totalorder %s362, %s376
      %p378 = scmp.eq.s32.totalorder %s37, 0
      %p379 = por %p377, %p378
      %s381 = sadd.s32 %s380, 1
      %p384 = scmp.eq.s32.totalorder %s31, 1
      %p385 = scmp.ne.s32.totalorder %s380, %s382
      %p386 = scmp.eq.s32.totalorder %s31, 0
      %p387 = por %p385, %p386
      %p388 = scmp.ne.s32.totalorder %s380, %s382
      %p389 = scmp.eq.s32.totalorder %s36, 1
      %p390 = por %p388, %p389
      %p391 = scmp.ne.s32.totalorder %s382, %s383
      %p392 = scmp.eq.s32.totalorder %s36, 0
      %p393 = por %p391, %p392
      %p394 = scmp.ne.s32.totalorder %s382, %s383
      %p395 = scmp.eq.s32.totalorder %s37, 1
      %p396 = por %p394, %p395
      %p398 = scmp.ne.s32.totalorder %s383, %s397
      %p399 = scmp.eq.s32.totalorder %s37, 0
      %p400 = por %p398, %p399
      %s402 = sadd.s32 %s401, 1
      %p405 = scmp.eq.s32.totalorder %s31, 1
      %p406 = scmp.ne.s32.totalorder %s401, %s403
      %p407 = scmp.eq.s32.totalorder %s31, 0
      %p408 = por %p406, %p407
      %p409 = scmp.ne.s32.totalorder %s401, %s403
      %p410 = scmp.eq.s32.totalorder %s36, 1
      %p411 = por %p409, %p410
      %p412 = scmp.ne.s32.totalorder %s403, %s404
      %p413 = scmp.eq.s32.totalorder %s36, 0
      %p414 = por %p412, %p413
      %p415 = scmp.ne.s32.totalorder %s403, %s404
      %p416 = scmp.eq.s32.totalorder %s37, 1
      %p417 = por %p415, %p416
      %p419 = scmp.ne.s32.totalorder %s404, %s418
      %p420 = scmp.eq.s32.totalorder %s37, 0
      %p421 = por %p419, %p420
      %s423 = sadd.s32 %s422, 1
      %p426 = scmp.eq.s32.totalorder %s31, 1
      %p427 = scmp.ne.s32.totalorder %s422, %s424
      %p428 = scmp.eq.s32.totalorder %s31, 0
      %p429 = por %p427, %p428
      %p430 = scmp.ne.s32.totalorder %s422, %s424
      %p431 = scmp.eq.s32.totalorder %s36, 1
      %p432 = por %p430, %p431
      %p433 = scmp.ne.s32.totalorder %s424, %s425
      %p434 = scmp.eq.s32.totalorder %s36, 0
      %p435 = por %p433, %p434
      %p436 = scmp.ne.s32.totalorder %s424, %s425
      %p437 = scmp.eq.s32.totalorder %s37, 1
      %p438 = por %p436, %p437
      %p440 = scmp.ne.s32.totalorder %s425, %s439
      %p441 = scmp.eq.s32.totalorder %s37, 0
      %p442 = por %p440, %p441
      %s443 = ssub.s32 %s31, %s38
      %p444 = scmp.eq.s32.totalorder %s443, 0
      %s446 = sadd.s32 %s445, 1
      %s447 = scalar_select %p444, %s445, %s446
      %p450 = pneg %p444
      %p451 = scmp.eq.s32.totalorder %s31, 1
      %p452 = por %p450, %p451
      %p453 = scmp.ne.s32.totalorder %s445, %s448
      %p454 = scmp.eq.s32.totalorder %s31, 0
      %p455 = por %p453, %p454
      %p456 = scmp.ne.s32.totalorder %s445, %s448
      %p457 = scmp.eq.s32.totalorder %s36, 1
      %p458 = por %p456, %p457
      %p459 = scmp.ne.s32.totalorder %s448, %s449
      %p460 = scmp.eq.s32.totalorder %s36, 0
      %p461 = por %p459, %p460
      %p462 = scmp.ne.s32.totalorder %s448, %s449
      %p463 = scmp.eq.s32.totalorder %s37, 1
      %p464 = por %p462, %p463
      %p466 = scmp.ne.s32.totalorder %s449, %s465
      %p467 = scmp.eq.s32.totalorder %s37, 0
      %p468 = por %p466, %p467
      %p469 = scmp.le.s32.totalorder 1, %s31
      %p470 = scmp.lt.s32.totalorder %s31, 3
      %p471 = pnand %p469, %p470
      %p472 = pneg %p471
      // Predicated region
      $region9: #{tpu_custom_call.1} parent=5 // pred_check
        _
      $region10: #{tpu_custom_call.1} parent=5 // pred_check_branch
        %474 = sbr.rel (%p471) target = $region12
      $region11: #{tpu_custom_call.1} parent=5 // pred_region
        %s475 = ssub.s32 %s31, 1
        // Predicated region
        $region13: #{tpu_custom_call.1} parent=11 // pred_check
          %p476 = pneg %p78
        $region14: #{tpu_custom_call.1} parent=11 // pred_check_branch
          %478 = sbr.rel (%p476) target = $region16
        $region15: #{tpu_custom_call.1} parent=11 // pred_region
          _
        $region16: #{tpu_custom_call.1} parent=11 // pred_fallthru
          _
        // Predicated region
        $region17: #{tpu_custom_call.1} parent=11 // pred_check
          %p479 = pneg %p99
        $region18: #{tpu_custom_call.1} parent=11 // pred_check_branch
          %481 = sbr.rel (%p479) target = $region20
        $region19: #{tpu_custom_call.1} parent=11 // pred_region
          _
        $region20: #{tpu_custom_call.1} parent=11 // pred_fallthru
          _
        // Predicated region
        $region21: #{tpu_custom_call.1} parent=11 // pred_check
          %p482 = pneg %p120
        $region22: #{tpu_custom_call.1} parent=11 // pred_check_branch
          %484 = sbr.rel (%p482) target = $region24
        $region23: #{tpu_custom_call.1} parent=11 // pred_region
          _
        $region24: #{tpu_custom_call.1} parent=11 // pred_fallthru
          _
        // Predicated region
        $region25: #{tpu_custom_call.1} parent=11 // pred_check
          %p485 = pneg %p141
        $region26: #{tpu_custom_call.1} parent=11 // pred_check_branch
          %487 = sbr.rel (%p485) target = $region28
        $region27: #{tpu_custom_call.1} parent=11 // pred_region
          _
        $region28: #{tpu_custom_call.1} parent=11 // pred_fallthru
          _
        // Predicated region
        $region29: #{tpu_custom_call.1} parent=11 // pred_check
          %p488 = pneg %p162
        $region30: #{tpu_custom_call.1} parent=11 // pred_check_branch
          %490 = sbr.rel (%p488) target = $region32
        $region31: #{tpu_custom_call.1} parent=11 // pred_region
          %s492 = ssub.s32 256, 256
          %493 = vsyncadd [#allocation3], %s492
          %s494 = sshll.u32 [#allocation2], 4
          %s495 = int_to_ptr.vmem [resolvable:$true] %s494
          %500 = dma.hbm_to_vmem [thread:$0]  %s5, 256, %s495, [#allocation3], 64, 64, 4
        $region32: #{tpu_custom_call.1} parent=11 // pred_fallthru
          _
        // Predicated region
        $region33: #{tpu_custom_call.1} parent=11 // pred_check
          %p501 = pneg %p183
        $region34: #{tpu_custom_call.1} parent=11 // pred_check_branch
          %503 = sbr.rel (%p501) target = $region36
        $region35: #{tpu_custom_call.1} parent=11 // pred_region
          %s505 = ssub.s32 16, 16
          %506 = vsyncadd [#allocation6], %s505
          %s508 = sshll.u32 [#allocation5], 4
          %s509 = int_to_ptr.vmem [resolvable:$true] %s508
          %511 = dma.hbm_to_vmem [thread:$0]  %s6, 16, %s509, [#allocation6]
        $region36: #{tpu_custom_call.1} parent=11 // pred_fallthru
          _
        // Predicated region
        $region37: #{tpu_custom_call.1} parent=11 // pred_check
          %p512 = pneg %p204
        $region38: #{tpu_custom_call.1} parent=11 // pred_check_branch
          %514 = sbr.rel (%p512) target = $region40
        $region39: #{tpu_custom_call.1} parent=11 // pred_region
          %s516 = ssub.s32 256, 256
          %517 = vsyncadd [#allocation6], %s516
          %s518 = sshll.u32 [#allocation7], 4
          %s519 = int_to_ptr.vmem [resolvable:$true] %s518
          %524 = dma.hbm_to_vmem [thread:$0]  %s7, 256, %s519, [#allocation6], 64, 64, 4
        $region40: #{tpu_custom_call.1} parent=11 // pred_fallthru
          _
        // Predicated region
        $region41: #{tpu_custom_call.1} parent=11 // pred_check
          %p525 = pneg %p225
        $region42: #{tpu_custom_call.1} parent=11 // pred_check_branch
          %527 = sbr.rel (%p525) target = $region44
        $region43: #{tpu_custom_call.1} parent=11 // pred_region
          %s529 = ssub.s32 16, 16
          %530 = vsyncadd [#allocation9], %s529
          %s532 = sshll.u32 [#allocation8], 4
          %s533 = int_to_ptr.vmem [resolvable:$true] %s532
          %535 = dma.hbm_to_vmem [thread:$0]  %s8, 16, %s533, [#allocation9]
        $region44: #{tpu_custom_call.1} parent=11 // pred_fallthru
          _
        // Predicated region
        $region45: #{tpu_custom_call.1} parent=11 // pred_check
          %p536 = pneg %p246
        $region46: #{tpu_custom_call.1} parent=11 // pred_check_branch
          %538 = sbr.rel (%p536) target = $region48
        $region47: #{tpu_custom_call.1} parent=11 // pred_region
          %s540 = ssub.s32 16, 16
          %541 = vsyncadd [#allocation9], %s540
          %s543 = sshll.u32 [#allocation10], 4
          %s544 = int_to_ptr.vmem [resolvable:$true] %s543
          %546 = dma.hbm_to_vmem [thread:$0]  %s9, 16, %s544, [#allocation9]
        $region48: #{tpu_custom_call.1} parent=11 // pred_fallthru
          _
        // Predicated region
        $region49: #{tpu_custom_call.1} parent=11 // pred_check
          %p547 = pneg %p267
        $region50: #{tpu_custom_call.1} parent=11 // pred_check_branch
          %549 = sbr.rel (%p547) target = $region52
        $region51: #{tpu_custom_call.1} parent=11 // pred_region
          _
        $region52: #{tpu_custom_call.1} parent=11 // pred_fallthru
          _
        // Predicated region
        $region53: #{tpu_custom_call.1} parent=11 // pred_check
          %p550 = pneg %p288
        $region54: #{tpu_custom_call.1} parent=11 // pred_check_branch
          %552 = sbr.rel (%p550) target = $region56
        $region55: #{tpu_custom_call.1} parent=11 // pred_region
          _
        $region56: #{tpu_custom_call.1} parent=11 // pred_fallthru
          _
        // Predicated region
        $region57: #{tpu_custom_call.1} parent=11 // pred_check
          %p553 = pneg %p309
        $region58: #{tpu_custom_call.1} parent=11 // pred_check_branch
          %555 = sbr.rel (%p553) target = $region60
        $region59: #{tpu_custom_call.1} parent=11 // pred_region
          _
        $region60: #{tpu_custom_call.1} parent=11 // pred_fallthru
          _
        // Predicated region
        $region61: #{tpu_custom_call.1} parent=11 // pred_check
          %p556 = pneg %p330
        $region62: #{tpu_custom_call.1} parent=11 // pred_check_branch
          %558 = sbr.rel (%p556) target = $region64
        $region63: #{tpu_custom_call.1} parent=11 // pred_region
          _
        $region64: #{tpu_custom_call.1} parent=11 // pred_fallthru
          _
        // Predicated region
        $region65: #{tpu_custom_call.1} parent=11 // pred_check
          %p559 = pneg %p351
        $region66: #{tpu_custom_call.1} parent=11 // pred_check_branch
          %561 = sbr.rel (%p559) target = $region68
        $region67: #{tpu_custom_call.1} parent=11 // pred_region
          _
        $region68: #{tpu_custom_call.1} parent=11 // pred_fallthru
          _
        // Predicated region
        $region69: #{tpu_custom_call.1} parent=11 // pred_check
          %p562 = pneg %p372
        $region70: #{tpu_custom_call.1} parent=11 // pred_check_branch
          %564 = sbr.rel (%p562) target = $region72
        $region71: #{tpu_custom_call.1} parent=11 // pred_region
          _
        $region72: #{tpu_custom_call.1} parent=11 // pred_fallthru
          _
        // Predicated region
        $region73: #{tpu_custom_call.1} parent=11 // pred_check
          %p565 = pneg %p393
        $region74: #{tpu_custom_call.1} parent=11 // pred_check_branch
          %567 = sbr.rel (%p565) target = $region76
        $region75: #{tpu_custom_call.1} parent=11 // pred_region
          _
        $region76: #{tpu_custom_call.1} parent=11 // pred_fallthru
          _
        // Predicated region
        $region77: #{tpu_custom_call.1} parent=11 // pred_check
          %p568 = pneg %p414
        $region78: #{tpu_custom_call.1} parent=11 // pred_check_branch
          %570 = sbr.rel (%p568) target = $region80
        $region79: #{tpu_custom_call.1} parent=11 // pred_region
          _
        $region80: #{tpu_custom_call.1} parent=11 // pred_fallthru
          _
        // Predicated region
        $region81: #{tpu_custom_call.1} parent=11 // pred_check
          %p571 = pneg %p435
        $region82: #{tpu_custom_call.1} parent=11 // pred_check_branch
          %573 = sbr.rel (%p571) target = $region84
        $region83: #{tpu_custom_call.1} parent=11 // pred_region
          _
        $region84: #{tpu_custom_call.1} parent=11 // pred_fallthru
          _
      $region12: #{tpu_custom_call.1} parent=5 // pred_fallthru
        _
      %p574 = scmp.lt.s32.totalorder %s31, 2
      // Predicated region
      $region85: #{tpu_custom_call.1} parent=5 // pred_check
        %p575 = pneg %p574
      $region86: #{tpu_custom_call.1} parent=5 // pred_check_branch
        %577 = sbr.rel (%p575) target = $region88
      $region87: #{tpu_custom_call.1} parent=5 // pred_region
        // Predicated region
        $region89: #{tpu_custom_call.1} parent=87 // pred_check
          %p578 = pneg %p51
        $region90: #{tpu_custom_call.1} parent=87 // pred_check_branch
          %580 = sbr.rel (%p578) target = $region92
        $region91: #{tpu_custom_call.1} parent=87 // pred_region
          %p581 = scmp.lt.s32.totalorder %s31, 1
          %s582 = scalar_select %p581, %s31, 1
          %s583 = smul.addr %s582, 8
          %s584 = scalar_lea.vmem %s0, %s583
        $region92: #{tpu_custom_call.1} parent=87 // pred_fallthru
          _
      $region88: #{tpu_custom_call.1} parent=5 // pred_fallthru
        _
      %p585 = scmp.le.s32.totalorder 1, %s31
      %p586 = scmp.lt.s32.totalorder %s31, 3
      %p587 = pnand %p585, %p586
      %p588 = pneg %p587
      // Predicated region
      $region93: #{tpu_custom_call.1} parent=5 // pred_check
        _
      $region94: #{tpu_custom_call.1} parent=5 // pred_check_branch
        %590 = sbr.rel (%p587) target = $region96
      $region95: #{tpu_custom_call.1} parent=5 // pred_region
        %s591 = ssub.s32 %s31, 1
        // Predicated region
        $region97: #{tpu_custom_call.1} parent=95 // pred_check
          %p592 = pneg %p162
        $region98: #{tpu_custom_call.1} parent=95 // pred_check_branch
          %594 = sbr.rel (%p592) target = $region100
        $region99: #{tpu_custom_call.1} parent=95 // pred_region
          %595 = dma.done [#allocation3], 256
        $region100: #{tpu_custom_call.1} parent=95 // pred_fallthru
          _
        // Predicated region
        $region101: #{tpu_custom_call.1} parent=95 // pred_check
          %p596 = pneg %p183
        $region102: #{tpu_custom_call.1} parent=95 // pred_check_branch
          %598 = sbr.rel (%p596) target = $region104
        $region103: #{tpu_custom_call.1} parent=95 // pred_region
          %599 = dma.done [#allocation6], 16
        $region104: #{tpu_custom_call.1} parent=95 // pred_fallthru
          _
        // Predicated region
        $region105: #{tpu_custom_call.1} parent=95 // pred_check
          %p600 = pneg %p204
        $region106: #{tpu_custom_call.1} parent=95 // pred_check_branch
          %602 = sbr.rel (%p600) target = $region108
        $region107: #{tpu_custom_call.1} parent=95 // pred_region
          %603 = dma.done [#allocation6], 256
        $region108: #{tpu_custom_call.1} parent=95 // pred_fallthru
          _
        // Predicated region
        $region109: #{tpu_custom_call.1} parent=95 // pred_check
          %p604 = pneg %p225
        $region110: #{tpu_custom_call.1} parent=95 // pred_check_branch
          %606 = sbr.rel (%p604) target = $region112
        $region111: #{tpu_custom_call.1} parent=95 // pred_region
          %607 = dma.done [#allocation9], 16
        $region112: #{tpu_custom_call.1} parent=95 // pred_fallthru
          _
        // Predicated region
        $region113: #{tpu_custom_call.1} parent=95 // pred_check
          %p608 = pneg %p246
        $region114: #{tpu_custom_call.1} parent=95 // pred_check_branch
          %610 = sbr.rel (%p608) target = $region116
        $region115: #{tpu_custom_call.1} parent=95 // pred_region
          %611 = dma.done [#allocation9], 16
        $region116: #{tpu_custom_call.1} parent=95 // pred_fallthru
          _
        %p612 = scmp.lt.s32.totalorder %s36, 1
        %s613 = scalar_select %p612, %s36, 1
        %s614 = smul.addr %s613, 8
        %s615 = scalar_lea.vmem %s0, %s614
        %p616 = pneg %p57
        %p617 = pneg %p54
        %p618 = pneg %p78
        %p619 = pneg %p75
        %p620 = pneg %p99
        %p621 = pneg %p96
        %p622 = pneg %p120
        %p623 = pneg %p117
        %p624 = pneg %p141
        %p625 = pneg %p138
        %p626 = pneg %p162
        %p627 = pneg %p159
        %p628 = pneg %p183
        %p629 = pneg %p180
        %p630 = pneg %p204
        %p631 = pneg %p201
        %p632 = pneg %p225
        %p633 = pneg %p222
        %p634 = pneg %p246
        %p635 = pneg %p243
        %p636 = pneg %p267
        %p637 = pneg %p264
        %p638 = pneg %p288
        %p639 = pneg %p285
        %p640 = pneg %p309
        %p641 = pneg %p306
        %p642 = pneg %p330
        %p643 = pneg %p327
        %p644 = pneg %p351
        %p645 = pneg %p348
        %p646 = pneg %p372
        %p647 = pneg %p369
        %p648 = pneg %p393
        %p649 = pneg %p390
        %p650 = pneg %p414
        %p651 = pneg %p411
        %p652 = pneg %p435
        %p653 = pneg %p432
        %p654 = pneg %p461
        %p655 = pneg %p458
        %s656 = sand.u32 %s448, 1
        %s657 = scalar_lea.sflag [#allocation4], %s656
        %s658 = sand.u32 %s448, 1
        %s659 = smul.addr %s658, 8
        %s660 = scalar_lea.vmem [#allocation11], %s659
        %p661 = scmp.lt.s32.totalorder %s36, 1
        %s662 = scalar_select %p661, %s36, 1
        %s663 = smul.addr %s662, 8
        %s664 = scalar_lea.vmem %s0, %s663
        %v666 = vld [vmem:[%s664] sm:$0xff]
        %vm667 = vcmask 261120
        %v668 = vsel %vm667, %v666, 0.0
        %669 = vadd.xlane.f32.xlu0 %v668
        %v670 = vpop.xlane.xlu0 %669
        %v671 = vrcp.pop 32.0
        %v672 = vmul.f32 %v670, %v671
        %v673 = vmul.f32 %v666, %v666
        %v674 = vsel %vm667, %v673, 0.0
        %675 = vadd.xlane.f32.xlu0 %v674
        %v676 = vpop.xlane.xlu0 %675
        %v677 = vmul.f32 %v676, %v671
        %v678 = vmul.f32 %v672, %v672
        %v679 = vsub.f32 %v677, %v678
        %v680 = vsub.f32 %v666, %v672
        %v681 = vadd.f32 %v679, 1e-05
        %v682 = vrsqrt.pop %v681
        %v683 = vmul.f32 %v680, %v682
        %v684 = vld [vmem:[#allocation10] sm:$0x1]
        %v686 = vlaneseq
        %v687 = vshrl.u32 %v686, 7
        %v688 = vsub.s32 0, %v687
        %v689 = vrot.slane %v684, %v688
        %v691 = vmul.f32 %v683, %v689
        %v692 = vld [vmem:[%s10] sm:$0x1]
        %v694 = vlaneseq
        %v695 = vshrl.u32 %v694, 7
        %v696 = vsub.s32 0, %v695
        %v697 = vrot.slane %v692, %v696
        %v699 = vadd.f32 %v691, %v697
        %v700 = vpack.c.bf16 %v699, %v699
        %v701 = vld [vmem:[%s1] sm:$0xf]
        %v702 = vld [vmem:[%s1 + $0x4] sm:$0xf]
        %v703 = vld [vmem:[%s1 + $0x8] sm:$0xf]
        %v704 = vld [vmem:[%s1 + $0xc] sm:$0xf]
        %v705 = vld [vmem:[%s2] sm:$0x1]
        %v707 = vlaneseq
        %v708 = vshrl.u32 %v707, 7
        %v709 = vsub.s32 0, %v708
        %v710 = vrot.slane %v705, %v709
        %v716 = vunpack.c.l.b16 %v701
        %v717 = vunpack.c.l.b16 %v702
        %v718 = vunpack.c.l.b16 %v703
        %v719 = vunpack.c.l.b16 %v704
        %v720 = vpack.c.b16 %v717, %v716
        %v721 = vpack.c.b16 %v719, %v718
        %v725 = vsel %vm667, %v700, 0
        %727 = vmatprep.subr.bf16.mxu0 0
        %728 = vmatpush1.bf16.msra.mxu0 %v720
        %729 = vmatprep.subr.bf16.mxu0 0
        %730 = vmatpush1.bf16.msra.mxu0 %v721
        %731 = vmatprep.subr.bf16.mxu0 0
        %732 = vmatpush1.bf16.msra.mxu0 0
        %733 = vmatprep.subr.bf16.mxu0 0
        %734 = vmatpush1.bf16.msra.mxu0 0
        %735 = vmatprep.subr.bf16.mxu0 0
        %736 = vmatpush1.bf16.msra.mxu0 0
        %737 = vmatprep.subr.bf16.mxu0 0
        %738 = vmatpush1.bf16.msra.mxu0 0
        %739 = vmatprep.subr.bf16.mxu0 0
        %740 = vmatpush1.bf16.msra.mxu0 0
        %741 = vmatprep.subr.bf16.mxu0 0
        %742 = vmatpush1.bf16.msra.mxu0 0
        %743 = vmatprep.subr.bf16.mxu0 0
        %744 = vmatpush1.bf16.msra.mxu0 0
        %745 = vmatprep.subr.bf16.mxu0 0
        %746 = vmatpush1.bf16.msra.mxu0 0
        %747 = vmatprep.subr.bf16.mxu0 0
        %748 = vmatpush1.bf16.msra.mxu0 0
        %749 = vmatprep.subr.bf16.mxu0 0
        %750 = vmatpush1.bf16.msra.mxu0 0
        %751 = vmatprep.subr.bf16.mxu0 0
        %752 = vmatpush1.bf16.msra.mxu0 0
        %753 = vmatprep.subr.bf16.mxu0 0
        %754 = vmatpush1.bf16.msra.mxu0 0
        %755 = vmatprep.subr.bf16.mxu0 0
        %756 = vmatpush1.bf16.msra.mxu0 0
        %757 = vmatprep.subr.bf16.mxu0 0
        %758 = vmatpush1.bf16.msra.mxu0 0
        %759 = vmatprep.mubr.bf16.mxu0 0
        %760 = vmatmul.mubr.bf16.gmra.mrb[0].mxu0 %v725
        %v761 = vpop.f32.mrb[0].mxu0
        %v762 = vadd.f32 %v710, %v761
        %v763 = vpop.f32.mrb[0].mxu0
        %v764 = vpop.f32.mrb[0].mxu0
        %v765 = vpop.f32.mrb[0].mxu0
        %766 = vdwg.mxu0
        %v767 = vld [vmem:[%s3] sm:$0xf]
        %v768 = vld [vmem:[%s3 + $0x4] sm:$0xf]
        %v769 = vld [vmem:[%s3 + $0x8] sm:$0xf]
        %v770 = vld [vmem:[%s3 + $0xc] sm:$0xf]
        %v771 = vld [vmem:[%s4] sm:$0x1]
        %v773 = vlaneseq
        %v774 = vshrl.u32 %v773, 7
        %v775 = vsub.s32 0, %v774
        %v776 = vrot.slane %v771, %v775
        %v782 = vunpack.c.l.b16 %v767
        %v783 = vunpack.c.l.b16 %v768
        %v784 = vunpack.c.l.b16 %v769
        %v785 = vunpack.c.l.b16 %v770
        %v786 = vpack.c.b16 %v783, %v782
        %v787 = vpack.c.b16 %v785, %v784
        %790 = vmatprep.subr.bf16.mxu0 0
        %791 = vmatpush1.bf16.msra.mxu0 %v786
        %792 = vmatprep.subr.bf16.mxu0 0
        %793 = vmatpush1.bf16.msra.mxu0 %v787
        %794 = vmatprep.subr.bf16.mxu0 0
        %795 = vmatpush1.bf16.msra.mxu0 0
        %796 = vmatprep.subr.bf16.mxu0 0
        %797 = vmatpush1.bf16.msra.mxu0 0
        %798 = vmatprep.subr.bf16.mxu0 0
        %799 = vmatpush1.bf16.msra.mxu0 0
        %800 = vmatprep.subr.bf16.mxu0 0
        %801 = vmatpush1.bf16.msra.mxu0 0
        %802 = vmatprep.subr.bf16.mxu0 0
        %803 = vmatpush1.bf16.msra.mxu0 0
        %804 = vmatprep.subr.bf16.mxu0 0
        %805 = vmatpush1.bf16.msra.mxu0 0
        %806 = vmatprep.subr.bf16.mxu0 0
        %807 = vmatpush1.bf16.msra.mxu0 0
        %808 = vmatprep.subr.bf16.mxu0 0
        %809 = vmatpush1.bf16.msra.mxu0 0
        %810 = vmatprep.subr.bf16.mxu0 0
        %811 = vmatpush1.bf16.msra.mxu0 0
        %812 = vmatprep.subr.bf16.mxu0 0
        %813 = vmatpush1.bf16.msra.mxu0 0
        %814 = vmatprep.subr.bf16.mxu0 0
        %815 = vmatpush1.bf16.msra.mxu0 0
        %816 = vmatprep.subr.bf16.mxu0 0
        %817 = vmatpush1.bf16.msra.mxu0 0
        %818 = vmatprep.subr.bf16.mxu0 0
        %819 = vmatpush1.bf16.msra.mxu0 0
        %820 = vmatprep.subr.bf16.mxu0 0
        %821 = vmatpush1.bf16.msra.mxu0 0
        %822 = vmatprep.mubr.bf16.mxu0 0
        %823 = vmatmul.mubr.bf16.gmra.mrb[0].mxu0 %v725
        %v824 = vpop.f32.mrb[0].mxu0
        %v825 = vadd.f32 %v776, %v824
        %v826 = vpop.f32.mrb[0].mxu0
        %v827 = vpop.f32.mrb[0].mxu0
        %v828 = vpop.f32.mrb[0].mxu0
        %829 = vdwg.mxu0
        %v830 = vld [vmem:[#allocation2] sm:$0xf]
        %v831 = vld [vmem:[#allocation2 + $0x4] sm:$0xf]
        %v832 = vld [vmem:[#allocation2 + $0x8] sm:$0xf]
        %v833 = vld [vmem:[#allocation2 + $0xc] sm:$0xf]
        %v834 = vld [vmem:[#allocation5] sm:$0x1]
        %v836 = vlaneseq
        %v837 = vshrl.u32 %v836, 7
        %v838 = vsub.s32 0, %v837
        %v839 = vrot.slane %v834, %v838
        %v845 = vunpack.c.l.b16 %v830
        %v846 = vunpack.c.l.b16 %v831
        %v847 = vunpack.c.l.b16 %v832
        %v848 = vunpack.c.l.b16 %v833
        %v849 = vpack.c.b16 %v846, %v845
        %v850 = vpack.c.b16 %v848, %v847
        %853 = vmatprep.subr.bf16.mxu0 0
        %854 = vmatpush1.bf16.msra.mxu0 %v849
        %855 = vmatprep.subr.bf16.mxu0 0
        %856 = vmatpush1.bf16.msra.mxu0 %v850
        %857 = vmatprep.subr.bf16.mxu0 0
        %858 = vmatpush1.bf16.msra.mxu0 0
        %859 = vmatprep.subr.bf16.mxu0 0
        %860 = vmatpush1.bf16.msra.mxu0 0
        %861 = vmatprep.subr.bf16.mxu0 0
        %862 = vmatpush1.bf16.msra.mxu0 0
        %863 = vmatprep.subr.bf16.mxu0 0
        %864 = vmatpush1.bf16.msra.mxu0 0
        %865 = vmatprep.subr.bf16.mxu0 0
        %866 = vmatpush1.bf16.msra.mxu0 0
        %867 = vmatprep.subr.bf16.mxu0 0
        %868 = vmatpush1.bf16.msra.mxu0 0
        %869 = vmatprep.subr.bf16.mxu0 0
        %870 = vmatpush1.bf16.msra.mxu0 0
        %871 = vmatprep.subr.bf16.mxu0 0
        %872 = vmatpush1.bf16.msra.mxu0 0
        %873 = vmatprep.subr.bf16.mxu0 0
        %874 = vmatpush1.bf16.msra.mxu0 0
        %875 = vmatprep.subr.bf16.mxu0 0
        %876 = vmatpush1.bf16.msra.mxu0 0
        %877 = vmatprep.subr.bf16.mxu0 0
        %878 = vmatpush1.bf16.msra.mxu0 0
        %879 = vmatprep.subr.bf16.mxu0 0
        %880 = vmatpush1.bf16.msra.mxu0 0
        %881 = vmatprep.subr.bf16.mxu0 0
        %882 = vmatpush1.bf16.msra.mxu0 0
        %883 = vmatprep.subr.bf16.mxu0 0
        %884 = vmatpush1.bf16.msra.mxu0 0
        %885 = vmatprep.mubr.bf16.mxu0 0
        %886 = vmatmul.mubr.bf16.gmra.mrb[0].mxu0 %v725
        %v887 = vpop.f32.mrb[0].mxu0
        %v888 = vadd.f32 %v839, %v887
        %v889 = vpop.f32.mrb[0].mxu0
        %v890 = vpop.f32.mrb[0].mxu0
        %v891 = vpop.f32.mrb[0].mxu0
        %892 = vdwg.mxu0
        %894 = vrot.lane.b32.xlu0 %v762, 120
        %v895 = vpop.permute.xlu0 %894
        %897 = vrot.lane.b32.xlu0 %v762, 112
        %v898 = vpop.permute.xlu0 %897
        %900 = vrot.lane.b32.xlu0 %v762, 104
        %v901 = vpop.permute.xlu0 %900
        %v903 = vcombine.low %v762, %v898
        %v904 = vcombine.high %v762, %v898
        %v906 = vunpack.c.l.s4 1983009808
        %v907 = vunpack.c.0.s8 %v906
        %v908 = vlaneseq
        %v909 = vshrl.u32 %v908, 7
        %v910 = vsub.s32 %v907, %v909
        %v911 = vrot.slane %v903, %v910
        %v913 = vunpack.c.l.s4 1983009808
        %v914 = vunpack.c.0.s8 %v913
        %v915 = vlaneseq
        %v916 = vshrl.u32 %v915, 7
        %v917 = vsub.s32 %v914, %v916
        %v918 = vrot.slane %v904, %v917
        %v919 = vcombine.low %v895, %v901
        %v920 = vcombine.high %v895, %v901
        %v922 = vunpack.c.l.s4 1983009808
        %v923 = vunpack.c.0.s8 %v922
        %v924 = vlaneseq
        %v925 = vshrl.u32 %v924, 7
        %v926 = vsub.s32 %v923, %v925
        %v927 = vrot.slane %v919, %v926
        %v929 = vunpack.c.l.s4 1983009808
        %v930 = vunpack.c.0.s8 %v929
        %v931 = vlaneseq
        %v932 = vshrl.u32 %v931, 7
        %v933 = vsub.s32 %v930, %v932
        %v934 = vrot.slane %v920, %v933
        %v935 = vcombine.low %v911, %v927
        %v936 = vcombine.high %v911, %v927
        %v938 = vunpack.c.l.s4 1934713408
        %v939 = vunpack.c.0.s8 %v938
        %v940 = vlaneseq
        %v941 = vshrl.u32 %v940, 7
        %v942 = vsub.s32 %v939, %v941
        %v943 = vrot.slane %v935, %v942
        %v945 = vunpack.c.l.s4 1934713408
        %v946 = vunpack.c.0.s8 %v945
        %v947 = vlaneseq
        %v948 = vshrl.u32 %v947, 7
        %v949 = vsub.s32 %v946, %v948
        %v950 = vrot.slane %v936, %v949
        %v951 = vcombine.low %v918, %v934
        %v952 = vcombine.high %v918, %v934
        %v954 = vunpack.c.l.s4 1934713408
        %v955 = vunpack.c.0.s8 %v954
        %v956 = vlaneseq
        %v957 = vshrl.u32 %v956, 7
        %v958 = vsub.s32 %v955, %v957
        %v959 = vrot.slane %v951, %v958
        %v961 = vunpack.c.l.s4 1934713408
        %v962 = vunpack.c.0.s8 %v961
        %v963 = vlaneseq
        %v964 = vshrl.u32 %v963, 7
        %v965 = vsub.s32 %v962, %v964
        %v966 = vrot.slane %v952, %v965
        %v967 = vcombine.high %v943, 0.0
        %v968 = vcombine.high %v950, 0.0
        %v969 = vcombine.high %v959, 0.0
        %v970 = vcombine.high %v966, 0.0
        %v971 = vcombine.low %v943, %v950
        %v973 = vunpack.c.l.s4 1983009808
        %v974 = vunpack.c.0.s8 %v973
        %v975 = vlaneseq
        %v976 = vshrl.u32 %v975, 7
        %v977 = vsub.s32 %v974, %v976
        %v978 = vrot.slane %v971, %v977
        %v979 = vcombine.low %v967, %v968
        %v981 = vunpack.c.l.s4 1983009808
        %v982 = vunpack.c.0.s8 %v981
        %v983 = vlaneseq
        %v984 = vshrl.u32 %v983, 7
        %v985 = vsub.s32 %v982, %v984
        %v986 = vrot.slane %v979, %v985
        %v987 = vcombine.low %v959, %v966
        %v989 = vunpack.c.l.s4 1983009808
        %v990 = vunpack.c.0.s8 %v989
        %v991 = vlaneseq
        %v992 = vshrl.u32 %v991, 7
        %v993 = vsub.s32 %v990, %v992
        %v994 = vrot.slane %v987, %v993
        %v995 = vcombine.low %v969, %v970
        %v997 = vunpack.c.l.s4 1983009808
        %v998 = vunpack.c.0.s8 %v997
        %v999 = vlaneseq
        %v1000 = vshrl.u32 %v999, 7
        %v1001 = vsub.s32 %v998, %v1000
        %v1002 = vrot.slane %v995, %v1001
        %v1003 = vcombine.low %v978, %v986
        %v1004 = vcombine.high %v978, %v986
        %v1006 = vunpack.c.l.s4 1934713408
        %v1007 = vunpack.c.0.s8 %v1006
        %v1008 = vlaneseq
        %v1009 = vshrl.u32 %v1008, 7
        %v1010 = vsub.s32 %v1007, %v1009
        %v1011 = vrot.slane %v1003, %v1010
        %v1013 = vunpack.c.l.s4 1934713408
        %v1014 = vunpack.c.0.s8 %v1013
        %v1015 = vlaneseq
        %v1016 = vshrl.u32 %v1015, 7
        %v1017 = vsub.s32 %v1014, %v1016
        %v1018 = vrot.slane %v1004, %v1017
        %v1019 = vcombine.low %v994, %v1002
        %v1020 = vcombine.high %v994, %v1002
        %v1022 = vunpack.c.l.s4 1934713408
        %v1023 = vunpack.c.0.s8 %v1022
        %v1024 = vlaneseq
        %v1025 = vshrl.u32 %v1024, 7
        %v1026 = vsub.s32 %v1023, %v1025
        %v1027 = vrot.slane %v1019, %v1026
        %v1029 = vunpack.c.l.s4 1934713408
        %v1030 = vunpack.c.0.s8 %v1029
        %v1031 = vlaneseq
        %v1032 = vshrl.u32 %v1031, 7
        %v1033 = vsub.s32 %v1030, %v1032
        %v1034 = vrot.slane %v1020, %v1033
        %v1035 = vcombine.low %v1011, %v1027
        %v1036 = vcombine.high %v1011, %v1027
        %v1037 = vcombine.low %v1018, %v1034
        %v1038 = vcombine.high %v1018, %v1034
        %v1039 = vpack.c.bf16 %v1035, %v1035
        %v1040 = vpack.c.bf16 %v1036, %v1036
        %v1041 = vpack.c.bf16 %v1037, %v1037
        %v1042 = vpack.c.bf16 %v1038, %v1038
        %1044 = vrot.lane.b32.xlu0 %v825, 120
        %v1045 = vpop.permute.xlu0 %1044
        %1047 = vrot.lane.b32.xlu0 %v825, 112
        %v1048 = vpop.permute.xlu0 %1047
        %1050 = vrot.lane.b32.xlu0 %v825, 104
        %v1051 = vpop.permute.xlu0 %1050
        %v1053 = vcombine.low %v825, %v1048
        %v1054 = vcombine.high %v825, %v1048
        %v1056 = vunpack.c.l.s4 1983009808
        %v1057 = vunpack.c.0.s8 %v1056
        %v1058 = vlaneseq
        %v1059 = vshrl.u32 %v1058, 7
        %v1060 = vsub.s32 %v1057, %v1059
        %v1061 = vrot.slane %v1053, %v1060
        %v1063 = vunpack.c.l.s4 1983009808
        %v1064 = vunpack.c.0.s8 %v1063
        %v1065 = vlaneseq
        %v1066 = vshrl.u32 %v1065, 7
        %v1067 = vsub.s32 %v1064, %v1066
        %v1068 = vrot.slane %v1054, %v1067
        %v1069 = vcombine.low %v1045, %v1051
        %v1070 = vcombine.high %v1045, %v1051
        %v1072 = vunpack.c.l.s4 1983009808
        %v1073 = vunpack.c.0.s8 %v1072
        %v1074 = vlaneseq
        %v1075 = vshrl.u32 %v1074, 7
        %v1076 = vsub.s32 %v1073, %v1075
        %v1077 = vrot.slane %v1069, %v1076
        %v1079 = vunpack.c.l.s4 1983009808
        %v1080 = vunpack.c.0.s8 %v1079
        %v1081 = vlaneseq
        %v1082 = vshrl.u32 %v1081, 7
        %v1083 = vsub.s32 %v1080, %v1082
        %v1084 = vrot.slane %v1070, %v1083
        %v1085 = vcombine.low %v1061, %v1077
        %v1086 = vcombine.high %v1061, %v1077
        %v1088 = vunpack.c.l.s4 1934713408
        %v1089 = vunpack.c.0.s8 %v1088
        %v1090 = vlaneseq
        %v1091 = vshrl.u32 %v1090, 7
        %v1092 = vsub.s32 %v1089, %v1091
        %v1093 = vrot.slane %v1085, %v1092
        %v1095 = vunpack.c.l.s4 1934713408
        %v1096 = vunpack.c.0.s8 %v1095
        %v1097 = vlaneseq
        %v1098 = vshrl.u32 %v1097, 7
        %v1099 = vsub.s32 %v1096, %v1098
        %v1100 = vrot.slane %v1086, %v1099
        %v1101 = vcombine.low %v1068, %v1084
        %v1102 = vcombine.high %v1068, %v1084
        %v1104 = vunpack.c.l.s4 1934713408
        %v1105 = vunpack.c.0.s8 %v1104
        %v1106 = vlaneseq
        %v1107 = vshrl.u32 %v1106, 7
        %v1108 = vsub.s32 %v1105, %v1107
        %v1109 = vrot.slane %v1101, %v1108
        %v1111 = vunpack.c.l.s4 1934713408
        %v1112 = vunpack.c.0.s8 %v1111
        %v1113 = vlaneseq
        %v1114 = vshrl.u32 %v1113, 7
        %v1115 = vsub.s32 %v1112, %v1114
        %v1116 = vrot.slane %v1102, %v1115
        %v1117 = vcombine.high %v1093, 0.0
        %v1118 = vcombine.high %v1100, 0.0
        %v1119 = vcombine.high %v1109, 0.0
        %v1120 = vcombine.high %v1116, 0.0
        %v1121 = vcombine.low %v1093, %v1100
        %v1123 = vunpack.c.l.s4 1983009808
        %v1124 = vunpack.c.0.s8 %v1123
        %v1125 = vlaneseq
        %v1126 = vshrl.u32 %v1125, 7
        %v1127 = vsub.s32 %v1124, %v1126
        %v1128 = vrot.slane %v1121, %v1127
        %v1129 = vcombine.low %v1117, %v1118
        %v1131 = vunpack.c.l.s4 1983009808
        %v1132 = vunpack.c.0.s8 %v1131
        %v1133 = vlaneseq
        %v1134 = vshrl.u32 %v1133, 7
        %v1135 = vsub.s32 %v1132, %v1134
        %v1136 = vrot.slane %v1129, %v1135
        %v1137 = vcombine.low %v1109, %v1116
        %v1139 = vunpack.c.l.s4 1983009808
        %v1140 = vunpack.c.0.s8 %v1139
        %v1141 = vlaneseq
        %v1142 = vshrl.u32 %v1141, 7
        %v1143 = vsub.s32 %v1140, %v1142
        %v1144 = vrot.slane %v1137, %v1143
        %v1145 = vcombine.low %v1119, %v1120
        %v1147 = vunpack.c.l.s4 1983009808
        %v1148 = vunpack.c.0.s8 %v1147
        %v1149 = vlaneseq
        %v1150 = vshrl.u32 %v1149, 7
        %v1151 = vsub.s32 %v1148, %v1150
        %v1152 = vrot.slane %v1145, %v1151
        %v1153 = vcombine.low %v1128, %v1136
        %v1154 = vcombine.high %v1128, %v1136
        %v1156 = vunpack.c.l.s4 1934713408
        %v1157 = vunpack.c.0.s8 %v1156
        %v1158 = vlaneseq
        %v1159 = vshrl.u32 %v1158, 7
        %v1160 = vsub.s32 %v1157, %v1159
        %v1161 = vrot.slane %v1153, %v1160
        %v1163 = vunpack.c.l.s4 1934713408
        %v1164 = vunpack.c.0.s8 %v1163
        %v1165 = vlaneseq
        %v1166 = vshrl.u32 %v1165, 7
        %v1167 = vsub.s32 %v1164, %v1166
        %v1168 = vrot.slane %v1154, %v1167
        %v1169 = vcombine.low %v1144, %v1152
        %v1170 = vcombine.high %v1144, %v1152
        %v1172 = vunpack.c.l.s4 1934713408
        %v1173 = vunpack.c.0.s8 %v1172
        %v1174 = vlaneseq
        %v1175 = vshrl.u32 %v1174, 7
        %v1176 = vsub.s32 %v1173, %v1175
        %v1177 = vrot.slane %v1169, %v1176
        %v1179 = vunpack.c.l.s4 1934713408
        %v1180 = vunpack.c.0.s8 %v1179
        %v1181 = vlaneseq
        %v1182 = vshrl.u32 %v1181, 7
        %v1183 = vsub.s32 %v1180, %v1182
        %v1184 = vrot.slane %v1170, %v1183
        %v1185 = vcombine.low %v1161, %v1177
        %v1186 = vcombine.high %v1161, %v1177
        %v1187 = vcombine.low %v1168, %v1184
        %v1188 = vcombine.high %v1168, %v1184
        %v1189 = vpack.c.bf16 %v1185, %v1185
        %v1190 = vpack.c.bf16 %v1186, %v1186
        %v1191 = vpack.c.bf16 %v1187, %v1187
        %v1192 = vpack.c.bf16 %v1188, %v1188
        %1194 = vrot.lane.b32.xlu0 %v888, 120
        %v1195 = vpop.permute.xlu0 %1194
        %1197 = vrot.lane.b32.xlu0 %v888, 112
        %v1198 = vpop.permute.xlu0 %1197
        %1200 = vrot.lane.b32.xlu0 %v888, 104
        %v1201 = vpop.permute.xlu0 %1200
        %v1203 = vcombine.low %v888, %v1198
        %v1204 = vcombine.high %v888, %v1198
        %v1206 = vunpack.c.l.s4 1983009808
        %v1207 = vunpack.c.0.s8 %v1206
        %v1208 = vlaneseq
        %v1209 = vshrl.u32 %v1208, 7
        %v1210 = vsub.s32 %v1207, %v1209
        %v1211 = vrot.slane %v1203, %v1210
        %v1213 = vunpack.c.l.s4 1983009808
        %v1214 = vunpack.c.0.s8 %v1213
        %v1215 = vlaneseq
        %v1216 = vshrl.u32 %v1215, 7
        %v1217 = vsub.s32 %v1214, %v1216
        %v1218 = vrot.slane %v1204, %v1217
        %v1219 = vcombine.low %v1195, %v1201
        %v1220 = vcombine.high %v1195, %v1201
        %v1222 = vunpack.c.l.s4 1983009808
        %v1223 = vunpack.c.0.s8 %v1222
        %v1224 = vlaneseq
        %v1225 = vshrl.u32 %v1224, 7
        %v1226 = vsub.s32 %v1223, %v1225
        %v1227 = vrot.slane %v1219, %v1226
        %v1229 = vunpack.c.l.s4 1983009808
        %v1230 = vunpack.c.0.s8 %v1229
        %v1231 = vlaneseq
        %v1232 = vshrl.u32 %v1231, 7
        %v1233 = vsub.s32 %v1230, %v1232
        %v1234 = vrot.slane %v1220, %v1233
        %v1235 = vcombine.low %v1211, %v1227
        %v1236 = vcombine.high %v1211, %v1227
        %v1238 = vunpack.c.l.s4 1934713408
        %v1239 = vunpack.c.0.s8 %v1238
        %v1240 = vlaneseq
        %v1241 = vshrl.u32 %v1240, 7
        %v1242 = vsub.s32 %v1239, %v1241
        %v1243 = vrot.slane %v1235, %v1242
        %v1245 = vunpack.c.l.s4 1934713408
        %v1246 = vunpack.c.0.s8 %v1245
        %v1247 = vlaneseq
        %v1248 = vshrl.u32 %v1247, 7
        %v1249 = vsub.s32 %v1246, %v1248
        %v1250 = vrot.slane %v1236, %v1249
        %v1251 = vcombine.low %v1218, %v1234
        %v1252 = vcombine.high %v1218, %v1234
        %v1254 = vunpack.c.l.s4 1934713408
        %v1255 = vunpack.c.0.s8 %v1254
        %v1256 = vlaneseq
        %v1257 = vshrl.u32 %v1256, 7
        %v1258 = vsub.s32 %v1255, %v1257
        %v1259 = vrot.slane %v1251, %v1258
        %v1261 = vunpack.c.l.s4 1934713408
        %v1262 = vunpack.c.0.s8 %v1261
        %v1263 = vlaneseq
        %v1264 = vshrl.u32 %v1263, 7
        %v1265 = vsub.s32 %v1262, %v1264
        %v1266 = vrot.slane %v1252, %v1265
        %v1267 = vcombine.high %v1243, 0.0
        %v1268 = vcombine.high %v1250, 0.0
        %v1269 = vcombine.high %v1259, 0.0
        %v1270 = vcombine.high %v1266, 0.0
        %v1271 = vcombine.low %v1243, %v1250
        %v1273 = vunpack.c.l.s4 1983009808
        %v1274 = vunpack.c.0.s8 %v1273
        %v1275 = vlaneseq
        %v1276 = vshrl.u32 %v1275, 7
        %v1277 = vsub.s32 %v1274, %v1276
        %v1278 = vrot.slane %v1271, %v1277
        %v1279 = vcombine.low %v1267, %v1268
        %v1281 = vunpack.c.l.s4 1983009808
        %v1282 = vunpack.c.0.s8 %v1281
        %v1283 = vlaneseq
        %v1284 = vshrl.u32 %v1283, 7
        %v1285 = vsub.s32 %v1282, %v1284
        %v1286 = vrot.slane %v1279, %v1285
        %v1287 = vcombine.low %v1259, %v1266
        %v1289 = vunpack.c.l.s4 1983009808
        %v1290 = vunpack.c.0.s8 %v1289
        %v1291 = vlaneseq
        %v1292 = vshrl.u32 %v1291, 7
        %v1293 = vsub.s32 %v1290, %v1292
        %v1294 = vrot.slane %v1287, %v1293
        %v1295 = vcombine.low %v1269, %v1270
        %v1297 = vunpack.c.l.s4 1983009808
        %v1298 = vunpack.c.0.s8 %v1297
        %v1299 = vlaneseq
        %v1300 = vshrl.u32 %v1299, 7
        %v1301 = vsub.s32 %v1298, %v1300
        %v1302 = vrot.slane %v1295, %v1301
        %v1303 = vcombine.low %v1278, %v1286
        %v1304 = vcombine.high %v1278, %v1286
        %v1306 = vunpack.c.l.s4 1934713408
        %v1307 = vunpack.c.0.s8 %v1306
        %v1308 = vlaneseq
        %v1309 = vshrl.u32 %v1308, 7
        %v1310 = vsub.s32 %v1307, %v1309
        %v1311 = vrot.slane %v1303, %v1310
        %v1313 = vunpack.c.l.s4 1934713408
        %v1314 = vunpack.c.0.s8 %v1313
        %v1315 = vlaneseq
        %v1316 = vshrl.u32 %v1315, 7
        %v1317 = vsub.s32 %v1314, %v1316
        %v1318 = vrot.slane %v1304, %v1317
        %v1319 = vcombine.low %v1294, %v1302
        %v1320 = vcombine.high %v1294, %v1302
        %v1322 = vunpack.c.l.s4 1934713408
        %v1323 = vunpack.c.0.s8 %v1322
        %v1324 = vlaneseq
        %v1325 = vshrl.u32 %v1324, 7
        %v1326 = vsub.s32 %v1323, %v1325
        %v1327 = vrot.slane %v1319, %v1326
        %v1329 = vunpack.c.l.s4 1934713408
        %v1330 = vunpack.c.0.s8 %v1329
        %v1331 = vlaneseq
        %v1332 = vshrl.u32 %v1331, 7
        %v1333 = vsub.s32 %v1330, %v1332
        %v1334 = vrot.slane %v1320, %v1333
        %v1335 = vcombine.low %v1311, %v1327
        %v1336 = vcombine.high %v1311, %v1327
        %v1337 = vcombine.low %v1318, %v1334
        %v1338 = vcombine.high %v1318, %v1334
        %v1339 = vpack.c.bf16 %v1335, %v1335
        %v1340 = vpack.c.bf16 %v1336, %v1336
        %v1341 = vpack.c.bf16 %v1337, %v1337
        %v1342 = vpack.c.bf16 %v1338, %v1338
        %vm1343 = vcmask 64512
        %v1345 = vsel %vm1343, %v1039, 0
        %v1348 = vsel %vm1343, %v1189, 0
        %1350 = vmatprep.subr.bf16.mxu0 0
        %1351 = vmatpush1.bf16.xpose.msra.mxu0 %v1348
        %1352 = vmatprep.subr.bf16.mxu0 0
        %1353 = vmatpush1.bf16.xpose.msra.mxu0 0
        %1354 = vmatprep.subr.bf16.mxu0 0
        %1355 = vmatpush1.bf16.xpose.msra.mxu0 0
        %1356 = vmatprep.subr.bf16.mxu0 0
        %1357 = vmatpush1.bf16.xpose.msra.mxu0 0
        %1358 = vmatprep.subr.bf16.mxu0 0
        %1359 = vmatpush1.bf16.xpose.msra.mxu0 0
        %1360 = vmatprep.subr.bf16.mxu0 0
        %1361 = vmatpush1.bf16.xpose.msra.mxu0 0
        %1362 = vmatprep.subr.bf16.mxu0 0
        %1363 = vmatpush1.bf16.xpose.msra.mxu0 0
        %1364 = vmatprep.subr.bf16.mxu0 0
        %1365 = vmatpush1.bf16.xpose.msra.mxu0 0
        %1366 = vmatprep.subr.bf16.mxu0 0
        %1367 = vmatpush1.bf16.xpose.msra.mxu0 0
        %1368 = vmatprep.subr.bf16.mxu0 0
        %1369 = vmatpush1.bf16.xpose.msra.mxu0 0
        %1370 = vmatprep.subr.bf16.mxu0 0
        %1371 = vmatpush1.bf16.xpose.msra.mxu0 0
        %1372 = vmatprep.subr.bf16.mxu0 0
        %1373 = vmatpush1.bf16.xpose.msra.mxu0 0
        %1374 = vmatprep.subr.bf16.mxu0 0
        %1375 = vmatpush1.bf16.xpose.msra.mxu0 0
        %1376 = vmatprep.subr.bf16.mxu0 0
        %1377 = vmatpush1.bf16.xpose.msra.mxu0 0
        %1378 = vmatprep.subr.bf16.mxu0 0
        %1379 = vmatpush1.bf16.xpose.msra.mxu0 0
        %1380 = vmatprep.subr.bf16.mxu0 0
        %1381 = vmatpush1.bf16.xpose.msra.mxu0 0
        %1382 = vmatprep.mubr.bf16.mxu0 0
        %1383 = vmatmul.mubr.bf16.gmra.mrb[0].mxu0 %v1345
        %v1384 = vpop.f32.mrb[0].mxu0
        %v1385 = vadd.f32 0.0, %v1384
        %v1386 = vpop.f32.mrb[0].mxu0
        %v1387 = vpop.f32.mrb[0].mxu0
        %v1388 = vpop.f32.mrb[0].mxu0
        %1389 = vdwg.mxu0
        %v1391 = vsel %vm1343, %v1040, 0
        %v1394 = vsel %vm1343, %v1190, 0
        %1396 = vmatprep.subr.bf16.mxu0 0
        %1397 = vmatpush1.bf16.xpose.msra.mxu0 %v1394
        %1398 = vmatprep.subr.bf16.mxu0 0
        %1399 = vmatpush1.bf16.xpose.msra.mxu0 0
        %1400 = vmatprep.subr.bf16.mxu0 0
        %1401 = vmatpush1.bf16.xpose.msra.mxu0 0
        %1402 = vmatprep.subr.bf16.mxu0 0
        %1403 = vmatpush1.bf16.xpose.msra.mxu0 0
        %1404 = vmatprep.subr.bf16.mxu0 0
        %1405 = vmatpush1.bf16.xpose.msra.mxu0 0
        %1406 = vmatprep.subr.bf16.mxu0 0
        %1407 = vmatpush1.bf16.xpose.msra.mxu0 0
        %1408 = vmatprep.subr.bf16.mxu0 0
        %1409 = vmatpush1.bf16.xpose.msra.mxu0 0
        %1410 = vmatprep.subr.bf16.mxu0 0
        %1411 = vmatpush1.bf16.xpose.msra.mxu0 0
        %1412 = vmatprep.subr.bf16.mxu0 0
        %1413 = vmatpush1.bf16.xpose.msra.mxu0 0
        %1414 = vmatprep.subr.bf16.mxu0 0
        %1415 = vmatpush1.bf16.xpose.msra.mxu0 0
        %1416 = vmatprep.subr.bf16.mxu0 0
        %1417 = vmatpush1.bf16.xpose.msra.mxu0 0
        %1418 = vmatprep.subr.bf16.mxu0 0
        %1419 = vmatpush1.bf16.xpose.msra.mxu0 0
        %1420 = vmatprep.subr.bf16.mxu0 0
        %1421 = vmatpush1.bf16.xpose.msra.mxu0 0
        %1422 = vmatprep.subr.bf16.mxu0 0
        %1423 = vmatpush1.bf16.xpose.msra.mxu0 0
        %1424 = vmatprep.subr.bf16.mxu0 0
        %1425 = vmatpush1.bf16.xpose.msra.mxu0 0
        %1426 = vmatprep.subr.bf16.mxu0 0
        %1427 = vmatpush1.bf16.xpose.msra.mxu0 0
        %1428 = vmatprep.mubr.bf16.mxu0 0
        %1429 = vmatmul.mubr.bf16.gmra.mrb[0].mxu0 %v1391
        %v1430 = vpop.f32.mrb[0].mxu0
        %v1431 = vadd.f32 0.0, %v1430
        %v1432 = vpop.f32.mrb[0].mxu0
        %v1433 = vpop.f32.mrb[0].mxu0
        %v1434 = vpop.f32.mrb[0].mxu0
        %1435 = vdwg.mxu0
        %v1437 = vsel %vm1343, %v1041, 0
        %v1440 = vsel %vm1343, %v1191, 0
        %1442 = vmatprep.subr.bf16.mxu0 0
        %1443 = vmatpush1.bf16.xpose.msra.mxu0 %v1440
        %1444 = vmatprep.subr.bf16.mxu0 0
        %1445 = vmatpush1.bf16.xpose.msra.mxu0 0
        %1446 = vmatprep.subr.bf16.mxu0 0
        %1447 = vmatpush1.bf16.xpose.msra.mxu0 0
        %1448 = vmatprep.subr.bf16.mxu0 0
        %1449 = vmatpush1.bf16.xpose.msra.mxu0 0
        %1450 = vmatprep.subr.bf16.mxu0 0
        %1451 = vmatpush1.bf16.xpose.msra.mxu0 0
        %1452 = vmatprep.subr.bf16.mxu0 0
        %1453 = vmatpush1.bf16.xpose.msra.mxu0 0
        %1454 = vmatprep.subr.bf16.mxu0 0
        %1455 = vmatpush1.bf16.xpose.msra.mxu0 0
        %1456 = vmatprep.subr.bf16.mxu0 0
        %1457 = vmatpush1.bf16.xpose.msra.mxu0 0
        %1458 = vmatprep.subr.bf16.mxu0 0
        %1459 = vmatpush1.bf16.xpose.msra.mxu0 0
        %1460 = vmatprep.subr.bf16.mxu0 0
        %1461 = vmatpush1.bf16.xpose.msra.mxu0 0
        %1462 = vmatprep.subr.bf16.mxu0 0
        %1463 = vmatpush1.bf16.xpose.msra.mxu0 0
        %1464 = vmatprep.subr.bf16.mxu0 0
        %1465 = vmatpush1.bf16.xpose.msra.mxu0 0
        %1466 = vmatprep.subr.bf16.mxu0 0
        %1467 = vmatpush1.bf16.xpose.msra.mxu0 0
        %1468 = vmatprep.subr.bf16.mxu0 0
        %1469 = vmatpush1.bf16.xpose.msra.mxu0 0
        %1470 = vmatprep.subr.bf16.mxu0 0
        %1471 = vmatpush1.bf16.xpose.msra.mxu0 0
        %1472 = vmatprep.subr.bf16.mxu0 0
        %1473 = vmatpush1.bf16.xpose.msra.mxu0 0
        %1474 = vmatprep.mubr.bf16.mxu0 0
        %1475 = vmatmul.mubr.bf16.gmra.mrb[0].mxu0 %v1437
        %v1476 = vpop.f32.mrb[0].mxu0
        %v1477 = vadd.f32 0.0, %v1476
        %v1478 = vpop.f32.mrb[0].mxu0
        %v1479 = vpop.f32.mrb[0].mxu0
        %v1480 = vpop.f32.mrb[0].mxu0
        %1481 = vdwg.mxu0
        %v1483 = vsel %vm1343, %v1042, 0
        %v1486 = vsel %vm1343, %v1192, 0
        %1488 = vmatprep.subr.bf16.mxu0 0
        %1489 = vmatpush1.bf16.xpose.msra.mxu0 %v1486
        %1490 = vmatprep.subr.bf16.mxu0 0
        %1491 = vmatpush1.bf16.xpose.msra.mxu0 0
        %1492 = vmatprep.subr.bf16.mxu0 0
        %1493 = vmatpush1.bf16.xpose.msra.mxu0 0
        %1494 = vmatprep.subr.bf16.mxu0 0
        %1495 = vmatpush1.bf16.xpose.msra.mxu0 0
        %1496 = vmatprep.subr.bf16.mxu0 0
        %1497 = vmatpush1.bf16.xpose.msra.mxu0 0
        %1498 = vmatprep.subr.bf16.mxu0 0
        %1499 = vmatpush1.bf16.xpose.msra.mxu0 0
        %1500 = vmatprep.subr.bf16.mxu0 0
        %1501 = vmatpush1.bf16.xpose.msra.mxu0 0
        %1502 = vmatprep.subr.bf16.mxu0 0
        %1503 = vmatpush1.bf16.xpose.msra.mxu0 0
        %1504 = vmatprep.subr.bf16.mxu0 0
        %1505 = vmatpush1.bf16.xpose.msra.mxu0 0
        %1506 = vmatprep.subr.bf16.mxu0 0
        %1507 = vmatpush1.bf16.xpose.msra.mxu0 0
        %1508 = vmatprep.subr.bf16.mxu0 0
        %1509 = vmatpush1.bf16.xpose.msra.mxu0 0
        %1510 = vmatprep.subr.bf16.mxu0 0
        %1511 = vmatpush1.bf16.xpose.msra.mxu0 0
        %1512 = vmatprep.subr.bf16.mxu0 0
        %1513 = vmatpush1.bf16.xpose.msra.mxu0 0
        %1514 = vmatprep.subr.bf16.mxu0 0
        %1515 = vmatpush1.bf16.xpose.msra.mxu0 0
        %1516 = vmatprep.subr.bf16.mxu0 0
        %1517 = vmatpush1.bf16.xpose.msra.mxu0 0
        %1518 = vmatprep.subr.bf16.mxu0 0
        %1519 = vmatpush1.bf16.xpose.msra.mxu0 0
        %1520 = vmatprep.mubr.bf16.mxu0 0
        %1521 = vmatmul.mubr.bf16.gmra.mrb[0].mxu0 %v1483
        %v1522 = vpop.f32.mrb[0].mxu0
        %v1523 = vadd.f32 0.0, %v1522
        %v1524 = vpop.f32.mrb[0].mxu0
        %v1525 = vpop.f32.mrb[0].mxu0
        %v1526 = vpop.f32.mrb[0].mxu0
        %1527 = vdwg.mxu0
        %v1528 = vsel %vm1343, %v1385, -inf
        %1529 = vmax.xlane.f32.xlu0 %v1528
        %v1530 = vpop.xlane.xlu0 %1529
        %v1531 = vsel %vm1343, %v1431, -inf
        %1532 = vmax.xlane.f32.xlu0 %v1531
        %v1533 = vpop.xlane.xlu0 %1532
        %v1534 = vsel %vm1343, %v1477, -inf
        %1535 = vmax.xlane.f32.xlu0 %v1534
        %v1536 = vpop.xlane.xlu0 %1535
        %v1537 = vsel %vm1343, %v1523, -inf
        %1538 = vmax.xlane.f32.xlu0 %v1537
        %v1539 = vpop.xlane.xlu0 %1538
        %v1540 = vsub.f32 %v1385, %v1530
        %v1541 = vsub.f32 %v1431, %v1533
        %v1542 = vsub.f32 %v1477, %v1536
        %v1543 = vsub.f32 %v1523, %v1539
        %v1544 = vmul.f32 %v1540, 1.442695
        %v1545 = vpow.pop %v1544
        %v1546 = vmul.f32 %v1541, 1.442695
        %v1547 = vpow.pop %v1546
        %v1548 = vmul.f32 %v1542, 1.442695
        %v1549 = vpow.pop %v1548
        %v1550 = vmul.f32 %v1543, 1.442695
        %v1551 = vpow.pop %v1550
        %v1552 = vsel %vm1343, %v1545, 0.0
        %1553 = vadd.xlane.f32.xlu0 %v1552
        %v1554 = vpop.xlane.xlu0 %1553
        %v1555 = vsel %vm1343, %v1547, 0.0
        %1556 = vadd.xlane.f32.xlu0 %v1555
        %v1557 = vpop.xlane.xlu0 %1556
        %v1558 = vsel %vm1343, %v1549, 0.0
        %1559 = vadd.xlane.f32.xlu0 %v1558
        %v1560 = vpop.xlane.xlu0 %1559
        %v1561 = vsel %vm1343, %v1551, 0.0
        %1562 = vadd.xlane.f32.xlu0 %v1561
        %v1563 = vpop.xlane.xlu0 %1562
        %v1564 = vrcp.pop %v1554
        %v1565 = vrcp.pop %v1557
        %v1566 = vrcp.pop %v1560
        %v1567 = vrcp.pop %v1563
        %v1568 = vmul.f32 %v1545, %v1564
        %v1569 = vmul.f32 %v1547, %v1565
        %v1570 = vmul.f32 %v1549, %v1566
        %v1571 = vmul.f32 %v1551, %v1567
        %v1572 = vpack.c.bf16 %v1568, %v1568
        %v1573 = vpack.c.bf16 %v1569, %v1569
        %v1574 = vpack.c.bf16 %v1570, %v1570
        %v1575 = vpack.c.bf16 %v1571, %v1571
        %v1577 = vsel %vm1343, %v1572, 0
        %vm1579 = vcmask 1043456
        %v1581 = vsel %vm1579, %v1339, 0
        %1583 = vmatprep.subr.bf16.mxu0 0
        %1584 = vmatpush1.bf16.msra.mxu0 %v1581
        %1585 = vmatprep.subr.bf16.mxu0 0
        %1586 = vmatpush1.bf16.msra.mxu0 0
        %1587 = vmatprep.subr.bf16.mxu0 0
        %1588 = vmatpush1.bf16.msra.mxu0 0
        %1589 = vmatprep.subr.bf16.mxu0 0
        %1590 = vmatpush1.bf16.msra.mxu0 0
        %1591 = vmatprep.subr.bf16.mxu0 0
        %1592 = vmatpush1.bf16.msra.mxu0 0
        %1593 = vmatprep.subr.bf16.mxu0 0
        %1594 = vmatpush1.bf16.msra.mxu0 0
        %1595 = vmatprep.subr.bf16.mxu0 0
        %1596 = vmatpush1.bf16.msra.mxu0 0
        %1597 = vmatprep.subr.bf16.mxu0 0
        %1598 = vmatpush1.bf16.msra.mxu0 0
        %1599 = vmatprep.subr.bf16.mxu0 0
        %1600 = vmatpush1.bf16.msra.mxu0 0
        %1601 = vmatprep.subr.bf16.mxu0 0
        %1602 = vmatpush1.bf16.msra.mxu0 0
        %1603 = vmatprep.subr.bf16.mxu0 0
        %1604 = vmatpush1.bf16.msra.mxu0 0
        %1605 = vmatprep.subr.bf16.mxu0 0
        %1606 = vmatpush1.bf16.msra.mxu0 0
        %1607 = vmatprep.subr.bf16.mxu0 0
        %1608 = vmatpush1.bf16.msra.mxu0 0
        %1609 = vmatprep.subr.bf16.mxu0 0
        %1610 = vmatpush1.bf16.msra.mxu0 0
        %1611 = vmatprep.subr.bf16.mxu0 0
        %1612 = vmatpush1.bf16.msra.mxu0 0
        %1613 = vmatprep.subr.bf16.mxu0 0
        %1614 = vmatpush1.bf16.msra.mxu0 0
        %1615 = vmatprep.mubr.bf16.mxu0 0
        %1616 = vmatmul.mubr.bf16.gmra.mrb[0].mxu0 %v1577
        %v1617 = vpop.f32.mrb[0].mxu0
        %v1618 = vadd.f32 0.0, %v1617
        %v1619 = vpop.f32.mrb[0].mxu0
        %v1620 = vpop.f32.mrb[0].mxu0
        %v1621 = vpop.f32.mrb[0].mxu0
        %1622 = vdwg.mxu0
        %v1624 = vsel %vm1343, %v1573, 0
        %v1627 = vsel %vm1579, %v1340, 0
        %1629 = vmatprep.subr.bf16.mxu0 0
        %1630 = vmatpush1.bf16.msra.mxu0 %v1627
        %1631 = vmatprep.subr.bf16.mxu0 0
        %1632 = vmatpush1.bf16.msra.mxu0 0
        %1633 = vmatprep.subr.bf16.mxu0 0
        %1634 = vmatpush1.bf16.msra.mxu0 0
        %1635 = vmatprep.subr.bf16.mxu0 0
        %1636 = vmatpush1.bf16.msra.mxu0 0
        %1637 = vmatprep.subr.bf16.mxu0 0
        %1638 = vmatpush1.bf16.msra.mxu0 0
        %1639 = vmatprep.subr.bf16.mxu0 0
        %1640 = vmatpush1.bf16.msra.mxu0 0
        %1641 = vmatprep.subr.bf16.mxu0 0
        %1642 = vmatpush1.bf16.msra.mxu0 0
        %1643 = vmatprep.subr.bf16.mxu0 0
        %1644 = vmatpush1.bf16.msra.mxu0 0
        %1645 = vmatprep.subr.bf16.mxu0 0
        %1646 = vmatpush1.bf16.msra.mxu0 0
        %1647 = vmatprep.subr.bf16.mxu0 0
        %1648 = vmatpush1.bf16.msra.mxu0 0
        %1649 = vmatprep.subr.bf16.mxu0 0
        %1650 = vmatpush1.bf16.msra.mxu0 0
        %1651 = vmatprep.subr.bf16.mxu0 0
        %1652 = vmatpush1.bf16.msra.mxu0 0
        %1653 = vmatprep.subr.bf16.mxu0 0
        %1654 = vmatpush1.bf16.msra.mxu0 0
        %1655 = vmatprep.subr.bf16.mxu0 0
        %1656 = vmatpush1.bf16.msra.mxu0 0
        %1657 = vmatprep.subr.bf16.mxu0 0
        %1658 = vmatpush1.bf16.msra.mxu0 0
        %1659 = vmatprep.subr.bf16.mxu0 0
        %1660 = vmatpush1.bf16.msra.mxu0 0
        %1661 = vmatprep.mubr.bf16.mxu0 0
        %1662 = vmatmul.mubr.bf16.gmra.mrb[0].mxu0 %v1624
        %v1663 = vpop.f32.mrb[0].mxu0
        %v1664 = vadd.f32 0.0, %v1663
        %v1665 = vpop.f32.mrb[0].mxu0
        %v1666 = vpop.f32.mrb[0].mxu0
        %v1667 = vpop.f32.mrb[0].mxu0
        %1668 = vdwg.mxu0
        %v1670 = vsel %vm1343, %v1574, 0
        %v1673 = vsel %vm1579, %v1341, 0
        %1675 = vmatprep.subr.bf16.mxu0 0
        %1676 = vmatpush1.bf16.msra.mxu0 %v1673
        %1677 = vmatprep.subr.bf16.mxu0 0
        %1678 = vmatpush1.bf16.msra.mxu0 0
        %1679 = vmatprep.subr.bf16.mxu0 0
        %1680 = vmatpush1.bf16.msra.mxu0 0
        %1681 = vmatprep.subr.bf16.mxu0 0
        %1682 = vmatpush1.bf16.msra.mxu0 0
        %1683 = vmatprep.subr.bf16.mxu0 0
        %1684 = vmatpush1.bf16.msra.mxu0 0
        %1685 = vmatprep.subr.bf16.mxu0 0
        %1686 = vmatpush1.bf16.msra.mxu0 0
        %1687 = vmatprep.subr.bf16.mxu0 0
        %1688 = vmatpush1.bf16.msra.mxu0 0
        %1689 = vmatprep.subr.bf16.mxu0 0
        %1690 = vmatpush1.bf16.msra.mxu0 0
        %1691 = vmatprep.subr.bf16.mxu0 0
        %1692 = vmatpush1.bf16.msra.mxu0 0
        %1693 = vmatprep.subr.bf16.mxu0 0
        %1694 = vmatpush1.bf16.msra.mxu0 0
        %1695 = vmatprep.subr.bf16.mxu0 0
        %1696 = vmatpush1.bf16.msra.mxu0 0
        %1697 = vmatprep.subr.bf16.mxu0 0
        %1698 = vmatpush1.bf16.msra.mxu0 0
        %1699 = vmatprep.subr.bf16.mxu0 0
        %1700 = vmatpush1.bf16.msra.mxu0 0
        %1701 = vmatprep.subr.bf16.mxu0 0
        %1702 = vmatpush1.bf16.msra.mxu0 0
        %1703 = vmatprep.subr.bf16.mxu0 0
        %1704 = vmatpush1.bf16.msra.mxu0 0
        %1705 = vmatprep.subr.bf16.mxu0 0
        %1706 = vmatpush1.bf16.msra.mxu0 0
        %1707 = vmatprep.mubr.bf16.mxu0 0
        %1708 = vmatmul.mubr.bf16.gmra.mrb[0].mxu0 %v1670
        %v1709 = vpop.f32.mrb[0].mxu0
        %v1710 = vadd.f32 0.0, %v1709
        %v1711 = vpop.f32.mrb[0].mxu0
        %v1712 = vpop.f32.mrb[0].mxu0
        %v1713 = vpop.f32.mrb[0].mxu0
        %1714 = vdwg.mxu0
        %v1716 = vsel %vm1343, %v1575, 0
        %v1719 = vsel %vm1579, %v1342, 0
        %1721 = vmatprep.subr.bf16.mxu0 0
        %1722 = vmatpush1.bf16.msra.mxu0 %v1719
        %1723 = vmatprep.subr.bf16.mxu0 0
        %1724 = vmatpush1.bf16.msra.mxu0 0
        %1725 = vmatprep.subr.bf16.mxu0 0
        %1726 = vmatpush1.bf16.msra.mxu0 0
        %1727 = vmatprep.subr.bf16.mxu0 0
        %1728 = vmatpush1.bf16.msra.mxu0 0
        %1729 = vmatprep.subr.bf16.mxu0 0
        %1730 = vmatpush1.bf16.msra.mxu0 0
        %1731 = vmatprep.subr.bf16.mxu0 0
        %1732 = vmatpush1.bf16.msra.mxu0 0
        %1733 = vmatprep.subr.bf16.mxu0 0
        %1734 = vmatpush1.bf16.msra.mxu0 0
        %1735 = vmatprep.subr.bf16.mxu0 0
        %1736 = vmatpush1.bf16.msra.mxu0 0
        %1737 = vmatprep.subr.bf16.mxu0 0
        %1738 = vmatpush1.bf16.msra.mxu0 0
        %1739 = vmatprep.subr.bf16.mxu0 0
        %1740 = vmatpush1.bf16.msra.mxu0 0
        %1741 = vmatprep.subr.bf16.mxu0 0
        %1742 = vmatpush1.bf16.msra.mxu0 0
        %1743 = vmatprep.subr.bf16.mxu0 0
        %1744 = vmatpush1.bf16.msra.mxu0 0
        %1745 = vmatprep.subr.bf16.mxu0 0
        %1746 = vmatpush1.bf16.msra.mxu0 0
        %1747 = vmatprep.subr.bf16.mxu0 0
        %1748 = vmatpush1.bf16.msra.mxu0 0
        %1749 = vmatprep.subr.bf16.mxu0 0
        %1750 = vmatpush1.bf16.msra.mxu0 0
        %1751 = vmatprep.subr.bf16.mxu0 0
        %1752 = vmatpush1.bf16.msra.mxu0 0
        %1753 = vmatprep.mubr.bf16.mxu0 0
        %1754 = vmatmul.mubr.bf16.gmra.mrb[0].mxu0 %v1716
        %v1755 = vpop.f32.mrb[0].mxu0
        %v1756 = vadd.f32 0.0, %v1755
        %v1757 = vpop.f32.mrb[0].mxu0
        %v1758 = vpop.f32.mrb[0].mxu0
        %v1759 = vpop.f32.mrb[0].mxu0
        %1760 = vdwg.mxu0
        %v1761 = vcombine.low %v1618, %v1710
        %v1762 = vcombine.high %v1618, %v1710
        %v1764 = vunpack.c.l.s4 1983009808
        %v1765 = vunpack.c.0.s8 %v1764
        %v1766 = vlaneseq
        %v1767 = vshrl.u32 %v1766, 7
        %v1768 = vsub.s32 %v1765, %v1767
        %v1769 = vrot.slane %v1761, %v1768
        %v1771 = vunpack.c.l.s4 1983009808
        %v1772 = vunpack.c.0.s8 %v1771
        %v1773 = vlaneseq
        %v1774 = vshrl.u32 %v1773, 7
        %v1775 = vsub.s32 %v1772, %v1774
        %v1776 = vrot.slane %v1762, %v1775
        %v1777 = vcombine.low %v1664, %v1756
        %v1778 = vcombine.high %v1664, %v1756
        %v1780 = vunpack.c.l.s4 1983009808
        %v1781 = vunpack.c.0.s8 %v1780
        %v1782 = vlaneseq
        %v1783 = vshrl.u32 %v1782, 7
        %v1784 = vsub.s32 %v1781, %v1783
        %v1785 = vrot.slane %v1777, %v1784
        %v1787 = vunpack.c.l.s4 1983009808
        %v1788 = vunpack.c.0.s8 %v1787
        %v1789 = vlaneseq
        %v1790 = vshrl.u32 %v1789, 7
        %v1791 = vsub.s32 %v1788, %v1790
        %v1792 = vrot.slane %v1778, %v1791
        %v1793 = vcombine.low %v1769, %v1785
        %v1794 = vcombine.high %v1769, %v1785
        %v1796 = vunpack.c.l.s4 1934713408
        %v1797 = vunpack.c.0.s8 %v1796
        %v1798 = vlaneseq
        %v1799 = vshrl.u32 %v1798, 7
        %v1800 = vsub.s32 %v1797, %v1799
        %v1801 = vrot.slane %v1793, %v1800
        %v1803 = vunpack.c.l.s4 1934713408
        %v1804 = vunpack.c.0.s8 %v1803
        %v1805 = vlaneseq
        %v1806 = vshrl.u32 %v1805, 7
        %v1807 = vsub.s32 %v1804, %v1806
        %v1808 = vrot.slane %v1794, %v1807
        %v1809 = vcombine.low %v1776, %v1792
        %v1810 = vcombine.high %v1776, %v1792
        %v1812 = vunpack.c.l.s4 1934713408
        %v1813 = vunpack.c.0.s8 %v1812
        %v1814 = vlaneseq
        %v1815 = vshrl.u32 %v1814, 7
        %v1816 = vsub.s32 %v1813, %v1815
        %v1817 = vrot.slane %v1809, %v1816
        %v1819 = vunpack.c.l.s4 1934713408
        %v1820 = vunpack.c.0.s8 %v1819
        %v1821 = vlaneseq
        %v1822 = vshrl.u32 %v1821, 7
        %v1823 = vsub.s32 %v1820, %v1822
        %v1824 = vrot.slane %v1810, %v1823
        %v1825 = vcombine.high %v1801, 0.0
        %v1826 = vcombine.high %v1808, 0.0
        %v1827 = vcombine.high %v1817, 0.0
        %v1828 = vcombine.high %v1824, 0.0
        %v1829 = vcombine.low %v1801, %v1808
        %v1831 = vunpack.c.l.s4 1983009808
        %v1832 = vunpack.c.0.s8 %v1831
        %v1833 = vlaneseq
        %v1834 = vshrl.u32 %v1833, 7
        %v1835 = vsub.s32 %v1832, %v1834
        %v1836 = vrot.slane %v1829, %v1835
        %v1837 = vcombine.low %v1825, %v1826
        %v1839 = vunpack.c.l.s4 1983009808
        %v1840 = vunpack.c.0.s8 %v1839
        %v1841 = vlaneseq
        %v1842 = vshrl.u32 %v1841, 7
        %v1843 = vsub.s32 %v1840, %v1842
        %v1844 = vrot.slane %v1837, %v1843
        %v1845 = vcombine.low %v1817, %v1824
        %v1847 = vunpack.c.l.s4 1983009808
        %v1848 = vunpack.c.0.s8 %v1847
        %v1849 = vlaneseq
        %v1850 = vshrl.u32 %v1849, 7
        %v1851 = vsub.s32 %v1848, %v1850
        %v1852 = vrot.slane %v1845, %v1851
        %v1853 = vcombine.low %v1827, %v1828
        %v1855 = vunpack.c.l.s4 1983009808
        %v1856 = vunpack.c.0.s8 %v1855
        %v1857 = vlaneseq
        %v1858 = vshrl.u32 %v1857, 7
        %v1859 = vsub.s32 %v1856, %v1858
        %v1860 = vrot.slane %v1853, %v1859
        %v1861 = vcombine.low %v1836, %v1844
        %v1862 = vcombine.high %v1836, %v1844
        %v1864 = vunpack.c.l.s4 1934713408
        %v1865 = vunpack.c.0.s8 %v1864
        %v1866 = vlaneseq
        %v1867 = vshrl.u32 %v1866, 7
        %v1868 = vsub.s32 %v1865, %v1867
        %v1869 = vrot.slane %v1861, %v1868
        %v1871 = vunpack.c.l.s4 1934713408
        %v1872 = vunpack.c.0.s8 %v1871
        %v1873 = vlaneseq
        %v1874 = vshrl.u32 %v1873, 7
        %v1875 = vsub.s32 %v1872, %v1874
        %v1876 = vrot.slane %v1862, %v1875
        %v1877 = vcombine.low %v1852, %v1860
        %v1878 = vcombine.high %v1852, %v1860
        %v1880 = vunpack.c.l.s4 1934713408
        %v1881 = vunpack.c.0.s8 %v1880
        %v1882 = vlaneseq
        %v1883 = vshrl.u32 %v1882, 7
        %v1884 = vsub.s32 %v1881, %v1883
        %v1885 = vrot.slane %v1877, %v1884
        %v1887 = vunpack.c.l.s4 1934713408
        %v1888 = vunpack.c.0.s8 %v1887
        %v1889 = vlaneseq
        %v1890 = vshrl.u32 %v1889, 7
        %v1891 = vsub.s32 %v1888, %v1890
        %v1892 = vrot.slane %v1878, %v1891
        %v1893 = vcombine.low %v1869, %v1885
        %v1894 = vcombine.high %v1869, %v1885
        %v1895 = vcombine.low %v1876, %v1892
        %v1896 = vcombine.high %v1876, %v1892
        %1898 = vrot.lane.b32.xlu0 %v1894, 8
        %v1899 = vpop.permute.xlu0 %1898
        %1902 = vrot.lane.b32.xlu0 %v1895, 16
        %v1903 = vpop.permute.xlu0 %1902
        %1906 = vrot.lane.b32.xlu0 %v1896, 24
        %v1907 = vpop.permute.xlu0 %1906
        %v1909 = vsel %vm1343, %v1893, %v1899
        %vm1910 = vcmask 130048
        %v1911 = vsel %vm1910, %v1909, %v1903
        %vm1912 = vcmask 195584
        %v1913 = vsel %vm1912, %v1911, %v1907
        %v1914 = vpack.c.bf16 %v1913, %v1913
        %v1915 = vld [vmem:[#allocation7] sm:$0xf]
        %v1916 = vld [vmem:[#allocation7 + $0x4] sm:$0xf]
        %v1917 = vld [vmem:[#allocation7 + $0x8] sm:$0xf]
        %v1918 = vld [vmem:[#allocation7 + $0xc] sm:$0xf]
        %v1919 = vld [vmem:[#allocation8] sm:$0x1]
        %v1921 = vlaneseq
        %v1922 = vshrl.u32 %v1921, 7
        %v1923 = vsub.s32 0, %v1922
        %v1924 = vrot.slane %v1919, %v1923
        %v1930 = vunpack.c.l.b16 %v1915
        %v1931 = vunpack.c.l.b16 %v1916
        %v1932 = vunpack.c.l.b16 %v1917
        %v1933 = vunpack.c.l.b16 %v1918
        %v1934 = vpack.c.b16 %v1931, %v1930
        %v1935 = vpack.c.b16 %v1933, %v1932
        %v1939 = vsel %vm667, %v1914, 0
        %1941 = vmatprep.subr.bf16.mxu0 0
        %1942 = vmatpush1.bf16.msra.mxu0 %v1934
        %1943 = vmatprep.subr.bf16.mxu0 0
        %1944 = vmatpush1.bf16.msra.mxu0 %v1935
        %1945 = vmatprep.subr.bf16.mxu0 0
        %1946 = vmatpush1.bf16.msra.mxu0 0
        %1947 = vmatprep.subr.bf16.mxu0 0
        %1948 = vmatpush1.bf16.msra.mxu0 0
        %1949 = vmatprep.subr.bf16.mxu0 0
        %1950 = vmatpush1.bf16.msra.mxu0 0
        %1951 = vmatprep.subr.bf16.mxu0 0
        %1952 = vmatpush1.bf16.msra.mxu0 0
        %1953 = vmatprep.subr.bf16.mxu0 0
        %1954 = vmatpush1.bf16.msra.mxu0 0
        %1955 = vmatprep.subr.bf16.mxu0 0
        %1956 = vmatpush1.bf16.msra.mxu0 0
        %1957 = vmatprep.subr.bf16.mxu0 0
        %1958 = vmatpush1.bf16.msra.mxu0 0
        %1959 = vmatprep.subr.bf16.mxu0 0
        %1960 = vmatpush1.bf16.msra.mxu0 0
        %1961 = vmatprep.subr.bf16.mxu0 0
        %1962 = vmatpush1.bf16.msra.mxu0 0
        %1963 = vmatprep.subr.bf16.mxu0 0
        %1964 = vmatpush1.bf16.msra.mxu0 0
        %1965 = vmatprep.subr.bf16.mxu0 0
        %1966 = vmatpush1.bf16.msra.mxu0 0
        %1967 = vmatprep.subr.bf16.mxu0 0
        %1968 = vmatpush1.bf16.msra.mxu0 0
        %1969 = vmatprep.subr.bf16.mxu0 0
        %1970 = vmatpush1.bf16.msra.mxu0 0
        %1971 = vmatprep.subr.bf16.mxu0 0
        %1972 = vmatpush1.bf16.msra.mxu0 0
        %1973 = vmatprep.mubr.bf16.mxu0 0
        %1974 = vmatmul.mubr.bf16.gmra.mrb[0].mxu0 %v1939
        %v1975 = vpop.f32.mrb[0].mxu0
        %v1976 = vadd.f32 %v1924, %v1975
        %v1977 = vpop.f32.mrb[0].mxu0
        %v1978 = vpop.f32.mrb[0].mxu0
        %v1979 = vpop.f32.mrb[0].mxu0
        %1980 = vdwg.mxu0
        %v1981 = vsel %vm667, %v1976, 0.0
        %1982 = vadd.xlane.f32.xlu0 %v1981
        %v1983 = vpop.xlane.xlu0 %1982
        %v1984 = vmul.f32 %v1983, %v671
        %v1985 = vmul.f32 %v1976, %v1976
        %v1986 = vsel %vm667, %v1985, 0.0
        %1987 = vadd.xlane.f32.xlu0 %v1986
        %v1988 = vpop.xlane.xlu0 %1987
        %v1989 = vmul.f32 %v1988, %v671
        %v1990 = vmul.f32 %v1984, %v1984
        %v1991 = vsub.f32 %v1989, %v1990
        %v1992 = vsub.f32 %v1976, %v1984
        %v1993 = vadd.f32 %v1991, 1e-05
        %v1994 = vrsqrt.pop %v1993
        %v1995 = vmul.f32 %v1992, %v1994
        %v1996 = vld [vmem:[%s11] sm:$0x1]
        %v1998 = vlaneseq
        %v1999 = vshrl.u32 %v1998, 7
        %v2000 = vsub.s32 0, %v1999
        %v2001 = vrot.slane %v1996, %v2000
        %v2003 = vmul.f32 %v1995, %v2001
        %v2004 = vld [vmem:[%s12] sm:$0x1]
        %v2006 = vlaneseq
        %v2007 = vshrl.u32 %v2006, 7
        %v2008 = vsub.s32 0, %v2007
        %v2009 = vrot.slane %v2004, %v2008
        %v2011 = vadd.f32 %v2003, %v2009
        %v2012 = vadd.f32 %v666, %v2011
        %v2013 = vsel %vm667, %v2012, 0.0
        %2014 = vadd.xlane.f32.xlu0 %v2013
        %v2015 = vpop.xlane.xlu0 %2014
        %v2016 = vmul.f32 %v2015, %v671
        %v2017 = vmul.f32 %v2012, %v2012
        %v2018 = vsel %vm667, %v2017, 0.0
        %2019 = vadd.xlane.f32.xlu0 %v2018
        %v2020 = vpop.xlane.xlu0 %2019
        %v2021 = vmul.f32 %v2020, %v671
        %v2022 = vmul.f32 %v2016, %v2016
        %v2023 = vsub.f32 %v2021, %v2022
        %v2024 = vsub.f32 %v2012, %v2016
        %v2025 = vadd.f32 %v2023, 1e-05
        %v2026 = vrsqrt.pop %v2025
        %v2027 = vmul.f32 %v2024, %v2026
        %v2028 = vld [vmem:[%s13] sm:$0x1]
        %v2030 = vlaneseq
        %v2031 = vshrl.u32 %v2030, 7
        %v2032 = vsub.s32 0, %v2031
        %v2033 = vrot.slane %v2028, %v2032
        %v2035 = vmul.f32 %v2027, %v2033
        %v2036 = vld [vmem:[%s14] sm:$0x1]
        %v2038 = vlaneseq
        %v2039 = vshrl.u32 %v2038, 7
        %v2040 = vsub.s32 0, %v2039
        %v2041 = vrot.slane %v2036, %v2040
        %v2043 = vadd.f32 %v2035, %v2041
        %v2044 = vpack.c.bf16 %v2043, %v2043
        %v2045 = vld [vmem:[%s15] sm:$0xf]
        %v2046 = vld [vmem:[%s15 + $0x4] sm:$0xf]
        %v2047 = vld [vmem:[%s15 + $0x8] sm:$0xf]
        %v2048 = vld [vmem:[%s15 + $0xc] sm:$0xf]
        %v2049 = vld [vmem:[%s16] sm:$0x1]
        %v2051 = vlaneseq
        %v2052 = vshrl.u32 %v2051, 7
        %v2053 = vsub.s32 0, %v2052
        %v2054 = vrot.slane %v2049, %v2053
        %v2060 = vunpack.c.l.b16 %v2045
        %v2061 = vunpack.c.l.b16 %v2046
        %v2062 = vunpack.c.l.b16 %v2047
        %v2063 = vunpack.c.l.b16 %v2048
        %v2064 = vpack.c.b16 %v2061, %v2060
        %v2065 = vpack.c.b16 %v2063, %v2062
        %v2069 = vsel %vm667, %v2044, 0
        %2071 = vmatprep.subr.bf16.mxu0 0
        %2072 = vmatpush1.bf16.msra.mxu0 %v2064
        %2073 = vmatprep.subr.bf16.mxu0 0
        %2074 = vmatpush1.bf16.msra.mxu0 %v2065
        %2075 = vmatprep.subr.bf16.mxu0 0
        %2076 = vmatpush1.bf16.msra.mxu0 0
        %2077 = vmatprep.subr.bf16.mxu0 0
        %2078 = vmatpush1.bf16.msra.mxu0 0
        %2079 = vmatprep.subr.bf16.mxu0 0
        %2080 = vmatpush1.bf16.msra.mxu0 0
        %2081 = vmatprep.subr.bf16.mxu0 0
        %2082 = vmatpush1.bf16.msra.mxu0 0
        %2083 = vmatprep.subr.bf16.mxu0 0
        %2084 = vmatpush1.bf16.msra.mxu0 0
        %2085 = vmatprep.subr.bf16.mxu0 0
        %2086 = vmatpush1.bf16.msra.mxu0 0
        %2087 = vmatprep.subr.bf16.mxu0 0
        %2088 = vmatpush1.bf16.msra.mxu0 0
        %2089 = vmatprep.subr.bf16.mxu0 0
        %2090 = vmatpush1.bf16.msra.mxu0 0
        %2091 = vmatprep.subr.bf16.mxu0 0
        %2092 = vmatpush1.bf16.msra.mxu0 0
        %2093 = vmatprep.subr.bf16.mxu0 0
        %2094 = vmatpush1.bf16.msra.mxu0 0
        %2095 = vmatprep.subr.bf16.mxu0 0
        %2096 = vmatpush1.bf16.msra.mxu0 0
        %2097 = vmatprep.subr.bf16.mxu0 0
        %2098 = vmatpush1.bf16.msra.mxu0 0
        %2099 = vmatprep.subr.bf16.mxu0 0
        %2100 = vmatpush1.bf16.msra.mxu0 0
        %2101 = vmatprep.subr.bf16.mxu0 0
        %2102 = vmatpush1.bf16.msra.mxu0 0
        %2103 = vmatprep.mubr.bf16.mxu0 0
        %2104 = vmatmul.mubr.bf16.gmra.mrb[0].mxu0 %v2069
        %v2105 = vpop.f32.mrb[0].mxu0
        %v2106 = vadd.f32 %v2054, %v2105
        %v2107 = vpop.f32.mrb[0].mxu0
        %v2108 = vpop.f32.mrb[0].mxu0
        %v2109 = vpop.f32.mrb[0].mxu0
        %2110 = vdwg.mxu0
        %v2111 = vmul.f32 %v2106, %v2106
        %v2112 = vmul.f32 %v2106, %v2111
        %v2113 = vmul.f32 %v2112, 0.044715
        %v2114 = vadd.f32 %v2106, %v2113
        %v2115 = vmul.f32 %v2114, 0.7978846
        %v2116 = vtanh.pop %v2115
        %v2117 = vadd.f32 %v2116, 1.0
        %v2118 = vmul.f32 %v2117, 0.5
        %v2119 = vmul.f32 %v2106, %v2118
        %v2120 = vpack.c.bf16 %v2119, %v2119
        %v2121 = vld [vmem:[%s17] sm:$0xf]
        %v2122 = vld [vmem:[%s17 + $0x4] sm:$0xf]
        %v2123 = vld [vmem:[%s17 + $0x8] sm:$0xf]
        %v2124 = vld [vmem:[%s17 + $0xc] sm:$0xf]
        %v2125 = vld [vmem:[%s17 + $0x10] sm:$0xf]
        %v2126 = vld [vmem:[%s17 + $0x14] sm:$0xf]
        %v2127 = vld [vmem:[%s17 + $0x18] sm:$0xf]
        %v2128 = vld [vmem:[%s17 + $0x1c] sm:$0xf]
        %v2129 = vld [vmem:[%s18] sm:$0x1]
        %v2131 = vlaneseq
        %v2132 = vshrl.u32 %v2131, 7
        %v2133 = vsub.s32 0, %v2132
        %v2134 = vrot.slane %v2129, %v2133
        %v2144 = vunpack.c.l.b16 %v2121
        %v2145 = vunpack.c.l.b16 %v2122
        %v2146 = vunpack.c.l.b16 %v2123
        %v2147 = vunpack.c.l.b16 %v2124
        %v2148 = vunpack.c.l.b16 %v2125
        %v2149 = vunpack.c.l.b16 %v2126
        %v2150 = vunpack.c.l.b16 %v2127
        %v2151 = vunpack.c.l.b16 %v2128
        %v2152 = vpack.c.b16 %v2145, %v2144
        %v2153 = vpack.c.b16 %v2147, %v2146
        %v2154 = vpack.c.b16 %v2149, %v2148
        %v2155 = vpack.c.b16 %v2151, %v2150
        %vm2160 = vcmask 523264
        %v2162 = vsel %vm2160, %v2120, 0
        %2164 = vmatprep.subr.bf16.mxu0 0
        %2165 = vmatpush1.bf16.msra.mxu0 %v2152
        %2166 = vmatprep.subr.bf16.mxu0 0
        %2167 = vmatpush1.bf16.msra.mxu0 %v2153
        %2168 = vmatprep.subr.bf16.mxu0 0
        %2169 = vmatpush1.bf16.msra.mxu0 %v2154
        %2170 = vmatprep.subr.bf16.mxu0 0
        %2171 = vmatpush1.bf16.msra.mxu0 %v2155
        %2172 = vmatprep.subr.bf16.mxu0 0
        %2173 = vmatpush1.bf16.msra.mxu0 0
        %2174 = vmatprep.subr.bf16.mxu0 0
        %2175 = vmatpush1.bf16.msra.mxu0 0
        %2176 = vmatprep.subr.bf16.mxu0 0
        %2177 = vmatpush1.bf16.msra.mxu0 0
        %2178 = vmatprep.subr.bf16.mxu0 0
        %2179 = vmatpush1.bf16.msra.mxu0 0
        %2180 = vmatprep.subr.bf16.mxu0 0
        %2181 = vmatpush1.bf16.msra.mxu0 0
        %2182 = vmatprep.subr.bf16.mxu0 0
        %2183 = vmatpush1.bf16.msra.mxu0 0
        %2184 = vmatprep.subr.bf16.mxu0 0
        %2185 = vmatpush1.bf16.msra.mxu0 0
        %2186 = vmatprep.subr.bf16.mxu0 0
        %2187 = vmatpush1.bf16.msra.mxu0 0
        %2188 = vmatprep.subr.bf16.mxu0 0
        %2189 = vmatpush1.bf16.msra.mxu0 0
        %2190 = vmatprep.subr.bf16.mxu0 0
        %2191 = vmatpush1.bf16.msra.mxu0 0
        %2192 = vmatprep.subr.bf16.mxu0 0
        %2193 = vmatpush1.bf16.msra.mxu0 0
        %2194 = vmatprep.subr.bf16.mxu0 0
        %2195 = vmatpush1.bf16.msra.mxu0 0
        %2196 = vmatprep.mubr.bf16.mxu0 0
        %2197 = vmatmul.mubr.bf16.gmra.mrb[0].mxu0 %v2162
        %v2198 = vpop.f32.mrb[0].mxu0
        %v2199 = vadd.f32 %v2134, %v2198
        %v2200 = vpop.f32.mrb[0].mxu0
        %v2201 = vpop.f32.mrb[0].mxu0
        %v2202 = vpop.f32.mrb[0].mxu0
        %2203 = vdwg.mxu0
        %v2204 = vadd.f32 %v2012, %v2199
        %2205 = vst.msk [vmem:[%s660] sm:$0xff] %vm667, %v2204
        %s2206 = sand.u32 %s448, 1
        %s2207 = scalar_lea.sflag [#allocation4], %s2206
        %s2208 = sand.u32 %s448, 1
        %s2209 = smul.addr %s2208, 8
        %s2210 = scalar_lea.vmem [#allocation11], %s2209
        // Predicated region
        $region117: #{tpu_custom_call.1} parent=95 // pred_check
          %p2211 = pneg %p458
        $region118: #{tpu_custom_call.1} parent=95 // pred_check_branch
          %2213 = sbr.rel (%p2211) target = $region120
        $region119: #{tpu_custom_call.1} parent=95 // pred_region
          %s2215 = ssub.s32 128, 128
          %2216 = vsyncadd %s2207, %s2215
          %s2217 = smul.addr %s36, 128
          %s2218 = scalar_lea.hbm %s19, %s2217
          %s2220 = sshll.u32 %s2210, 4
          %s2221 = int_to_ptr.vmem [resolvable:$true] %s2220
          %2223 = dma.vmem_to_hbm [thread:$0]  %s2221, 128, %s2218, %s2207
        $region120: #{tpu_custom_call.1} parent=95 // pred_fallthru
          _
      $region96: #{tpu_custom_call.1} parent=5 // pred_fallthru
        _
      %p2224 = scmp.le.s32.totalorder 2, %s31
      // Predicated region
      $region121: #{tpu_custom_call.1} parent=5 // pred_check
        %p2225 = pneg %p2224
      $region122: #{tpu_custom_call.1} parent=5 // pred_check_branch
        %2227 = sbr.rel (%p2225) target = $region124
      $region123: #{tpu_custom_call.1} parent=5 // pred_region
        %s2228 = ssub.s32 %s31, 2
        // Predicated region
        $region125: #{tpu_custom_call.1} parent=123 // pred_check
          %p2229 = pneg %p464
        $region126: #{tpu_custom_call.1} parent=123 // pred_check_branch
          %2231 = sbr.rel (%p2229) target = $region128
        $region127: #{tpu_custom_call.1} parent=123 // pred_region
          %s2232 = sand.u32 %s449, 1
          %s2233 = scalar_lea.sflag [#allocation4], %s2232
          %s2234 = sand.u32 %s449, 1
          %s2235 = smul.addr %s2234, 8
          %s2236 = scalar_lea.vmem [#allocation11], %s2235
          %2237 = dma.done %s2233, 128
        $region128: #{tpu_custom_call.1} parent=123 // pred_fallthru
          _
      $region124: #{tpu_custom_call.1} parent=5 // pred_fallthru
        _
    $region6: #{tpu_custom_call.1} parent=1 // loop_footer
      %s35 = sadd.s32 1, %s31
    $region7: #{tpu_custom_call.1} parent=1 // loop_footer_branch
      %30 = sbr.rel target = $region3
    $region8: #{tpu_custom_call.1} parent=1 // loop_exit
      _
    %2238 = vsyncpa [#allocation3], 1
    %s2239 = scalar_lea.sflag [#allocation3], 1
    %2240 = vsyncpa %s2239, 1
    %2241 = vsyncpa [#allocation6], 1
    %2242 = vsyncpa [#allocation9], 1
    %2243 = vsyncpa [#allocation4], 1
    %s2244 = scalar_lea.sflag [#allocation4], 1
    %2245 = vsyncpa %s2244, 1

</llo_original>
